<compile_context>
chip_gen: v5e
topology: v5e:2x2
jax: 0.10.0
libtpu: 0.0.40
codegen_flags: <defaults>
</compile_context>

<pallas_src>
import functools

import jax
import jax.numpy as jnp
from jax import lax
from jax.experimental import pallas as pl
from jax.experimental.pallas import tpu as pltpu


def _round_up(x, m):
    return (x + m - 1) // m * m


def _lane_tile(x, reps):
    """Replicate x `reps` times along the last (lane) axis, block-wise."""
    if reps == 1:
        return x
    out = x
    built = 1
    while built * 2 <= reps:
        out = jnp.concatenate([out, out], axis=-1)
        built *= 2
    if built < reps:
        out = jnp.concatenate([out] + [x] * (reps - built), axis=-1)
    return out


def _mold_mask_kernel(x_ref, w_ref, out_ref, *,
                      KH, KW, Ho, Wo, Wc, Po, R, G, PoT):
    # x_ref   : (Nb, 8, A, B2)  parity-split padded person(0:4)/obj(4:8) planes
    # w_ref   : (KH*KW*2, Cpad*Wc) pre-broadcast folded conv weights (VMEM)
    # out_ref : (Nb, Ho, Cpad*Wc) conv-resolution ReLU + 3x3-max slab
    Nb = out_ref.shape[0]
    CW = R * Wc                                    # lanes per channel group
    neg = jnp.float32(-jnp.inf)

    # Column-window masks; the channel pattern repeats every Wc lanes.
    lane_in_ch = lax.broadcasted_iota(jnp.int32, (1, CW), 1) % Wc
    left_invalid = lane_in_ch == 0                 # w-1 outside window/channel
    right_invalid = lane_in_ch >= (Wo - 1)         # w+1 outside window/channel/pad

    n_tiles = pl.cdiv(Po, PoT)
    for tix in range(n_tiles):
        p0 = tix * PoT                             # first pooled row of tile
        po_n = min(PoT, Po - p0)
        h_lo = max(2 * p0 - 1, 0)                  # first conv row needed
        h_hi = min(2 * (p0 + po_n - 1) + 1, Ho - 1)
        nrows = h_hi - h_lo + 1

        # ---- Conv2d(7x7, s=2, p=3); "combined" channel folded into weights.
        accs = [jnp.zeros((Nb, nrows, CW), jnp.float32) for _ in range(G)]
        for kh in range(KH):
            for kw in range(KW):
                t = 2 * (kh % 2) + (kw % 2)        # parity plane
                r0 = kh // 2 + h_lo
                c0 = kw // 2
                ps = x_ref[:, t, r0:r0 + nrows, c0:c0 + Wc]       # (Nb, nrows, Wc)
                ob = x_ref[:, 4 + t, r0:r0 + nrows, c0:c0 + Wc]
                ps_t = _lane_tile(ps, R)                          # (Nb, nrows, CW)
                ob_t = _lane_tile(ob, R)
                wrow = (kh * KW + kw) * 2
                for g in range(G):
                    wp = w_ref[wrow:wrow + 1, g * CW:(g + 1) * CW]      # (1, CW)
                    wo = w_ref[wrow + 1:wrow + 2, g * CW:(g + 1) * CW]  # (1, CW)
                    accs[g] = accs[g] + ps_t * wp + ob_t * wo

        # ---- ReLU + 3x3/s2 max-pool via whole-slab shifted maxima.
        # (-inf halos == PyTorch's implicit max-pool padding; stride-2
        #  selection of the even rows/lanes is done by the wrapper.)
        pad_c = jnp.full((Nb, nrows, 1), neg, jnp.float32)
        pad_r = jnp.full((Nb, 1, CW), neg, jnp.float32)
        outs = []
        for g in range(G):
            y = jnp.maximum(accs[g], 0.0)
            # Columns (lanes): max(y[w-1], y[w], y[w+1]) with channel masks.
            yp = jnp.concatenate([pad_c, y, pad_c], axis=2)       # (Nb, nrows, CW+2)
            y_l = jnp.where(left_invalid, neg, yp[:, :, 0:CW])
            y_r = jnp.where(right_invalid, neg, yp[:, :, 2:CW + 2])
            m = jnp.maximum(jnp.maximum(y, y_l), y_r)
            # Rows (sublanes): max(m[h-1], m[h], m[h+1]) with -inf halo rows.
            mp = jnp.concatenate([pad_r, m, pad_r], axis=1)       # (Nb, nrows+2, CW)
            rm = jnp.maximum(jnp.maximum(mp[:, 0:nrows], mp[:, 1:nrows + 1]),
                             mp[:, 2:nrows + 2])
            outs.append(rm)
        tile_out = outs[0] if G == 1 else jnp.concatenate(outs, axis=-1)
        out_ref[:, h_lo:h_lo + nrows, :] = tile_out


def rd_mold_mask_inputs(person, obj, weight):
    """person, obj: (N, 1, H, W) NCHW;  weight: (Cout, 3, 7, 7) OIHW.
    Returns (N, Cout, Po, Qo) NCHW, matching the PyTorch module."""
    N, _, H, W = person.shape
    Cout, Cin, KH, KW = weight.shape
    assert Cin == 3
    S, P = 2, 3
    Ho = (H + 2 * P - KH) // S + 1
    Wo = (W + 2 * P - KW) // S + 1
    Po = (Ho - 1) // 2 + 1
    Qo = (Wo - 1) // 2 + 1
    Hp = H + 2 * P
    Wp = W + 2 * P
    Hp += Hp % 2                       # even sizes for the parity split
    Wp += Wp % 2
    A, B = Hp // 2, Wp // 2
    Wc = Wo + (Wo % 2)                 # even per-channel lane stride
    assert Qo == Wc // 2
    B2 = max(B, (KW - 1) // 2 + Wc)    # room for the widest shifted slice

    # Channel lane-packing: R output channels share one <=128-lane group.
    R = max(1, min(Cout, 128 // Wc)) if Wc <= 128 else 1
    Cpad = _round_up(Cout, R)
    G = Cpad // R

    # Batch block Nb: grid >= 2 when N >= 2 (both v7x TensorCores busy),
    # double-buffered input block under ~24 MiB, bounded vreg working set.
    in_blk_per_batch = 8 * _round_up(A, 8) * _round_up(B2, 128) * 4
    Nb = max(1, min(8,
                    (N + 1) // 2,
                    max(1, 32 // (G + 2)),
                    max(1, (24 << 20) // (2 * in_blk_per_batch))))
    Npad = _round_up(N, Nb)

    # Pooled-row tile size: (acc + 2 tiled operands) vregs per tile <= ~32.
    lane_vr = -(-(R * Wc) // 128)
    PoT = 1
    while (PoT < Po and
           (G + 2) * Nb * (-(-(2 * (PoT + 1) + 2) // 8)) * lane_vr <= 32):
        PoT += 1

    def prep(x):                       # pad + parity-split (layout-only glue)
        x = x.astype(jnp.float32)[:, 0]                                # (N, H, W)
        x = jnp.pad(x, ((0, Npad - N), (P, Hp - H - P), (P, Wp - W - P)))
        x = x.reshape(Npad, A, 2, B, 2)
        x = jnp.transpose(x, (0, 2, 4, 1, 3)).reshape(Npad, 4, A, B)
        if B2 > B:
            x = jnp.pad(x, ((0, 0), (0, 0), (0, 0), (0, B2 - B)))
        return x

    # Single stacked input -> one DMA pipeline for both masks.
    x_in = jnp.concatenate([prep(person), prep(obj)], axis=1)          # (Npad, 8, A, B2)

    # Fold "combined = person + obj" into the weights:
    #   y = person*(W0 + W2) + obj*(W1 + W2)
    # and pre-broadcast each (tap, input, channel) scalar to a Wc lane vector.
    w = weight.astype(jnp.float32)                                     # (Cout, 3, KH, KW)
    w_fold = jnp.stack([w[:, 0] + w[:, 2], w[:, 1] + w[:, 2]], axis=0)  # (2, Cout, KH, KW)
    wv = jnp.transpose(w_fold, (2, 3, 0, 1))                           # (KH, KW, 2, Cout)
    if Cpad > Cout:
        wv = jnp.pad(wv, ((0, 0), (0, 0), (0, 0), (0, Cpad - Cout)))
    wv = jnp.broadcast_to(wv[..., None], (KH, KW, 2, Cpad, Wc))
    w_vmem = wv.reshape(KH * KW * 2, Cpad * Wc)

    out_lanes = Cpad * Wc
    w_blk = _round_up(KH * KW * 2, 8) * _round_up(out_lanes, 128) * 4
    out_blk = Nb * _round_up(Ho, 8) * _round_up(out_lanes, 128) * 4
    vmem_need = 2 * (Nb * in_blk_per_batch + w_blk + out_blk) + (4 << 20)
    vmem_limit = int(min(64 << 20, max(32 << 20, vmem_need)))

    kernel = functools.partial(_mold_mask_kernel, KH=KH, KW=KW, Ho=Ho, Wo=Wo,
                               Wc=Wc, Po=Po, R=R, G=G, PoT=PoT)

    out = pl.pallas_call(
        kernel,
        out_shape=jax.ShapeDtypeStruct((Npad, Ho, out_lanes), jnp.float32),
        grid_spec=pltpu.PrefetchScalarGridSpec(
            num_scalar_prefetch=0,
            grid=(Npad // Nb,),
            in_specs=[
                pl.BlockSpec((Nb, 8, A, B2), lambda n: (n, 0, 0, 0)),
                pl.BlockSpec((KH * KW * 2, out_lanes), lambda n: (0, 0)),
            ],
            out_specs=pl.BlockSpec((Nb, Ho, out_lanes), lambda n: (n, 0, 0)),
        ),
        compiler_params=pltpu.CompilerParams(
            dimension_semantics=("parallel",),
            vmem_limit_bytes=vmem_limit),
    )(x_in, w_vmem)

    # Stride-2 row / column selection + channel unpack (tiny XLA slices).
    out = out[:N, ::2, :]                                   # (N, Po, Cpad*Wc)
    out = out.reshape(N, Po, Cpad, Wc)[:, :, :Cout, ::2]    # (N, Po, Cout, Qo)
    return jnp.transpose(out, (0, 2, 1, 3))                 # back to NCHW


def _reference(person, obj, weight):
    """Pure-JAX reference mirroring the PyTorch forward (NCHW)."""
    soft = jnp.concatenate([person, obj, person + obj], axis=1).astype(jnp.float32)
    x = lax.conv_general_dilated(
        soft, weight.astype(jnp.float32),
        window_strides=(2, 2), padding=[(3, 3), (3, 3)],
        dimension_numbers=('NCHW', 'OIHW', 'NCHW'),
        precision=lax.Precision.HIGHEST)
    x = jnp.maximum(x, 0.0)
    x = lax.reduce_window(x, -jnp.inf, lax.max,
                          window_dimensions=(1, 1, 3, 3),
                          window_strides=(1, 1, 2, 2),
                          padding=[(0, 0), (0, 0), (1, 1), (1, 1)])
    return x


if __name__ == "__main__":
    key = jax.random.PRNGKey(0)
    k1, k2, k3 = jax.random.split(key, 3)
    N, H, W = 2, 16, 16
    Cout, Cin, KH, KW = 8, 3, 7, 7

    person = jax.random.uniform(k1, (N, 1, H, W), dtype=jnp.float32)
    obj = jax.random.uniform(k2, (N, 1, H, W), dtype=jnp.float32)
    # Deterministic Kaiming-style init for conv1 (bias=False in the module).
    weight = jax.random.normal(k3, (Cout, Cin, KH, KW), dtype=jnp.float32) \
        * (2.0 / (Cin * KH * KW)) ** 0.5

    out = jax.block_until_ready(rd_mold_mask_inputs(person, obj, weight))
    ref = _reference(person, obj, weight)
    assert out.shape == ref.shape, (out.shape, ref.shape)
    assert jnp.allclose(out, ref, atol=1e-3, rtol=1e-3), \
        float(jnp.max(jnp.abs(out - ref)))
    print("KERNEL_OK")
</pallas_src>

<mosaic_0001>
module attributes {stable_mosaic.version = 11 : i64} {
  func.func @_mold_mask_kernel(%arg0: i32, %arg1: memref<1x8x11x11xf32, #tpu.memory_space<vmem>>, %arg2: memref<98x64xf32, #tpu.memory_space<vmem>>, %arg3: memref<1x8x64xf32, #tpu.memory_space<vmem>>) attributes {dimension_semantics = [#tpu.dimension_semantics<parallel>], iteration_bounds = array<i64: 2>, scalar_prefetch = 0 : i64, scratch_operands = 0 : i64, tpu.core_type = #tpu.core_type<tc>, window_params = [{transform_indices = @transform_0, window_bounds = array<i64: 1, 8, 11, 11>}, {pipeline_mode = #tpu.pipeline_mode<synchronous>, transform_indices = @transform_1, window_bounds = array<i64: 98, 64>}, {transform_indices = @transform_2, window_bounds = array<i64: 1, 8, 64>}]} {
    %0 = tpu.iota {dimensions = array<i32: 1>} : vector<1x64xi32>
    %c8_i32 = arith.constant 8 : i32
    %c0_i32 = arith.constant 0 : i32
    %1 = arith.cmpi eq, %c8_i32, %c0_i32 : i32
    %c1_i32 = arith.constant 1 : i32
    %2 = arith.select %1, %c1_i32, %c8_i32 : i32
    %3 = vector.broadcast %2 : i32 to vector<1x64xi32>
    %4 = arith.remsi %0, %3 : vector<1x64xi32>
    %c0_i32_0 = arith.constant 0 : i32
    %5 = vector.broadcast %c0_i32_0 : i32 to vector<1x64xi32>
    %6 = arith.cmpi ne, %4, %5 : vector<1x64xi32>
    %c0_i32_1 = arith.constant 0 : i32
    %7 = vector.broadcast %c0_i32_1 : i32 to vector<1x64xi32>
    %8 = arith.cmpi slt, %4, %7 : vector<1x64xi32>
    %c0_i32_2 = arith.constant 0 : i32
    %9 = arith.cmpi slt, %2, %c0_i32_2 : i32
    %10 = vector.broadcast %9 : i1 to vector<1x64xi1>
    %11 = vector.broadcast %10 : vector<1x64xi1> to vector<1x64xi1>
    %12 = arith.xori %8, %11 : vector<1x64xi1>
    %13 = arith.andi %12, %6 : vector<1x64xi1>
    %14 = vector.broadcast %2 : i32 to vector<1x64xi32>
    %15 = arith.addi %4, %14 : vector<1x64xi32>
    %16 = arith.select %13, %15, %4 : vector<1x64xi1>, vector<1x64xi32>
    %c0_i32_3 = arith.constant 0 : i32
    %17 = vector.broadcast %c0_i32_3 : i32 to vector<1x64xi32>
    %18 = arith.cmpi eq, %16, %17 : vector<1x64xi32>
    %c7_i32 = arith.constant 7 : i32
    %19 = vector.broadcast %c7_i32 : i32 to vector<1x64xi32>
    %20 = arith.cmpi sge, %16, %19 : vector<1x64xi32>
    %cst = arith.constant 0.000000e+00 : f32
    %21 = vector.broadcast %cst : f32 to vector<1x8x64xf32>
    %c0 = arith.constant 0 : index
    %c0_4 = arith.constant 0 : index
    %c0_5 = arith.constant 0 : index
    %c0_6 = arith.constant 0 : index
    %22 = vector.load %arg1[%c0, %c0_4, %c0_5, %c0_6] : memref<1x8x11x11xf32, #tpu.memory_space<vmem>>, vector<1x1x8x8xf32>
    %23 = vector.shape_cast %22 : vector<1x1x8x8xf32> to vector<1x8x8xf32>
    %c0_7 = arith.constant 0 : index
    %c4 = arith.constant 4 : index
    %c0_8 = arith.constant 0 : index
    %c0_9 = arith.constant 0 : index
    %24 = vector.load %arg1[%c0_7, %c4, %c0_8, %c0_9] : memref<1x8x11x11xf32, #tpu.memory_space<vmem>>, vector<1x1x8x8xf32>
    %25 = vector.shape_cast %24 : vector<1x1x8x8xf32> to vector<1x8x8xf32>
    %26 = tpu.concatenate %23, %23 in 2 : vector<1x8x8xf32>, vector<1x8x8xf32> -> vector<1x8x16xf32>
    %27 = tpu.concatenate %26, %26 in 2 : vector<1x8x16xf32>, vector<1x8x16xf32> -> vector<1x8x32xf32>
    %28 = tpu.concatenate %27, %27 in 2 : vector<1x8x32xf32>, vector<1x8x32xf32> -> vector<1x8x64xf32>
    %29 = tpu.concatenate %25, %25 in 2 : vector<1x8x8xf32>, vector<1x8x8xf32> -> vector<1x8x16xf32>
    %30 = tpu.concatenate %29, %29 in 2 : vector<1x8x16xf32>, vector<1x8x16xf32> -> vector<1x8x32xf32>
    %31 = tpu.concatenate %30, %30 in 2 : vector<1x8x32xf32>, vector<1x8x32xf32> -> vector<1x8x64xf32>
    %c0_10 = arith.constant 0 : index
    %c0_11 = arith.constant 0 : index
    %32 = vector.load %arg2[%c0_10, %c0_11] : memref<98x64xf32, #tpu.memory_space<vmem>>, vector<1x64xf32>
    %c1 = arith.constant 1 : index
    %c0_12 = arith.constant 0 : index
    %33 = vector.load %arg2[%c1, %c0_12] : memref<98x64xf32, #tpu.memory_space<vmem>>, vector<1x64xf32>
    %34 = vector.shape_cast %32 : vector<1x64xf32> to vector<1x1x64xf32>
    %35 = vector.broadcast %34 : vector<1x1x64xf32> to vector<1x8x64xf32>
    %36 = arith.mulf %28, %35 : vector<1x8x64xf32>
    %37 = arith.addf %21, %36 : vector<1x8x64xf32>
    %38 = vector.shape_cast %33 : vector<1x64xf32> to vector<1x1x64xf32>
    %39 = vector.broadcast %38 : vector<1x1x64xf32> to vector<1x8x64xf32>
    %40 = arith.mulf %31, %39 : vector<1x8x64xf32>
    %41 = arith.addf %37, %40 : vector<1x8x64xf32>
    %c0_13 = arith.constant 0 : index
    %c1_14 = arith.constant 1 : index
    %c0_15 = arith.constant 0 : index
    %c0_16 = arith.constant 0 : index
    %42 = vector.load %arg1[%c0_13, %c1_14, %c0_15, %c0_16] : memref<1x8x11x11xf32, #tpu.memory_space<vmem>>, vector<1x1x8x8xf32>
    %43 = vector.shape_cast %42 : vector<1x1x8x8xf32> to vector<1x8x8xf32>
    %c0_17 = arith.constant 0 : index
    %c5 = arith.constant 5 : index
    %c0_18 = arith.constant 0 : index
    %c0_19 = arith.constant 0 : index
    %44 = vector.load %arg1[%c0_17, %c5, %c0_18, %c0_19] : memref<1x8x11x11xf32, #tpu.memory_space<vmem>>, vector<1x1x8x8xf32>
    %45 = vector.shape_cast %44 : vector<1x1x8x8xf32> to vector<1x8x8xf32>
    %46 = tpu.concatenate %43, %43 in 2 : vector<1x8x8xf32>, vector<1x8x8xf32> -> vector<1x8x16xf32>
    %47 = tpu.concatenate %46, %46 in 2 : vector<1x8x16xf32>, vector<1x8x16xf32> -> vector<1x8x32xf32>
    %48 = tpu.concatenate %47, %47 in 2 : vector<1x8x32xf32>, vector<1x8x32xf32> -> vector<1x8x64xf32>
    %49 = tpu.concatenate %45, %45 in 2 : vector<1x8x8xf32>, vector<1x8x8xf32> -> vector<1x8x16xf32>
    %50 = tpu.concatenate %49, %49 in 2 : vector<1x8x16xf32>, vector<1x8x16xf32> -> vector<1x8x32xf32>
    %51 = tpu.concatenate %50, %50 in 2 : vector<1x8x32xf32>, vector<1x8x32xf32> -> vector<1x8x64xf32>
    %c2 = arith.constant 2 : index
    %c0_20 = arith.constant 0 : index
    %52 = vector.load %arg2[%c2, %c0_20] : memref<98x64xf32, #tpu.memory_space<vmem>>, vector<1x64xf32>
    %c3 = arith.constant 3 : index
    %c0_21 = arith.constant 0 : index
    %53 = vector.load %arg2[%c3, %c0_21] : memref<98x64xf32, #tpu.memory_space<vmem>>, vector<1x64xf32>
    %54 = vector.shape_cast %52 : vector<1x64xf32> to vector<1x1x64xf32>
    %55 = vector.broadcast %54 : vector<1x1x64xf32> to vector<1x8x64xf32>
    %56 = arith.mulf %48, %55 : vector<1x8x64xf32>
    %57 = arith.addf %41, %56 : vector<1x8x64xf32>
    %58 = vector.shape_cast %53 : vector<1x64xf32> to vector<1x1x64xf32>
    %59 = vector.broadcast %58 : vector<1x1x64xf32> to vector<1x8x64xf32>
    %60 = arith.mulf %51, %59 : vector<1x8x64xf32>
    %61 = arith.addf %57, %60 : vector<1x8x64xf32>
    %c0_22 = arith.constant 0 : index
    %c0_23 = arith.constant 0 : index
    %c0_24 = arith.constant 0 : index
    %c1_25 = arith.constant 1 : index
    %62 = vector.load %arg1[%c0_22, %c0_23, %c0_24, %c1_25] : memref<1x8x11x11xf32, #tpu.memory_space<vmem>>, vector<1x1x8x8xf32>
    %63 = vector.shape_cast %62 : vector<1x1x8x8xf32> to vector<1x8x8xf32>
    %c0_26 = arith.constant 0 : index
    %c4_27 = arith.constant 4 : index
    %c0_28 = arith.constant 0 : index
    %c1_29 = arith.constant 1 : index
    %64 = vector.load %arg1[%c0_26, %c4_27, %c0_28, %c1_29] : memref<1x8x11x11xf32, #tpu.memory_space<vmem>>, vector<1x1x8x8xf32>
    %65 = vector.shape_cast %64 : vector<1x1x8x8xf32> to vector<1x8x8xf32>
    %66 = tpu.concatenate %63, %63 in 2 : vector<1x8x8xf32>, vector<1x8x8xf32> -> vector<1x8x16xf32>
    %67 = tpu.concatenate %66, %66 in 2 : vector<1x8x16xf32>, vector<1x8x16xf32> -> vector<1x8x32xf32>
    %68 = tpu.concatenate %67, %67 in 2 : vector<1x8x32xf32>, vector<1x8x32xf32> -> vector<1x8x64xf32>
    %69 = tpu.concatenate %65, %65 in 2 : vector<1x8x8xf32>, vector<1x8x8xf32> -> vector<1x8x16xf32>
    %70 = tpu.concatenate %69, %69 in 2 : vector<1x8x16xf32>, vector<1x8x16xf32> -> vector<1x8x32xf32>
    %71 = tpu.concatenate %70, %70 in 2 : vector<1x8x32xf32>, vector<1x8x32xf32> -> vector<1x8x64xf32>
    %c4_30 = arith.constant 4 : index
    %c0_31 = arith.constant 0 : index
    %72 = vector.load %arg2[%c4_30, %c0_31] : memref<98x64xf32, #tpu.memory_space<vmem>>, vector<1x64xf32>
    %c5_32 = arith.constant 5 : index
    %c0_33 = arith.constant 0 : index
    %73 = vector.load %arg2[%c5_32, %c0_33] : memref<98x64xf32, #tpu.memory_space<vmem>>, vector<1x64xf32>
    %74 = vector.shape_cast %72 : vector<1x64xf32> to vector<1x1x64xf32>
    %75 = vector.broadcast %74 : vector<1x1x64xf32> to vector<1x8x64xf32>
    %76 = arith.mulf %68, %75 : vector<1x8x64xf32>
    %77 = arith.addf %61, %76 : vector<1x8x64xf32>
    %78 = vector.shape_cast %73 : vector<1x64xf32> to vector<1x1x64xf32>
    %79 = vector.broadcast %78 : vector<1x1x64xf32> to vector<1x8x64xf32>
    %80 = arith.mulf %71, %79 : vector<1x8x64xf32>
    %81 = arith.addf %77, %80 : vector<1x8x64xf32>
    %c0_34 = arith.constant 0 : index
    %c1_35 = arith.constant 1 : index
    %c0_36 = arith.constant 0 : index
    %c1_37 = arith.constant 1 : index
    %82 = vector.load %arg1[%c0_34, %c1_35, %c0_36, %c1_37] : memref<1x8x11x11xf32, #tpu.memory_space<vmem>>, vector<1x1x8x8xf32>
    %83 = vector.shape_cast %82 : vector<1x1x8x8xf32> to vector<1x8x8xf32>
    %c0_38 = arith.constant 0 : index
    %c5_39 = arith.constant 5 : index
    %c0_40 = arith.constant 0 : index
    %c1_41 = arith.constant 1 : index
    %84 = vector.load %arg1[%c0_38, %c5_39, %c0_40, %c1_41] : memref<1x8x11x11xf32, #tpu.memory_space<vmem>>, vector<1x1x8x8xf32>
    %85 = vector.shape_cast %84 : vector<1x1x8x8xf32> to vector<1x8x8xf32>
    %86 = tpu.concatenate %83, %83 in 2 : vector<1x8x8xf32>, vector<1x8x8xf32> -> vector<1x8x16xf32>
    %87 = tpu.concatenate %86, %86 in 2 : vector<1x8x16xf32>, vector<1x8x16xf32> -> vector<1x8x32xf32>
    %88 = tpu.concatenate %87, %87 in 2 : vector<1x8x32xf32>, vector<1x8x32xf32> -> vector<1x8x64xf32>
    %89 = tpu.concatenate %85, %85 in 2 : vector<1x8x8xf32>, vector<1x8x8xf32> -> vector<1x8x16xf32>
    %90 = tpu.concatenate %89, %89 in 2 : vector<1x8x16xf32>, vector<1x8x16xf32> -> vector<1x8x32xf32>
    %91 = tpu.concatenate %90, %90 in 2 : vector<1x8x32xf32>, vector<1x8x32xf32> -> vector<1x8x64xf32>
    %c6 = arith.constant 6 : index
    %c0_42 = arith.constant 0 : index
    %92 = vector.load %arg2[%c6, %c0_42] : memref<98x64xf32, #tpu.memory_space<vmem>>, vector<1x64xf32>
    %c7 = arith.constant 7 : index
    %c0_43 = arith.constant 0 : index
    %93 = vector.load %arg2[%c7, %c0_43] : memref<98x64xf32, #tpu.memory_space<vmem>>, vector<1x64xf32>
    %94 = vector.shape_cast %92 : vector<1x64xf32> to vector<1x1x64xf32>
    %95 = vector.broadcast %94 : vector<1x1x64xf32> to vector<1x8x64xf32>
    %96 = arith.mulf %88, %95 : vector<1x8x64xf32>
    %97 = arith.addf %81, %96 : vector<1x8x64xf32>
    %98 = vector.shape_cast %93 : vector<1x64xf32> to vector<1x1x64xf32>
    %99 = vector.broadcast %98 : vector<1x1x64xf32> to vector<1x8x64xf32>
    %100 = arith.mulf %91, %99 : vector<1x8x64xf32>
    %101 = arith.addf %97, %100 : vector<1x8x64xf32>
    %c0_44 = arith.constant 0 : index
    %c0_45 = arith.constant 0 : index
    %c0_46 = arith.constant 0 : index
    %c2_47 = arith.constant 2 : index
    %102 = vector.load %arg1[%c0_44, %c0_45, %c0_46, %c2_47] : memref<1x8x11x11xf32, #tpu.memory_space<vmem>>, vector<1x1x8x8xf32>
    %103 = vector.shape_cast %102 : vector<1x1x8x8xf32> to vector<1x8x8xf32>
    %c0_48 = arith.constant 0 : index
    %c4_49 = arith.constant 4 : index
    %c0_50 = arith.constant 0 : index
    %c2_51 = arith.constant 2 : index
    %104 = vector.load %arg1[%c0_48, %c4_49, %c0_50, %c2_51] : memref<1x8x11x11xf32, #tpu.memory_space<vmem>>, vector<1x1x8x8xf32>
    %105 = vector.shape_cast %104 : vector<1x1x8x8xf32> to vector<1x8x8xf32>
    %106 = tpu.concatenate %103, %103 in 2 : vector<1x8x8xf32>, vector<1x8x8xf32> -> vector<1x8x16xf32>
    %107 = tpu.concatenate %106, %106 in 2 : vector<1x8x16xf32>, vector<1x8x16xf32> -> vector<1x8x32xf32>
    %108 = tpu.concatenate %107, %107 in 2 : vector<1x8x32xf32>, vector<1x8x32xf32> -> vector<1x8x64xf32>
    %109 = tpu.concatenate %105, %105 in 2 : vector<1x8x8xf32>, vector<1x8x8xf32> -> vector<1x8x16xf32>
    %110 = tpu.concatenate %109, %109 in 2 : vector<1x8x16xf32>, vector<1x8x16xf32> -> vector<1x8x32xf32>
    %111 = tpu.concatenate %110, %110 in 2 : vector<1x8x32xf32>, vector<1x8x32xf32> -> vector<1x8x64xf32>
    %c8 = arith.constant 8 : index
    %c0_52 = arith.constant 0 : index
    %112 = vector.load %arg2[%c8, %c0_52] : memref<98x64xf32, #tpu.memory_space<vmem>>, vector<1x64xf32>
    %c9 = arith.constant 9 : index
    %c0_53 = arith.constant 0 : index
    %113 = vector.load %arg2[%c9, %c0_53] : memref<98x64xf32, #tpu.memory_space<vmem>>, vector<1x64xf32>
    %114 = vector.shape_cast %112 : vector<1x64xf32> to vector<1x1x64xf32>
    %115 = vector.broadcast %114 : vector<1x1x64xf32> to vector<1x8x64xf32>
    %116 = arith.mulf %108, %115 : vector<1x8x64xf32>
    %117 = arith.addf %101, %116 : vector<1x8x64xf32>
    %118 = vector.shape_cast %113 : vector<1x64xf32> to vector<1x1x64xf32>
    %119 = vector.broadcast %118 : vector<1x1x64xf32> to vector<1x8x64xf32>
    %120 = arith.mulf %111, %119 : vector<1x8x64xf32>
    %121 = arith.addf %117, %120 : vector<1x8x64xf32>
    %c0_54 = arith.constant 0 : index
    %c1_55 = arith.constant 1 : index
    %c0_56 = arith.constant 0 : index
    %c2_57 = arith.constant 2 : index
    %122 = vector.load %arg1[%c0_54, %c1_55, %c0_56, %c2_57] : memref<1x8x11x11xf32, #tpu.memory_space<vmem>>, vector<1x1x8x8xf32>
    %123 = vector.shape_cast %122 : vector<1x1x8x8xf32> to vector<1x8x8xf32>
    %c0_58 = arith.constant 0 : index
    %c5_59 = arith.constant 5 : index
    %c0_60 = arith.constant 0 : index
    %c2_61 = arith.constant 2 : index
    %124 = vector.load %arg1[%c0_58, %c5_59, %c0_60, %c2_61] : memref<1x8x11x11xf32, #tpu.memory_space<vmem>>, vector<1x1x8x8xf32>
    %125 = vector.shape_cast %124 : vector<1x1x8x8xf32> to vector<1x8x8xf32>
    %126 = tpu.concatenate %123, %123 in 2 : vector<1x8x8xf32>, vector<1x8x8xf32> -> vector<1x8x16xf32>
    %127 = tpu.concatenate %126, %126 in 2 : vector<1x8x16xf32>, vector<1x8x16xf32> -> vector<1x8x32xf32>
    %128 = tpu.concatenate %127, %127 in 2 : vector<1x8x32xf32>, vector<1x8x32xf32> -> vector<1x8x64xf32>
    %129 = tpu.concatenate %125, %125 in 2 : vector<1x8x8xf32>, vector<1x8x8xf32> -> vector<1x8x16xf32>
    %130 = tpu.concatenate %129, %129 in 2 : vector<1x8x16xf32>, vector<1x8x16xf32> -> vector<1x8x32xf32>
    %131 = tpu.concatenate %130, %130 in 2 : vector<1x8x32xf32>, vector<1x8x32xf32> -> vector<1x8x64xf32>
    %c10 = arith.constant 10 : index
    %c0_62 = arith.constant 0 : index
    %132 = vector.load %arg2[%c10, %c0_62] : memref<98x64xf32, #tpu.memory_space<vmem>>, vector<1x64xf32>
    %c11 = arith.constant 11 : index
    %c0_63 = arith.constant 0 : index
    %133 = vector.load %arg2[%c11, %c0_63] : memref<98x64xf32, #tpu.memory_space<vmem>>, vector<1x64xf32>
    %134 = vector.shape_cast %132 : vector<1x64xf32> to vector<1x1x64xf32>
    %135 = vector.broadcast %134 : vector<1x1x64xf32> to vector<1x8x64xf32>
    %136 = arith.mulf %128, %135 : vector<1x8x64xf32>
    %137 = arith.addf %121, %136 : vector<1x8x64xf32>
    %138 = vector.shape_cast %133 : vector<1x64xf32> to vector<1x1x64xf32>
    %139 = vector.broadcast %138 : vector<1x1x64xf32> to vector<1x8x64xf32>
    %140 = arith.mulf %131, %139 : vector<1x8x64xf32>
    %141 = arith.addf %137, %140 : vector<1x8x64xf32>
    %c0_64 = arith.constant 0 : index
    %c0_65 = arith.constant 0 : index
    %c0_66 = arith.constant 0 : index
    %c3_67 = arith.constant 3 : index
    %142 = vector.load %arg1[%c0_64, %c0_65, %c0_66, %c3_67] : memref<1x8x11x11xf32, #tpu.memory_space<vmem>>, vector<1x1x8x8xf32>
    %143 = vector.shape_cast %142 : vector<1x1x8x8xf32> to vector<1x8x8xf32>
    %c0_68 = arith.constant 0 : index
    %c4_69 = arith.constant 4 : index
    %c0_70 = arith.constant 0 : index
    %c3_71 = arith.constant 3 : index
    %144 = vector.load %arg1[%c0_68, %c4_69, %c0_70, %c3_71] : memref<1x8x11x11xf32, #tpu.memory_space<vmem>>, vector<1x1x8x8xf32>
    %145 = vector.shape_cast %144 : vector<1x1x8x8xf32> to vector<1x8x8xf32>
    %146 = tpu.concatenate %143, %143 in 2 : vector<1x8x8xf32>, vector<1x8x8xf32> -> vector<1x8x16xf32>
    %147 = tpu.concatenate %146, %146 in 2 : vector<1x8x16xf32>, vector<1x8x16xf32> -> vector<1x8x32xf32>
    %148 = tpu.concatenate %147, %147 in 2 : vector<1x8x32xf32>, vector<1x8x32xf32> -> vector<1x8x64xf32>
    %149 = tpu.concatenate %145, %145 in 2 : vector<1x8x8xf32>, vector<1x8x8xf32> -> vector<1x8x16xf32>
    %150 = tpu.concatenate %149, %149 in 2 : vector<1x8x16xf32>, vector<1x8x16xf32> -> vector<1x8x32xf32>
    %151 = tpu.concatenate %150, %150 in 2 : vector<1x8x32xf32>, vector<1x8x32xf32> -> vector<1x8x64xf32>
    %c12 = arith.constant 12 : index
    %c0_72 = arith.constant 0 : index
    %152 = vector.load %arg2[%c12, %c0_72] : memref<98x64xf32, #tpu.memory_space<vmem>>, vector<1x64xf32>
    %c13 = arith.constant 13 : index
    %c0_73 = arith.constant 0 : index
    %153 = vector.load %arg2[%c13, %c0_73] : memref<98x64xf32, #tpu.memory_space<vmem>>, vector<1x64xf32>
    %154 = vector.shape_cast %152 : vector<1x64xf32> to vector<1x1x64xf32>
    %155 = vector.broadcast %154 : vector<1x1x64xf32> to vector<1x8x64xf32>
    %156 = arith.mulf %148, %155 : vector<1x8x64xf32>
    %157 = arith.addf %141, %156 : vector<1x8x64xf32>
    %158 = vector.shape_cast %153 : vector<1x64xf32> to vector<1x1x64xf32>
    %159 = vector.broadcast %158 : vector<1x1x64xf32> to vector<1x8x64xf32>
    %160 = arith.mulf %151, %159 : vector<1x8x64xf32>
    %161 = arith.addf %157, %160 : vector<1x8x64xf32>
    %c0_74 = arith.constant 0 : index
    %c2_75 = arith.constant 2 : index
    %c0_76 = arith.constant 0 : index
    %c0_77 = arith.constant 0 : index
    %162 = vector.load %arg1[%c0_74, %c2_75, %c0_76, %c0_77] : memref<1x8x11x11xf32, #tpu.memory_space<vmem>>, vector<1x1x8x8xf32>
    %163 = vector.shape_cast %162 : vector<1x1x8x8xf32> to vector<1x8x8xf32>
    %c0_78 = arith.constant 0 : index
    %c6_79 = arith.constant 6 : index
    %c0_80 = arith.constant 0 : index
    %c0_81 = arith.constant 0 : index
    %164 = vector.load %arg1[%c0_78, %c6_79, %c0_80, %c0_81] : memref<1x8x11x11xf32, #tpu.memory_space<vmem>>, vector<1x1x8x8xf32>
    %165 = vector.shape_cast %164 : vector<1x1x8x8xf32> to vector<1x8x8xf32>
    %166 = tpu.concatenate %163, %163 in 2 : vector<1x8x8xf32>, vector<1x8x8xf32> -> vector<1x8x16xf32>
    %167 = tpu.concatenate %166, %166 in 2 : vector<1x8x16xf32>, vector<1x8x16xf32> -> vector<1x8x32xf32>
    %168 = tpu.concatenate %167, %167 in 2 : vector<1x8x32xf32>, vector<1x8x32xf32> -> vector<1x8x64xf32>
    %169 = tpu.concatenate %165, %165 in 2 : vector<1x8x8xf32>, vector<1x8x8xf32> -> vector<1x8x16xf32>
    %170 = tpu.concatenate %169, %169 in 2 : vector<1x8x16xf32>, vector<1x8x16xf32> -> vector<1x8x32xf32>
    %171 = tpu.concatenate %170, %170 in 2 : vector<1x8x32xf32>, vector<1x8x32xf32> -> vector<1x8x64xf32>
    %c14 = arith.constant 14 : index
    %c0_82 = arith.constant 0 : index
    %172 = vector.load %arg2[%c14, %c0_82] : memref<98x64xf32, #tpu.memory_space<vmem>>, vector<1x64xf32>
    %c15 = arith.constant 15 : index
    %c0_83 = arith.constant 0 : index
    %173 = vector.load %arg2[%c15, %c0_83] : memref<98x64xf32, #tpu.memory_space<vmem>>, vector<1x64xf32>
    %174 = vector.shape_cast %172 : vector<1x64xf32> to vector<1x1x64xf32>
    %175 = vector.broadcast %174 : vector<1x1x64xf32> to vector<1x8x64xf32>
    %176 = arith.mulf %168, %175 : vector<1x8x64xf32>
    %177 = arith.addf %161, %176 : vector<1x8x64xf32>
    %178 = vector.shape_cast %173 : vector<1x64xf32> to vector<1x1x64xf32>
    %179 = vector.broadcast %178 : vector<1x1x64xf32> to vector<1x8x64xf32>
    %180 = arith.mulf %171, %179 : vector<1x8x64xf32>
    %181 = arith.addf %177, %180 : vector<1x8x64xf32>
    %c0_84 = arith.constant 0 : index
    %c3_85 = arith.constant 3 : index
    %c0_86 = arith.constant 0 : index
    %c0_87 = arith.constant 0 : index
    %182 = vector.load %arg1[%c0_84, %c3_85, %c0_86, %c0_87] : memref<1x8x11x11xf32, #tpu.memory_space<vmem>>, vector<1x1x8x8xf32>
    %183 = vector.shape_cast %182 : vector<1x1x8x8xf32> to vector<1x8x8xf32>
    %c0_88 = arith.constant 0 : index
    %c7_89 = arith.constant 7 : index
    %c0_90 = arith.constant 0 : index
    %c0_91 = arith.constant 0 : index
    %184 = vector.load %arg1[%c0_88, %c7_89, %c0_90, %c0_91] : memref<1x8x11x11xf32, #tpu.memory_space<vmem>>, vector<1x1x8x8xf32>
    %185 = vector.shape_cast %184 : vector<1x1x8x8xf32> to vector<1x8x8xf32>
    %186 = tpu.concatenate %183, %183 in 2 : vector<1x8x8xf32>, vector<1x8x8xf32> -> vector<1x8x16xf32>
    %187 = tpu.concatenate %186, %186 in 2 : vector<1x8x16xf32>, vector<1x8x16xf32> -> vector<1x8x32xf32>
    %188 = tpu.concatenate %187, %187 in 2 : vector<1x8x32xf32>, vector<1x8x32xf32> -> vector<1x8x64xf32>
    %189 = tpu.concatenate %185, %185 in 2 : vector<1x8x8xf32>, vector<1x8x8xf32> -> vector<1x8x16xf32>
    %190 = tpu.concatenate %189, %189 in 2 : vector<1x8x16xf32>, vector<1x8x16xf32> -> vector<1x8x32xf32>
    %191 = tpu.concatenate %190, %190 in 2 : vector<1x8x32xf32>, vector<1x8x32xf32> -> vector<1x8x64xf32>
    %c16 = arith.constant 16 : index
    %c0_92 = arith.constant 0 : index
    %192 = vector.load %arg2[%c16, %c0_92] : memref<98x64xf32, #tpu.memory_space<vmem>>, vector<1x64xf32>
    %c17 = arith.constant 17 : index
    %c0_93 = arith.constant 0 : index
    %193 = vector.load %arg2[%c17, %c0_93] : memref<98x64xf32, #tpu.memory_space<vmem>>, vector<1x64xf32>
    %194 = vector.shape_cast %192 : vector<1x64xf32> to vector<1x1x64xf32>
    %195 = vector.broadcast %194 : vector<1x1x64xf32> to vector<1x8x64xf32>
    %196 = arith.mulf %188, %195 : vector<1x8x64xf32>
    %197 = arith.addf %181, %196 : vector<1x8x64xf32>
    %198 = vector.shape_cast %193 : vector<1x64xf32> to vector<1x1x64xf32>
    %199 = vector.broadcast %198 : vector<1x1x64xf32> to vector<1x8x64xf32>
    %200 = arith.mulf %191, %199 : vector<1x8x64xf32>
    %201 = arith.addf %197, %200 : vector<1x8x64xf32>
    %c0_94 = arith.constant 0 : index
    %c2_95 = arith.constant 2 : index
    %c0_96 = arith.constant 0 : index
    %c1_97 = arith.constant 1 : index
    %202 = vector.load %arg1[%c0_94, %c2_95, %c0_96, %c1_97] : memref<1x8x11x11xf32, #tpu.memory_space<vmem>>, vector<1x1x8x8xf32>
    %203 = vector.shape_cast %202 : vector<1x1x8x8xf32> to vector<1x8x8xf32>
    %c0_98 = arith.constant 0 : index
    %c6_99 = arith.constant 6 : index
    %c0_100 = arith.constant 0 : index
    %c1_101 = arith.constant 1 : index
    %204 = vector.load %arg1[%c0_98, %c6_99, %c0_100, %c1_101] : memref<1x8x11x11xf32, #tpu.memory_space<vmem>>, vector<1x1x8x8xf32>
    %205 = vector.shape_cast %204 : vector<1x1x8x8xf32> to vector<1x8x8xf32>
    %206 = tpu.concatenate %203, %203 in 2 : vector<1x8x8xf32>, vector<1x8x8xf32> -> vector<1x8x16xf32>
    %207 = tpu.concatenate %206, %206 in 2 : vector<1x8x16xf32>, vector<1x8x16xf32> -> vector<1x8x32xf32>
    %208 = tpu.concatenate %207, %207 in 2 : vector<1x8x32xf32>, vector<1x8x32xf32> -> vector<1x8x64xf32>
    %209 = tpu.concatenate %205, %205 in 2 : vector<1x8x8xf32>, vector<1x8x8xf32> -> vector<1x8x16xf32>
    %210 = tpu.concatenate %209, %209 in 2 : vector<1x8x16xf32>, vector<1x8x16xf32> -> vector<1x8x32xf32>
    %211 = tpu.concatenate %210, %210 in 2 : vector<1x8x32xf32>, vector<1x8x32xf32> -> vector<1x8x64xf32>
    %c18 = arith.constant 18 : index
    %c0_102 = arith.constant 0 : index
    %212 = vector.load %arg2[%c18, %c0_102] : memref<98x64xf32, #tpu.memory_space<vmem>>, vector<1x64xf32>
    %c19 = arith.constant 19 : index
    %c0_103 = arith.constant 0 : index
    %213 = vector.load %arg2[%c19, %c0_103] : memref<98x64xf32, #tpu.memory_space<vmem>>, vector<1x64xf32>
    %214 = vector.shape_cast %212 : vector<1x64xf32> to vector<1x1x64xf32>
    %215 = vector.broadcast %214 : vector<1x1x64xf32> to vector<1x8x64xf32>
    %216 = arith.mulf %208, %215 : vector<1x8x64xf32>
    %217 = arith.addf %201, %216 : vector<1x8x64xf32>
    %218 = vector.shape_cast %213 : vector<1x64xf32> to vector<1x1x64xf32>
    %219 = vector.broadcast %218 : vector<1x1x64xf32> to vector<1x8x64xf32>
    %220 = arith.mulf %211, %219 : vector<1x8x64xf32>
    %221 = arith.addf %217, %220 : vector<1x8x64xf32>
    %c0_104 = arith.constant 0 : index
    %c3_105 = arith.constant 3 : index
    %c0_106 = arith.constant 0 : index
    %c1_107 = arith.constant 1 : index
    %222 = vector.load %arg1[%c0_104, %c3_105, %c0_106, %c1_107] : memref<1x8x11x11xf32, #tpu.memory_space<vmem>>, vector<1x1x8x8xf32>
    %223 = vector.shape_cast %222 : vector<1x1x8x8xf32> to vector<1x8x8xf32>
    %c0_108 = arith.constant 0 : index
    %c7_109 = arith.constant 7 : index
    %c0_110 = arith.constant 0 : index
    %c1_111 = arith.constant 1 : index
    %224 = vector.load %arg1[%c0_108, %c7_109, %c0_110, %c1_111] : memref<1x8x11x11xf32, #tpu.memory_space<vmem>>, vector<1x1x8x8xf32>
    %225 = vector.shape_cast %224 : vector<1x1x8x8xf32> to vector<1x8x8xf32>
    %226 = tpu.concatenate %223, %223 in 2 : vector<1x8x8xf32>, vector<1x8x8xf32> -> vector<1x8x16xf32>
    %227 = tpu.concatenate %226, %226 in 2 : vector<1x8x16xf32>, vector<1x8x16xf32> -> vector<1x8x32xf32>
    %228 = tpu.concatenate %227, %227 in 2 : vector<1x8x32xf32>, vector<1x8x32xf32> -> vector<1x8x64xf32>
    %229 = tpu.concatenate %225, %225 in 2 : vector<1x8x8xf32>, vector<1x8x8xf32> -> vector<1x8x16xf32>
    %230 = tpu.concatenate %229, %229 in 2 : vector<1x8x16xf32>, vector<1x8x16xf32> -> vector<1x8x32xf32>
    %231 = tpu.concatenate %230, %230 in 2 : vector<1x8x32xf32>, vector<1x8x32xf32> -> vector<1x8x64xf32>
    %c20 = arith.constant 20 : index
    %c0_112 = arith.constant 0 : index
    %232 = vector.load %arg2[%c20, %c0_112] : memref<98x64xf32, #tpu.memory_space<vmem>>, vector<1x64xf32>
    %c21 = arith.constant 21 : index
    %c0_113 = arith.constant 0 : index
    %233 = vector.load %arg2[%c21, %c0_113] : memref<98x64xf32, #tpu.memory_space<vmem>>, vector<1x64xf32>
    %234 = vector.shape_cast %232 : vector<1x64xf32> to vector<1x1x64xf32>
    %235 = vector.broadcast %234 : vector<1x1x64xf32> to vector<1x8x64xf32>
    %236 = arith.mulf %228, %235 : vector<1x8x64xf32>
    %237 = arith.addf %221, %236 : vector<1x8x64xf32>
    %238 = vector.shape_cast %233 : vector<1x64xf32> to vector<1x1x64xf32>
    %239 = vector.broadcast %238 : vector<1x1x64xf32> to vector<1x8x64xf32>
    %240 = arith.mulf %231, %239 : vector<1x8x64xf32>
    %241 = arith.addf %237, %240 : vector<1x8x64xf32>
    %c0_114 = arith.constant 0 : index
    %c2_115 = arith.constant 2 : index
    %c0_116 = arith.constant 0 : index
    %c2_117 = arith.constant 2 : index
    %242 = vector.load %arg1[%c0_114, %c2_115, %c0_116, %c2_117] : memref<1x8x11x11xf32, #tpu.memory_space<vmem>>, vector<1x1x8x8xf32>
    %243 = vector.shape_cast %242 : vector<1x1x8x8xf32> to vector<1x8x8xf32>
    %c0_118 = arith.constant 0 : index
    %c6_119 = arith.constant 6 : index
    %c0_120 = arith.constant 0 : index
    %c2_121 = arith.constant 2 : index
    %244 = vector.load %arg1[%c0_118, %c6_119, %c0_120, %c2_121] : memref<1x8x11x11xf32, #tpu.memory_space<vmem>>, vector<1x1x8x8xf32>
    %245 = vector.shape_cast %244 : vector<1x1x8x8xf32> to vector<1x8x8xf32>
    %246 = tpu.concatenate %243, %243 in 2 : vector<1x8x8xf32>, vector<1x8x8xf32> -> vector<1x8x16xf32>
    %247 = tpu.concatenate %246, %246 in 2 : vector<1x8x16xf32>, vector<1x8x16xf32> -> vector<1x8x32xf32>
    %248 = tpu.concatenate %247, %247 in 2 : vector<1x8x32xf32>, vector<1x8x32xf32> -> vector<1x8x64xf32>
    %249 = tpu.concatenate %245, %245 in 2 : vector<1x8x8xf32>, vector<1x8x8xf32> -> vector<1x8x16xf32>
    %250 = tpu.concatenate %249, %249 in 2 : vector<1x8x16xf32>, vector<1x8x16xf32> -> vector<1x8x32xf32>
    %251 = tpu.concatenate %250, %250 in 2 : vector<1x8x32xf32>, vector<1x8x32xf32> -> vector<1x8x64xf32>
    %c22 = arith.constant 22 : index
    %c0_122 = arith.constant 0 : index
    %252 = vector.load %arg2[%c22, %c0_122] : memref<98x64xf32, #tpu.memory_space<vmem>>, vector<1x64xf32>
    %c23 = arith.constant 23 : index
    %c0_123 = arith.constant 0 : index
    %253 = vector.load %arg2[%c23, %c0_123] : memref<98x64xf32, #tpu.memory_space<vmem>>, vector<1x64xf32>
    %254 = vector.shape_cast %252 : vector<1x64xf32> to vector<1x1x64xf32>
    %255 = vector.broadcast %254 : vector<1x1x64xf32> to vector<1x8x64xf32>
    %256 = arith.mulf %248, %255 : vector<1x8x64xf32>
    %257 = arith.addf %241, %256 : vector<1x8x64xf32>
    %258 = vector.shape_cast %253 : vector<1x64xf32> to vector<1x1x64xf32>
    %259 = vector.broadcast %258 : vector<1x1x64xf32> to vector<1x8x64xf32>
    %260 = arith.mulf %251, %259 : vector<1x8x64xf32>
    %261 = arith.addf %257, %260 : vector<1x8x64xf32>
    %c0_124 = arith.constant 0 : index
    %c3_125 = arith.constant 3 : index
    %c0_126 = arith.constant 0 : index
    %c2_127 = arith.constant 2 : index
    %262 = vector.load %arg1[%c0_124, %c3_125, %c0_126, %c2_127] : memref<1x8x11x11xf32, #tpu.memory_space<vmem>>, vector<1x1x8x8xf32>
    %263 = vector.shape_cast %262 : vector<1x1x8x8xf32> to vector<1x8x8xf32>
    %c0_128 = arith.constant 0 : index
    %c7_129 = arith.constant 7 : index
    %c0_130 = arith.constant 0 : index
    %c2_131 = arith.constant 2 : index
    %264 = vector.load %arg1[%c0_128, %c7_129, %c0_130, %c2_131] : memref<1x8x11x11xf32, #tpu.memory_space<vmem>>, vector<1x1x8x8xf32>
    %265 = vector.shape_cast %264 : vector<1x1x8x8xf32> to vector<1x8x8xf32>
    %266 = tpu.concatenate %263, %263 in 2 : vector<1x8x8xf32>, vector<1x8x8xf32> -> vector<1x8x16xf32>
    %267 = tpu.concatenate %266, %266 in 2 : vector<1x8x16xf32>, vector<1x8x16xf32> -> vector<1x8x32xf32>
    %268 = tpu.concatenate %267, %267 in 2 : vector<1x8x32xf32>, vector<1x8x32xf32> -> vector<1x8x64xf32>
    %269 = tpu.concatenate %265, %265 in 2 : vector<1x8x8xf32>, vector<1x8x8xf32> -> vector<1x8x16xf32>
    %270 = tpu.concatenate %269, %269 in 2 : vector<1x8x16xf32>, vector<1x8x16xf32> -> vector<1x8x32xf32>
    %271 = tpu.concatenate %270, %270 in 2 : vector<1x8x32xf32>, vector<1x8x32xf32> -> vector<1x8x64xf32>
    %c24 = arith.constant 24 : index
    %c0_132 = arith.constant 0 : index
    %272 = vector.load %arg2[%c24, %c0_132] : memref<98x64xf32, #tpu.memory_space<vmem>>, vector<1x64xf32>
    %c25 = arith.constant 25 : index
    %c0_133 = arith.constant 0 : index
    %273 = vector.load %arg2[%c25, %c0_133] : memref<98x64xf32, #tpu.memory_space<vmem>>, vector<1x64xf32>
    %274 = vector.shape_cast %272 : vector<1x64xf32> to vector<1x1x64xf32>
    %275 = vector.broadcast %274 : vector<1x1x64xf32> to vector<1x8x64xf32>
    %276 = arith.mulf %268, %275 : vector<1x8x64xf32>
    %277 = arith.addf %261, %276 : vector<1x8x64xf32>
    %278 = vector.shape_cast %273 : vector<1x64xf32> to vector<1x1x64xf32>
    %279 = vector.broadcast %278 : vector<1x1x64xf32> to vector<1x8x64xf32>
    %280 = arith.mulf %271, %279 : vector<1x8x64xf32>
    %281 = arith.addf %277, %280 : vector<1x8x64xf32>
    %c0_134 = arith.constant 0 : index
    %c2_135 = arith.constant 2 : index
    %c0_136 = arith.constant 0 : index
    %c3_137 = arith.constant 3 : index
    %282 = vector.load %arg1[%c0_134, %c2_135, %c0_136, %c3_137] : memref<1x8x11x11xf32, #tpu.memory_space<vmem>>, vector<1x1x8x8xf32>
    %283 = vector.shape_cast %282 : vector<1x1x8x8xf32> to vector<1x8x8xf32>
    %c0_138 = arith.constant 0 : index
    %c6_139 = arith.constant 6 : index
    %c0_140 = arith.constant 0 : index
    %c3_141 = arith.constant 3 : index
    %284 = vector.load %arg1[%c0_138, %c6_139, %c0_140, %c3_141] : memref<1x8x11x11xf32, #tpu.memory_space<vmem>>, vector<1x1x8x8xf32>
    %285 = vector.shape_cast %284 : vector<1x1x8x8xf32> to vector<1x8x8xf32>
    %286 = tpu.concatenate %283, %283 in 2 : vector<1x8x8xf32>, vector<1x8x8xf32> -> vector<1x8x16xf32>
    %287 = tpu.concatenate %286, %286 in 2 : vector<1x8x16xf32>, vector<1x8x16xf32> -> vector<1x8x32xf32>
    %288 = tpu.concatenate %287, %287 in 2 : vector<1x8x32xf32>, vector<1x8x32xf32> -> vector<1x8x64xf32>
    %289 = tpu.concatenate %285, %285 in 2 : vector<1x8x8xf32>, vector<1x8x8xf32> -> vector<1x8x16xf32>
    %290 = tpu.concatenate %289, %289 in 2 : vector<1x8x16xf32>, vector<1x8x16xf32> -> vector<1x8x32xf32>
    %291 = tpu.concatenate %290, %290 in 2 : vector<1x8x32xf32>, vector<1x8x32xf32> -> vector<1x8x64xf32>
    %c26 = arith.constant 26 : index
    %c0_142 = arith.constant 0 : index
    %292 = vector.load %arg2[%c26, %c0_142] : memref<98x64xf32, #tpu.memory_space<vmem>>, vector<1x64xf32>
    %c27 = arith.constant 27 : index
    %c0_143 = arith.constant 0 : index
    %293 = vector.load %arg2[%c27, %c0_143] : memref<98x64xf32, #tpu.memory_space<vmem>>, vector<1x64xf32>
    %294 = vector.shape_cast %292 : vector<1x64xf32> to vector<1x1x64xf32>
    %295 = vector.broadcast %294 : vector<1x1x64xf32> to vector<1x8x64xf32>
    %296 = arith.mulf %288, %295 : vector<1x8x64xf32>
    %297 = arith.addf %281, %296 : vector<1x8x64xf32>
    %298 = vector.shape_cast %293 : vector<1x64xf32> to vector<1x1x64xf32>
    %299 = vector.broadcast %298 : vector<1x1x64xf32> to vector<1x8x64xf32>
    %300 = arith.mulf %291, %299 : vector<1x8x64xf32>
    %301 = arith.addf %297, %300 : vector<1x8x64xf32>
    %c0_144 = arith.constant 0 : index
    %c0_145 = arith.constant 0 : index
    %c1_146 = arith.constant 1 : index
    %c0_147 = arith.constant 0 : index
    %302 = vector.load %arg1[%c0_144, %c0_145, %c1_146, %c0_147] : memref<1x8x11x11xf32, #tpu.memory_space<vmem>>, vector<1x1x8x8xf32>
    %303 = vector.shape_cast %302 : vector<1x1x8x8xf32> to vector<1x8x8xf32>
    %c0_148 = arith.constant 0 : index
    %c4_149 = arith.constant 4 : index
    %c1_150 = arith.constant 1 : index
    %c0_151 = arith.constant 0 : index
    %304 = vector.load %arg1[%c0_148, %c4_149, %c1_150, %c0_151] : memref<1x8x11x11xf32, #tpu.memory_space<vmem>>, vector<1x1x8x8xf32>
    %305 = vector.shape_cast %304 : vector<1x1x8x8xf32> to vector<1x8x8xf32>
    %306 = tpu.concatenate %303, %303 in 2 : vector<1x8x8xf32>, vector<1x8x8xf32> -> vector<1x8x16xf32>
    %307 = tpu.concatenate %306, %306 in 2 : vector<1x8x16xf32>, vector<1x8x16xf32> -> vector<1x8x32xf32>
    %308 = tpu.concatenate %307, %307 in 2 : vector<1x8x32xf32>, vector<1x8x32xf32> -> vector<1x8x64xf32>
    %309 = tpu.concatenate %305, %305 in 2 : vector<1x8x8xf32>, vector<1x8x8xf32> -> vector<1x8x16xf32>
    %310 = tpu.concatenate %309, %309 in 2 : vector<1x8x16xf32>, vector<1x8x16xf32> -> vector<1x8x32xf32>
    %311 = tpu.concatenate %310, %310 in 2 : vector<1x8x32xf32>, vector<1x8x32xf32> -> vector<1x8x64xf32>
    %c28 = arith.constant 28 : index
    %c0_152 = arith.constant 0 : index
    %312 = vector.load %arg2[%c28, %c0_152] : memref<98x64xf32, #tpu.memory_space<vmem>>, vector<1x64xf32>
    %c29 = arith.constant 29 : index
    %c0_153 = arith.constant 0 : index
    %313 = vector.load %arg2[%c29, %c0_153] : memref<98x64xf32, #tpu.memory_space<vmem>>, vector<1x64xf32>
    %314 = vector.shape_cast %312 : vector<1x64xf32> to vector<1x1x64xf32>
    %315 = vector.broadcast %314 : vector<1x1x64xf32> to vector<1x8x64xf32>
    %316 = arith.mulf %308, %315 : vector<1x8x64xf32>
    %317 = arith.addf %301, %316 : vector<1x8x64xf32>
    %318 = vector.shape_cast %313 : vector<1x64xf32> to vector<1x1x64xf32>
    %319 = vector.broadcast %318 : vector<1x1x64xf32> to vector<1x8x64xf32>
    %320 = arith.mulf %311, %319 : vector<1x8x64xf32>
    %321 = arith.addf %317, %320 : vector<1x8x64xf32>
    %c0_154 = arith.constant 0 : index
    %c1_155 = arith.constant 1 : index
    %c1_156 = arith.constant 1 : index
    %c0_157 = arith.constant 0 : index
    %322 = vector.load %arg1[%c0_154, %c1_155, %c1_156, %c0_157] : memref<1x8x11x11xf32, #tpu.memory_space<vmem>>, vector<1x1x8x8xf32>
    %323 = vector.shape_cast %322 : vector<1x1x8x8xf32> to vector<1x8x8xf32>
    %c0_158 = arith.constant 0 : index
    %c5_159 = arith.constant 5 : index
    %c1_160 = arith.constant 1 : index
    %c0_161 = arith.constant 0 : index
    %324 = vector.load %arg1[%c0_158, %c5_159, %c1_160, %c0_161] : memref<1x8x11x11xf32, #tpu.memory_space<vmem>>, vector<1x1x8x8xf32>
    %325 = vector.shape_cast %324 : vector<1x1x8x8xf32> to vector<1x8x8xf32>
    %326 = tpu.concatenate %323, %323 in 2 : vector<1x8x8xf32>, vector<1x8x8xf32> -> vector<1x8x16xf32>
    %327 = tpu.concatenate %326, %326 in 2 : vector<1x8x16xf32>, vector<1x8x16xf32> -> vector<1x8x32xf32>
    %328 = tpu.concatenate %327, %327 in 2 : vector<1x8x32xf32>, vector<1x8x32xf32> -> vector<1x8x64xf32>
    %329 = tpu.concatenate %325, %325 in 2 : vector<1x8x8xf32>, vector<1x8x8xf32> -> vector<1x8x16xf32>
    %330 = tpu.concatenate %329, %329 in 2 : vector<1x8x16xf32>, vector<1x8x16xf32> -> vector<1x8x32xf32>
    %331 = tpu.concatenate %330, %330 in 2 : vector<1x8x32xf32>, vector<1x8x32xf32> -> vector<1x8x64xf32>
    %c30 = arith.constant 30 : index
    %c0_162 = arith.constant 0 : index
    %332 = vector.load %arg2[%c30, %c0_162] : memref<98x64xf32, #tpu.memory_space<vmem>>, vector<1x64xf32>
    %c31 = arith.constant 31 : index
    %c0_163 = arith.constant 0 : index
    %333 = vector.load %arg2[%c31, %c0_163] : memref<98x64xf32, #tpu.memory_space<vmem>>, vector<1x64xf32>
    %334 = vector.shape_cast %332 : vector<1x64xf32> to vector<1x1x64xf32>
    %335 = vector.broadcast %334 : vector<1x1x64xf32> to vector<1x8x64xf32>
    %336 = arith.mulf %328, %335 : vector<1x8x64xf32>
    %337 = arith.addf %321, %336 : vector<1x8x64xf32>
    %338 = vector.shape_cast %333 : vector<1x64xf32> to vector<1x1x64xf32>
    %339 = vector.broadcast %338 : vector<1x1x64xf32> to vector<1x8x64xf32>
    %340 = arith.mulf %331, %339 : vector<1x8x64xf32>
    %341 = arith.addf %337, %340 : vector<1x8x64xf32>
    %c0_164 = arith.constant 0 : index
    %c0_165 = arith.constant 0 : index
    %c1_166 = arith.constant 1 : index
    %c1_167 = arith.constant 1 : index
    %342 = vector.load %arg1[%c0_164, %c0_165, %c1_166, %c1_167] : memref<1x8x11x11xf32, #tpu.memory_space<vmem>>, vector<1x1x8x8xf32>
    %343 = vector.shape_cast %342 : vector<1x1x8x8xf32> to vector<1x8x8xf32>
    %c0_168 = arith.constant 0 : index
    %c4_169 = arith.constant 4 : index
    %c1_170 = arith.constant 1 : index
    %c1_171 = arith.constant 1 : index
    %344 = vector.load %arg1[%c0_168, %c4_169, %c1_170, %c1_171] : memref<1x8x11x11xf32, #tpu.memory_space<vmem>>, vector<1x1x8x8xf32>
    %345 = vector.shape_cast %344 : vector<1x1x8x8xf32> to vector<1x8x8xf32>
    %346 = tpu.concatenate %343, %343 in 2 : vector<1x8x8xf32>, vector<1x8x8xf32> -> vector<1x8x16xf32>
    %347 = tpu.concatenate %346, %346 in 2 : vector<1x8x16xf32>, vector<1x8x16xf32> -> vector<1x8x32xf32>
    %348 = tpu.concatenate %347, %347 in 2 : vector<1x8x32xf32>, vector<1x8x32xf32> -> vector<1x8x64xf32>
    %349 = tpu.concatenate %345, %345 in 2 : vector<1x8x8xf32>, vector<1x8x8xf32> -> vector<1x8x16xf32>
    %350 = tpu.concatenate %349, %349 in 2 : vector<1x8x16xf32>, vector<1x8x16xf32> -> vector<1x8x32xf32>
    %351 = tpu.concatenate %350, %350 in 2 : vector<1x8x32xf32>, vector<1x8x32xf32> -> vector<1x8x64xf32>
    %c32 = arith.constant 32 : index
    %c0_172 = arith.constant 0 : index
    %352 = vector.load %arg2[%c32, %c0_172] : memref<98x64xf32, #tpu.memory_space<vmem>>, vector<1x64xf32>
    %c33 = arith.constant 33 : index
    %c0_173 = arith.constant 0 : index
    %353 = vector.load %arg2[%c33, %c0_173] : memref<98x64xf32, #tpu.memory_space<vmem>>, vector<1x64xf32>
    %354 = vector.shape_cast %352 : vector<1x64xf32> to vector<1x1x64xf32>
    %355 = vector.broadcast %354 : vector<1x1x64xf32> to vector<1x8x64xf32>
    %356 = arith.mulf %348, %355 : vector<1x8x64xf32>
    %357 = arith.addf %341, %356 : vector<1x8x64xf32>
    %358 = vector.shape_cast %353 : vector<1x64xf32> to vector<1x1x64xf32>
    %359 = vector.broadcast %358 : vector<1x1x64xf32> to vector<1x8x64xf32>
    %360 = arith.mulf %351, %359 : vector<1x8x64xf32>
    %361 = arith.addf %357, %360 : vector<1x8x64xf32>
    %c0_174 = arith.constant 0 : index
    %c1_175 = arith.constant 1 : index
    %c1_176 = arith.constant 1 : index
    %c1_177 = arith.constant 1 : index
    %362 = vector.load %arg1[%c0_174, %c1_175, %c1_176, %c1_177] : memref<1x8x11x11xf32, #tpu.memory_space<vmem>>, vector<1x1x8x8xf32>
    %363 = vector.shape_cast %362 : vector<1x1x8x8xf32> to vector<1x8x8xf32>
    %c0_178 = arith.constant 0 : index
    %c5_179 = arith.constant 5 : index
    %c1_180 = arith.constant 1 : index
    %c1_181 = arith.constant 1 : index
    %364 = vector.load %arg1[%c0_178, %c5_179, %c1_180, %c1_181] : memref<1x8x11x11xf32, #tpu.memory_space<vmem>>, vector<1x1x8x8xf32>
    %365 = vector.shape_cast %364 : vector<1x1x8x8xf32> to vector<1x8x8xf32>
    %366 = tpu.concatenate %363, %363 in 2 : vector<1x8x8xf32>, vector<1x8x8xf32> -> vector<1x8x16xf32>
    %367 = tpu.concatenate %366, %366 in 2 : vector<1x8x16xf32>, vector<1x8x16xf32> -> vector<1x8x32xf32>
    %368 = tpu.concatenate %367, %367 in 2 : vector<1x8x32xf32>, vector<1x8x32xf32> -> vector<1x8x64xf32>
    %369 = tpu.concatenate %365, %365 in 2 : vector<1x8x8xf32>, vector<1x8x8xf32> -> vector<1x8x16xf32>
    %370 = tpu.concatenate %369, %369 in 2 : vector<1x8x16xf32>, vector<1x8x16xf32> -> vector<1x8x32xf32>
    %371 = tpu.concatenate %370, %370 in 2 : vector<1x8x32xf32>, vector<1x8x32xf32> -> vector<1x8x64xf32>
    %c34 = arith.constant 34 : index
    %c0_182 = arith.constant 0 : index
    %372 = vector.load %arg2[%c34, %c0_182] : memref<98x64xf32, #tpu.memory_space<vmem>>, vector<1x64xf32>
    %c35 = arith.constant 35 : index
    %c0_183 = arith.constant 0 : index
    %373 = vector.load %arg2[%c35, %c0_183] : memref<98x64xf32, #tpu.memory_space<vmem>>, vector<1x64xf32>
    %374 = vector.shape_cast %372 : vector<1x64xf32> to vector<1x1x64xf32>
    %375 = vector.broadcast %374 : vector<1x1x64xf32> to vector<1x8x64xf32>
    %376 = arith.mulf %368, %375 : vector<1x8x64xf32>
    %377 = arith.addf %361, %376 : vector<1x8x64xf32>
    %378 = vector.shape_cast %373 : vector<1x64xf32> to vector<1x1x64xf32>
    %379 = vector.broadcast %378 : vector<1x1x64xf32> to vector<1x8x64xf32>
    %380 = arith.mulf %371, %379 : vector<1x8x64xf32>
    %381 = arith.addf %377, %380 : vector<1x8x64xf32>
    %c0_184 = arith.constant 0 : index
    %c0_185 = arith.constant 0 : index
    %c1_186 = arith.constant 1 : index
    %c2_187 = arith.constant 2 : index
    %382 = vector.load %arg1[%c0_184, %c0_185, %c1_186, %c2_187] : memref<1x8x11x11xf32, #tpu.memory_space<vmem>>, vector<1x1x8x8xf32>
    %383 = vector.shape_cast %382 : vector<1x1x8x8xf32> to vector<1x8x8xf32>
    %c0_188 = arith.constant 0 : index
    %c4_189 = arith.constant 4 : index
    %c1_190 = arith.constant 1 : index
    %c2_191 = arith.constant 2 : index
    %384 = vector.load %arg1[%c0_188, %c4_189, %c1_190, %c2_191] : memref<1x8x11x11xf32, #tpu.memory_space<vmem>>, vector<1x1x8x8xf32>
    %385 = vector.shape_cast %384 : vector<1x1x8x8xf32> to vector<1x8x8xf32>
    %386 = tpu.concatenate %383, %383 in 2 : vector<1x8x8xf32>, vector<1x8x8xf32> -> vector<1x8x16xf32>
    %387 = tpu.concatenate %386, %386 in 2 : vector<1x8x16xf32>, vector<1x8x16xf32> -> vector<1x8x32xf32>
    %388 = tpu.concatenate %387, %387 in 2 : vector<1x8x32xf32>, vector<1x8x32xf32> -> vector<1x8x64xf32>
    %389 = tpu.concatenate %385, %385 in 2 : vector<1x8x8xf32>, vector<1x8x8xf32> -> vector<1x8x16xf32>
    %390 = tpu.concatenate %389, %389 in 2 : vector<1x8x16xf32>, vector<1x8x16xf32> -> vector<1x8x32xf32>
    %391 = tpu.concatenate %390, %390 in 2 : vector<1x8x32xf32>, vector<1x8x32xf32> -> vector<1x8x64xf32>
    %c36 = arith.constant 36 : index
    %c0_192 = arith.constant 0 : index
    %392 = vector.load %arg2[%c36, %c0_192] : memref<98x64xf32, #tpu.memory_space<vmem>>, vector<1x64xf32>
    %c37 = arith.constant 37 : index
    %c0_193 = arith.constant 0 : index
    %393 = vector.load %arg2[%c37, %c0_193] : memref<98x64xf32, #tpu.memory_space<vmem>>, vector<1x64xf32>
    %394 = vector.shape_cast %392 : vector<1x64xf32> to vector<1x1x64xf32>
    %395 = vector.broadcast %394 : vector<1x1x64xf32> to vector<1x8x64xf32>
    %396 = arith.mulf %388, %395 : vector<1x8x64xf32>
    %397 = arith.addf %381, %396 : vector<1x8x64xf32>
    %398 = vector.shape_cast %393 : vector<1x64xf32> to vector<1x1x64xf32>
    %399 = vector.broadcast %398 : vector<1x1x64xf32> to vector<1x8x64xf32>
    %400 = arith.mulf %391, %399 : vector<1x8x64xf32>
    %401 = arith.addf %397, %400 : vector<1x8x64xf32>
    %c0_194 = arith.constant 0 : index
    %c1_195 = arith.constant 1 : index
    %c1_196 = arith.constant 1 : index
    %c2_197 = arith.constant 2 : index
    %402 = vector.load %arg1[%c0_194, %c1_195, %c1_196, %c2_197] : memref<1x8x11x11xf32, #tpu.memory_space<vmem>>, vector<1x1x8x8xf32>
    %403 = vector.shape_cast %402 : vector<1x1x8x8xf32> to vector<1x8x8xf32>
    %c0_198 = arith.constant 0 : index
    %c5_199 = arith.constant 5 : index
    %c1_200 = arith.constant 1 : index
    %c2_201 = arith.constant 2 : index
    %404 = vector.load %arg1[%c0_198, %c5_199, %c1_200, %c2_201] : memref<1x8x11x11xf32, #tpu.memory_space<vmem>>, vector<1x1x8x8xf32>
    %405 = vector.shape_cast %404 : vector<1x1x8x8xf32> to vector<1x8x8xf32>
    %406 = tpu.concatenate %403, %403 in 2 : vector<1x8x8xf32>, vector<1x8x8xf32> -> vector<1x8x16xf32>
    %407 = tpu.concatenate %406, %406 in 2 : vector<1x8x16xf32>, vector<1x8x16xf32> -> vector<1x8x32xf32>
    %408 = tpu.concatenate %407, %407 in 2 : vector<1x8x32xf32>, vector<1x8x32xf32> -> vector<1x8x64xf32>
    %409 = tpu.concatenate %405, %405 in 2 : vector<1x8x8xf32>, vector<1x8x8xf32> -> vector<1x8x16xf32>
    %410 = tpu.concatenate %409, %409 in 2 : vector<1x8x16xf32>, vector<1x8x16xf32> -> vector<1x8x32xf32>
    %411 = tpu.concatenate %410, %410 in 2 : vector<1x8x32xf32>, vector<1x8x32xf32> -> vector<1x8x64xf32>
    %c38 = arith.constant 38 : index
    %c0_202 = arith.constant 0 : index
    %412 = vector.load %arg2[%c38, %c0_202] : memref<98x64xf32, #tpu.memory_space<vmem>>, vector<1x64xf32>
    %c39 = arith.constant 39 : index
    %c0_203 = arith.constant 0 : index
    %413 = vector.load %arg2[%c39, %c0_203] : memref<98x64xf32, #tpu.memory_space<vmem>>, vector<1x64xf32>
    %414 = vector.shape_cast %412 : vector<1x64xf32> to vector<1x1x64xf32>
    %415 = vector.broadcast %414 : vector<1x1x64xf32> to vector<1x8x64xf32>
    %416 = arith.mulf %408, %415 : vector<1x8x64xf32>
    %417 = arith.addf %401, %416 : vector<1x8x64xf32>
    %418 = vector.shape_cast %413 : vector<1x64xf32> to vector<1x1x64xf32>
    %419 = vector.broadcast %418 : vector<1x1x64xf32> to vector<1x8x64xf32>
    %420 = arith.mulf %411, %419 : vector<1x8x64xf32>
    %421 = arith.addf %417, %420 : vector<1x8x64xf32>
    %c0_204 = arith.constant 0 : index
    %c0_205 = arith.constant 0 : index
    %c1_206 = arith.constant 1 : index
    %c3_207 = arith.constant 3 : index
    %422 = vector.load %arg1[%c0_204, %c0_205, %c1_206, %c3_207] : memref<1x8x11x11xf32, #tpu.memory_space<vmem>>, vector<1x1x8x8xf32>
    %423 = vector.shape_cast %422 : vector<1x1x8x8xf32> to vector<1x8x8xf32>
    %c0_208 = arith.constant 0 : index
    %c4_209 = arith.constant 4 : index
    %c1_210 = arith.constant 1 : index
    %c3_211 = arith.constant 3 : index
    %424 = vector.load %arg1[%c0_208, %c4_209, %c1_210, %c3_211] : memref<1x8x11x11xf32, #tpu.memory_space<vmem>>, vector<1x1x8x8xf32>
    %425 = vector.shape_cast %424 : vector<1x1x8x8xf32> to vector<1x8x8xf32>
    %426 = tpu.concatenate %423, %423 in 2 : vector<1x8x8xf32>, vector<1x8x8xf32> -> vector<1x8x16xf32>
    %427 = tpu.concatenate %426, %426 in 2 : vector<1x8x16xf32>, vector<1x8x16xf32> -> vector<1x8x32xf32>
    %428 = tpu.concatenate %427, %427 in 2 : vector<1x8x32xf32>, vector<1x8x32xf32> -> vector<1x8x64xf32>
    %429 = tpu.concatenate %425, %425 in 2 : vector<1x8x8xf32>, vector<1x8x8xf32> -> vector<1x8x16xf32>
    %430 = tpu.concatenate %429, %429 in 2 : vector<1x8x16xf32>, vector<1x8x16xf32> -> vector<1x8x32xf32>
    %431 = tpu.concatenate %430, %430 in 2 : vector<1x8x32xf32>, vector<1x8x32xf32> -> vector<1x8x64xf32>
    %c40 = arith.constant 40 : index
    %c0_212 = arith.constant 0 : index
    %432 = vector.load %arg2[%c40, %c0_212] : memref<98x64xf32, #tpu.memory_space<vmem>>, vector<1x64xf32>
    %c41 = arith.constant 41 : index
    %c0_213 = arith.constant 0 : index
    %433 = vector.load %arg2[%c41, %c0_213] : memref<98x64xf32, #tpu.memory_space<vmem>>, vector<1x64xf32>
    %434 = vector.shape_cast %432 : vector<1x64xf32> to vector<1x1x64xf32>
    %435 = vector.broadcast %434 : vector<1x1x64xf32> to vector<1x8x64xf32>
    %436 = arith.mulf %428, %435 : vector<1x8x64xf32>
    %437 = arith.addf %421, %436 : vector<1x8x64xf32>
    %438 = vector.shape_cast %433 : vector<1x64xf32> to vector<1x1x64xf32>
    %439 = vector.broadcast %438 : vector<1x1x64xf32> to vector<1x8x64xf32>
    %440 = arith.mulf %431, %439 : vector<1x8x64xf32>
    %441 = arith.addf %437, %440 : vector<1x8x64xf32>
    %c0_214 = arith.constant 0 : index
    %c2_215 = arith.constant 2 : index
    %c1_216 = arith.constant 1 : index
    %c0_217 = arith.constant 0 : index
    %442 = vector.load %arg1[%c0_214, %c2_215, %c1_216, %c0_217] : memref<1x8x11x11xf32, #tpu.memory_space<vmem>>, vector<1x1x8x8xf32>
    %443 = vector.shape_cast %442 : vector<1x1x8x8xf32> to vector<1x8x8xf32>
    %c0_218 = arith.constant 0 : index
    %c6_219 = arith.constant 6 : index
    %c1_220 = arith.constant 1 : index
    %c0_221 = arith.constant 0 : index
    %444 = vector.load %arg1[%c0_218, %c6_219, %c1_220, %c0_221] : memref<1x8x11x11xf32, #tpu.memory_space<vmem>>, vector<1x1x8x8xf32>
    %445 = vector.shape_cast %444 : vector<1x1x8x8xf32> to vector<1x8x8xf32>
    %446 = tpu.concatenate %443, %443 in 2 : vector<1x8x8xf32>, vector<1x8x8xf32> -> vector<1x8x16xf32>
    %447 = tpu.concatenate %446, %446 in 2 : vector<1x8x16xf32>, vector<1x8x16xf32> -> vector<1x8x32xf32>
    %448 = tpu.concatenate %447, %447 in 2 : vector<1x8x32xf32>, vector<1x8x32xf32> -> vector<1x8x64xf32>
    %449 = tpu.concatenate %445, %445 in 2 : vector<1x8x8xf32>, vector<1x8x8xf32> -> vector<1x8x16xf32>
    %450 = tpu.concatenate %449, %449 in 2 : vector<1x8x16xf32>, vector<1x8x16xf32> -> vector<1x8x32xf32>
    %451 = tpu.concatenate %450, %450 in 2 : vector<1x8x32xf32>, vector<1x8x32xf32> -> vector<1x8x64xf32>
    %c42 = arith.constant 42 : index
    %c0_222 = arith.constant 0 : index
    %452 = vector.load %arg2[%c42, %c0_222] : memref<98x64xf32, #tpu.memory_space<vmem>>, vector<1x64xf32>
    %c43 = arith.constant 43 : index
    %c0_223 = arith.constant 0 : index
    %453 = vector.load %arg2[%c43, %c0_223] : memref<98x64xf32, #tpu.memory_space<vmem>>, vector<1x64xf32>
    %454 = vector.shape_cast %452 : vector<1x64xf32> to vector<1x1x64xf32>
    %455 = vector.broadcast %454 : vector<1x1x64xf32> to vector<1x8x64xf32>
    %456 = arith.mulf %448, %455 : vector<1x8x64xf32>
    %457 = arith.addf %441, %456 : vector<1x8x64xf32>
    %458 = vector.shape_cast %453 : vector<1x64xf32> to vector<1x1x64xf32>
    %459 = vector.broadcast %458 : vector<1x1x64xf32> to vector<1x8x64xf32>
    %460 = arith.mulf %451, %459 : vector<1x8x64xf32>
    %461 = arith.addf %457, %460 : vector<1x8x64xf32>
    %c0_224 = arith.constant 0 : index
    %c3_225 = arith.constant 3 : index
    %c1_226 = arith.constant 1 : index
    %c0_227 = arith.constant 0 : index
    %462 = vector.load %arg1[%c0_224, %c3_225, %c1_226, %c0_227] : memref<1x8x11x11xf32, #tpu.memory_space<vmem>>, vector<1x1x8x8xf32>
    %463 = vector.shape_cast %462 : vector<1x1x8x8xf32> to vector<1x8x8xf32>
    %c0_228 = arith.constant 0 : index
    %c7_229 = arith.constant 7 : index
    %c1_230 = arith.constant 1 : index
    %c0_231 = arith.constant 0 : index
    %464 = vector.load %arg1[%c0_228, %c7_229, %c1_230, %c0_231] : memref<1x8x11x11xf32, #tpu.memory_space<vmem>>, vector<1x1x8x8xf32>
    %465 = vector.shape_cast %464 : vector<1x1x8x8xf32> to vector<1x8x8xf32>
    %466 = tpu.concatenate %463, %463 in 2 : vector<1x8x8xf32>, vector<1x8x8xf32> -> vector<1x8x16xf32>
    %467 = tpu.concatenate %466, %466 in 2 : vector<1x8x16xf32>, vector<1x8x16xf32> -> vector<1x8x32xf32>
    %468 = tpu.concatenate %467, %467 in 2 : vector<1x8x32xf32>, vector<1x8x32xf32> -> vector<1x8x64xf32>
    %469 = tpu.concatenate %465, %465 in 2 : vector<1x8x8xf32>, vector<1x8x8xf32> -> vector<1x8x16xf32>
    %470 = tpu.concatenate %469, %469 in 2 : vector<1x8x16xf32>, vector<1x8x16xf32> -> vector<1x8x32xf32>
    %471 = tpu.concatenate %470, %470 in 2 : vector<1x8x32xf32>, vector<1x8x32xf32> -> vector<1x8x64xf32>
    %c44 = arith.constant 44 : index
    %c0_232 = arith.constant 0 : index
    %472 = vector.load %arg2[%c44, %c0_232] : memref<98x64xf32, #tpu.memory_space<vmem>>, vector<1x64xf32>
    %c45 = arith.constant 45 : index
    %c0_233 = arith.constant 0 : index
    %473 = vector.load %arg2[%c45, %c0_233] : memref<98x64xf32, #tpu.memory_space<vmem>>, vector<1x64xf32>
    %474 = vector.shape_cast %472 : vector<1x64xf32> to vector<1x1x64xf32>
    %475 = vector.broadcast %474 : vector<1x1x64xf32> to vector<1x8x64xf32>
    %476 = arith.mulf %468, %475 : vector<1x8x64xf32>
    %477 = arith.addf %461, %476 : vector<1x8x64xf32>
    %478 = vector.shape_cast %473 : vector<1x64xf32> to vector<1x1x64xf32>
    %479 = vector.broadcast %478 : vector<1x1x64xf32> to vector<1x8x64xf32>
    %480 = arith.mulf %471, %479 : vector<1x8x64xf32>
    %481 = arith.addf %477, %480 : vector<1x8x64xf32>
    %c0_234 = arith.constant 0 : index
    %c2_235 = arith.constant 2 : index
    %c1_236 = arith.constant 1 : index
    %c1_237 = arith.constant 1 : index
    %482 = vector.load %arg1[%c0_234, %c2_235, %c1_236, %c1_237] : memref<1x8x11x11xf32, #tpu.memory_space<vmem>>, vector<1x1x8x8xf32>
    %483 = vector.shape_cast %482 : vector<1x1x8x8xf32> to vector<1x8x8xf32>
    %c0_238 = arith.constant 0 : index
    %c6_239 = arith.constant 6 : index
    %c1_240 = arith.constant 1 : index
    %c1_241 = arith.constant 1 : index
    %484 = vector.load %arg1[%c0_238, %c6_239, %c1_240, %c1_241] : memref<1x8x11x11xf32, #tpu.memory_space<vmem>>, vector<1x1x8x8xf32>
    %485 = vector.shape_cast %484 : vector<1x1x8x8xf32> to vector<1x8x8xf32>
    %486 = tpu.concatenate %483, %483 in 2 : vector<1x8x8xf32>, vector<1x8x8xf32> -> vector<1x8x16xf32>
    %487 = tpu.concatenate %486, %486 in 2 : vector<1x8x16xf32>, vector<1x8x16xf32> -> vector<1x8x32xf32>
    %488 = tpu.concatenate %487, %487 in 2 : vector<1x8x32xf32>, vector<1x8x32xf32> -> vector<1x8x64xf32>
    %489 = tpu.concatenate %485, %485 in 2 : vector<1x8x8xf32>, vector<1x8x8xf32> -> vector<1x8x16xf32>
    %490 = tpu.concatenate %489, %489 in 2 : vector<1x8x16xf32>, vector<1x8x16xf32> -> vector<1x8x32xf32>
    %491 = tpu.concatenate %490, %490 in 2 : vector<1x8x32xf32>, vector<1x8x32xf32> -> vector<1x8x64xf32>
    %c46 = arith.constant 46 : index
    %c0_242 = arith.constant 0 : index
    %492 = vector.load %arg2[%c46, %c0_242] : memref<98x64xf32, #tpu.memory_space<vmem>>, vector<1x64xf32>
    %c47 = arith.constant 47 : index
    %c0_243 = arith.constant 0 : index
    %493 = vector.load %arg2[%c47, %c0_243] : memref<98x64xf32, #tpu.memory_space<vmem>>, vector<1x64xf32>
    %494 = vector.shape_cast %492 : vector<1x64xf32> to vector<1x1x64xf32>
    %495 = vector.broadcast %494 : vector<1x1x64xf32> to vector<1x8x64xf32>
    %496 = arith.mulf %488, %495 : vector<1x8x64xf32>
    %497 = arith.addf %481, %496 : vector<1x8x64xf32>
    %498 = vector.shape_cast %493 : vector<1x64xf32> to vector<1x1x64xf32>
    %499 = vector.broadcast %498 : vector<1x1x64xf32> to vector<1x8x64xf32>
    %500 = arith.mulf %491, %499 : vector<1x8x64xf32>
    %501 = arith.addf %497, %500 : vector<1x8x64xf32>
    %c0_244 = arith.constant 0 : index
    %c3_245 = arith.constant 3 : index
    %c1_246 = arith.constant 1 : index
    %c1_247 = arith.constant 1 : index
    %502 = vector.load %arg1[%c0_244, %c3_245, %c1_246, %c1_247] : memref<1x8x11x11xf32, #tpu.memory_space<vmem>>, vector<1x1x8x8xf32>
    %503 = vector.shape_cast %502 : vector<1x1x8x8xf32> to vector<1x8x8xf32>
    %c0_248 = arith.constant 0 : index
    %c7_249 = arith.constant 7 : index
    %c1_250 = arith.constant 1 : index
    %c1_251 = arith.constant 1 : index
    %504 = vector.load %arg1[%c0_248, %c7_249, %c1_250, %c1_251] : memref<1x8x11x11xf32, #tpu.memory_space<vmem>>, vector<1x1x8x8xf32>
    %505 = vector.shape_cast %504 : vector<1x1x8x8xf32> to vector<1x8x8xf32>
    %506 = tpu.concatenate %503, %503 in 2 : vector<1x8x8xf32>, vector<1x8x8xf32> -> vector<1x8x16xf32>
    %507 = tpu.concatenate %506, %506 in 2 : vector<1x8x16xf32>, vector<1x8x16xf32> -> vector<1x8x32xf32>
    %508 = tpu.concatenate %507, %507 in 2 : vector<1x8x32xf32>, vector<1x8x32xf32> -> vector<1x8x64xf32>
    %509 = tpu.concatenate %505, %505 in 2 : vector<1x8x8xf32>, vector<1x8x8xf32> -> vector<1x8x16xf32>
    %510 = tpu.concatenate %509, %509 in 2 : vector<1x8x16xf32>, vector<1x8x16xf32> -> vector<1x8x32xf32>
    %511 = tpu.concatenate %510, %510 in 2 : vector<1x8x32xf32>, vector<1x8x32xf32> -> vector<1x8x64xf32>
    %c48 = arith.constant 48 : index
    %c0_252 = arith.constant 0 : index
    %512 = vector.load %arg2[%c48, %c0_252] : memref<98x64xf32, #tpu.memory_space<vmem>>, vector<1x64xf32>
    %c49 = arith.constant 49 : index
    %c0_253 = arith.constant 0 : index
    %513 = vector.load %arg2[%c49, %c0_253] : memref<98x64xf32, #tpu.memory_space<vmem>>, vector<1x64xf32>
    %514 = vector.shape_cast %512 : vector<1x64xf32> to vector<1x1x64xf32>
    %515 = vector.broadcast %514 : vector<1x1x64xf32> to vector<1x8x64xf32>
    %516 = arith.mulf %508, %515 : vector<1x8x64xf32>
    %517 = arith.addf %501, %516 : vector<1x8x64xf32>
    %518 = vector.shape_cast %513 : vector<1x64xf32> to vector<1x1x64xf32>
    %519 = vector.broadcast %518 : vector<1x1x64xf32> to vector<1x8x64xf32>
    %520 = arith.mulf %511, %519 : vector<1x8x64xf32>
    %521 = arith.addf %517, %520 : vector<1x8x64xf32>
    %c0_254 = arith.constant 0 : index
    %c2_255 = arith.constant 2 : index
    %c1_256 = arith.constant 1 : index
    %c2_257 = arith.constant 2 : index
    %522 = vector.load %arg1[%c0_254, %c2_255, %c1_256, %c2_257] : memref<1x8x11x11xf32, #tpu.memory_space<vmem>>, vector<1x1x8x8xf32>
    %523 = vector.shape_cast %522 : vector<1x1x8x8xf32> to vector<1x8x8xf32>
    %c0_258 = arith.constant 0 : index
    %c6_259 = arith.constant 6 : index
    %c1_260 = arith.constant 1 : index
    %c2_261 = arith.constant 2 : index
    %524 = vector.load %arg1[%c0_258, %c6_259, %c1_260, %c2_261] : memref<1x8x11x11xf32, #tpu.memory_space<vmem>>, vector<1x1x8x8xf32>
    %525 = vector.shape_cast %524 : vector<1x1x8x8xf32> to vector<1x8x8xf32>
    %526 = tpu.concatenate %523, %523 in 2 : vector<1x8x8xf32>, vector<1x8x8xf32> -> vector<1x8x16xf32>
    %527 = tpu.concatenate %526, %526 in 2 : vector<1x8x16xf32>, vector<1x8x16xf32> -> vector<1x8x32xf32>
    %528 = tpu.concatenate %527, %527 in 2 : vector<1x8x32xf32>, vector<1x8x32xf32> -> vector<1x8x64xf32>
    %529 = tpu.concatenate %525, %525 in 2 : vector<1x8x8xf32>, vector<1x8x8xf32> -> vector<1x8x16xf32>
    %530 = tpu.concatenate %529, %529 in 2 : vector<1x8x16xf32>, vector<1x8x16xf32> -> vector<1x8x32xf32>
    %531 = tpu.concatenate %530, %530 in 2 : vector<1x8x32xf32>, vector<1x8x32xf32> -> vector<1x8x64xf32>
    %c50 = arith.constant 50 : index
    %c0_262 = arith.constant 0 : index
    %532 = vector.load %arg2[%c50, %c0_262] : memref<98x64xf32, #tpu.memory_space<vmem>>, vector<1x64xf32>
    %c51 = arith.constant 51 : index
    %c0_263 = arith.constant 0 : index
    %533 = vector.load %arg2[%c51, %c0_263] : memref<98x64xf32, #tpu.memory_space<vmem>>, vector<1x64xf32>
    %534 = vector.shape_cast %532 : vector<1x64xf32> to vector<1x1x64xf32>
    %535 = vector.broadcast %534 : vector<1x1x64xf32> to vector<1x8x64xf32>
    %536 = arith.mulf %528, %535 : vector<1x8x64xf32>
    %537 = arith.addf %521, %536 : vector<1x8x64xf32>
    %538 = vector.shape_cast %533 : vector<1x64xf32> to vector<1x1x64xf32>
    %539 = vector.broadcast %538 : vector<1x1x64xf32> to vector<1x8x64xf32>
    %540 = arith.mulf %531, %539 : vector<1x8x64xf32>
    %541 = arith.addf %537, %540 : vector<1x8x64xf32>
    %c0_264 = arith.constant 0 : index
    %c3_265 = arith.constant 3 : index
    %c1_266 = arith.constant 1 : index
    %c2_267 = arith.constant 2 : index
    %542 = vector.load %arg1[%c0_264, %c3_265, %c1_266, %c2_267] : memref<1x8x11x11xf32, #tpu.memory_space<vmem>>, vector<1x1x8x8xf32>
    %543 = vector.shape_cast %542 : vector<1x1x8x8xf32> to vector<1x8x8xf32>
    %c0_268 = arith.constant 0 : index
    %c7_269 = arith.constant 7 : index
    %c1_270 = arith.constant 1 : index
    %c2_271 = arith.constant 2 : index
    %544 = vector.load %arg1[%c0_268, %c7_269, %c1_270, %c2_271] : memref<1x8x11x11xf32, #tpu.memory_space<vmem>>, vector<1x1x8x8xf32>
    %545 = vector.shape_cast %544 : vector<1x1x8x8xf32> to vector<1x8x8xf32>
    %546 = tpu.concatenate %543, %543 in 2 : vector<1x8x8xf32>, vector<1x8x8xf32> -> vector<1x8x16xf32>
    %547 = tpu.concatenate %546, %546 in 2 : vector<1x8x16xf32>, vector<1x8x16xf32> -> vector<1x8x32xf32>
    %548 = tpu.concatenate %547, %547 in 2 : vector<1x8x32xf32>, vector<1x8x32xf32> -> vector<1x8x64xf32>
    %549 = tpu.concatenate %545, %545 in 2 : vector<1x8x8xf32>, vector<1x8x8xf32> -> vector<1x8x16xf32>
    %550 = tpu.concatenate %549, %549 in 2 : vector<1x8x16xf32>, vector<1x8x16xf32> -> vector<1x8x32xf32>
    %551 = tpu.concatenate %550, %550 in 2 : vector<1x8x32xf32>, vector<1x8x32xf32> -> vector<1x8x64xf32>
    %c52 = arith.constant 52 : index
    %c0_272 = arith.constant 0 : index
    %552 = vector.load %arg2[%c52, %c0_272] : memref<98x64xf32, #tpu.memory_space<vmem>>, vector<1x64xf32>
    %c53 = arith.constant 53 : index
    %c0_273 = arith.constant 0 : index
    %553 = vector.load %arg2[%c53, %c0_273] : memref<98x64xf32, #tpu.memory_space<vmem>>, vector<1x64xf32>
    %554 = vector.shape_cast %552 : vector<1x64xf32> to vector<1x1x64xf32>
    %555 = vector.broadcast %554 : vector<1x1x64xf32> to vector<1x8x64xf32>
    %556 = arith.mulf %548, %555 : vector<1x8x64xf32>
    %557 = arith.addf %541, %556 : vector<1x8x64xf32>
    %558 = vector.shape_cast %553 : vector<1x64xf32> to vector<1x1x64xf32>
    %559 = vector.broadcast %558 : vector<1x1x64xf32> to vector<1x8x64xf32>
    %560 = arith.mulf %551, %559 : vector<1x8x64xf32>
    %561 = arith.addf %557, %560 : vector<1x8x64xf32>
    %c0_274 = arith.constant 0 : index
    %c2_275 = arith.constant 2 : index
    %c1_276 = arith.constant 1 : index
    %c3_277 = arith.constant 3 : index
    %562 = vector.load %arg1[%c0_274, %c2_275, %c1_276, %c3_277] : memref<1x8x11x11xf32, #tpu.memory_space<vmem>>, vector<1x1x8x8xf32>
    %563 = vector.shape_cast %562 : vector<1x1x8x8xf32> to vector<1x8x8xf32>
    %c0_278 = arith.constant 0 : index
    %c6_279 = arith.constant 6 : index
    %c1_280 = arith.constant 1 : index
    %c3_281 = arith.constant 3 : index
    %564 = vector.load %arg1[%c0_278, %c6_279, %c1_280, %c3_281] : memref<1x8x11x11xf32, #tpu.memory_space<vmem>>, vector<1x1x8x8xf32>
    %565 = vector.shape_cast %564 : vector<1x1x8x8xf32> to vector<1x8x8xf32>
    %566 = tpu.concatenate %563, %563 in 2 : vector<1x8x8xf32>, vector<1x8x8xf32> -> vector<1x8x16xf32>
    %567 = tpu.concatenate %566, %566 in 2 : vector<1x8x16xf32>, vector<1x8x16xf32> -> vector<1x8x32xf32>
    %568 = tpu.concatenate %567, %567 in 2 : vector<1x8x32xf32>, vector<1x8x32xf32> -> vector<1x8x64xf32>
    %569 = tpu.concatenate %565, %565 in 2 : vector<1x8x8xf32>, vector<1x8x8xf32> -> vector<1x8x16xf32>
    %570 = tpu.concatenate %569, %569 in 2 : vector<1x8x16xf32>, vector<1x8x16xf32> -> vector<1x8x32xf32>
    %571 = tpu.concatenate %570, %570 in 2 : vector<1x8x32xf32>, vector<1x8x32xf32> -> vector<1x8x64xf32>
    %c54 = arith.constant 54 : index
    %c0_282 = arith.constant 0 : index
    %572 = vector.load %arg2[%c54, %c0_282] : memref<98x64xf32, #tpu.memory_space<vmem>>, vector<1x64xf32>
    %c55 = arith.constant 55 : index
    %c0_283 = arith.constant 0 : index
    %573 = vector.load %arg2[%c55, %c0_283] : memref<98x64xf32, #tpu.memory_space<vmem>>, vector<1x64xf32>
    %574 = vector.shape_cast %572 : vector<1x64xf32> to vector<1x1x64xf32>
    %575 = vector.broadcast %574 : vector<1x1x64xf32> to vector<1x8x64xf32>
    %576 = arith.mulf %568, %575 : vector<1x8x64xf32>
    %577 = arith.addf %561, %576 : vector<1x8x64xf32>
    %578 = vector.shape_cast %573 : vector<1x64xf32> to vector<1x1x64xf32>
    %579 = vector.broadcast %578 : vector<1x1x64xf32> to vector<1x8x64xf32>
    %580 = arith.mulf %571, %579 : vector<1x8x64xf32>
    %581 = arith.addf %577, %580 : vector<1x8x64xf32>
    %c0_284 = arith.constant 0 : index
    %c0_285 = arith.constant 0 : index
    %c2_286 = arith.constant 2 : index
    %c0_287 = arith.constant 0 : index
    %582 = vector.load %arg1[%c0_284, %c0_285, %c2_286, %c0_287] : memref<1x8x11x11xf32, #tpu.memory_space<vmem>>, vector<1x1x8x8xf32>
    %583 = vector.shape_cast %582 : vector<1x1x8x8xf32> to vector<1x8x8xf32>
    %c0_288 = arith.constant 0 : index
    %c4_289 = arith.constant 4 : index
    %c2_290 = arith.constant 2 : index
    %c0_291 = arith.constant 0 : index
    %584 = vector.load %arg1[%c0_288, %c4_289, %c2_290, %c0_291] : memref<1x8x11x11xf32, #tpu.memory_space<vmem>>, vector<1x1x8x8xf32>
    %585 = vector.shape_cast %584 : vector<1x1x8x8xf32> to vector<1x8x8xf32>
    %586 = tpu.concatenate %583, %583 in 2 : vector<1x8x8xf32>, vector<1x8x8xf32> -> vector<1x8x16xf32>
    %587 = tpu.concatenate %586, %586 in 2 : vector<1x8x16xf32>, vector<1x8x16xf32> -> vector<1x8x32xf32>
    %588 = tpu.concatenate %587, %587 in 2 : vector<1x8x32xf32>, vector<1x8x32xf32> -> vector<1x8x64xf32>
    %589 = tpu.concatenate %585, %585 in 2 : vector<1x8x8xf32>, vector<1x8x8xf32> -> vector<1x8x16xf32>
    %590 = tpu.concatenate %589, %589 in 2 : vector<1x8x16xf32>, vector<1x8x16xf32> -> vector<1x8x32xf32>
    %591 = tpu.concatenate %590, %590 in 2 : vector<1x8x32xf32>, vector<1x8x32xf32> -> vector<1x8x64xf32>
    %c56 = arith.constant 56 : index
    %c0_292 = arith.constant 0 : index
    %592 = vector.load %arg2[%c56, %c0_292] : memref<98x64xf32, #tpu.memory_space<vmem>>, vector<1x64xf32>
    %c57 = arith.constant 57 : index
    %c0_293 = arith.constant 0 : index
    %593 = vector.load %arg2[%c57, %c0_293] : memref<98x64xf32, #tpu.memory_space<vmem>>, vector<1x64xf32>
    %594 = vector.shape_cast %592 : vector<1x64xf32> to vector<1x1x64xf32>
    %595 = vector.broadcast %594 : vector<1x1x64xf32> to vector<1x8x64xf32>
    %596 = arith.mulf %588, %595 : vector<1x8x64xf32>
    %597 = arith.addf %581, %596 : vector<1x8x64xf32>
    %598 = vector.shape_cast %593 : vector<1x64xf32> to vector<1x1x64xf32>
    %599 = vector.broadcast %598 : vector<1x1x64xf32> to vector<1x8x64xf32>
    %600 = arith.mulf %591, %599 : vector<1x8x64xf32>
    %601 = arith.addf %597, %600 : vector<1x8x64xf32>
    %c0_294 = arith.constant 0 : index
    %c1_295 = arith.constant 1 : index
    %c2_296 = arith.constant 2 : index
    %c0_297 = arith.constant 0 : index
    %602 = vector.load %arg1[%c0_294, %c1_295, %c2_296, %c0_297] : memref<1x8x11x11xf32, #tpu.memory_space<vmem>>, vector<1x1x8x8xf32>
    %603 = vector.shape_cast %602 : vector<1x1x8x8xf32> to vector<1x8x8xf32>
    %c0_298 = arith.constant 0 : index
    %c5_299 = arith.constant 5 : index
    %c2_300 = arith.constant 2 : index
    %c0_301 = arith.constant 0 : index
    %604 = vector.load %arg1[%c0_298, %c5_299, %c2_300, %c0_301] : memref<1x8x11x11xf32, #tpu.memory_space<vmem>>, vector<1x1x8x8xf32>
    %605 = vector.shape_cast %604 : vector<1x1x8x8xf32> to vector<1x8x8xf32>
    %606 = tpu.concatenate %603, %603 in 2 : vector<1x8x8xf32>, vector<1x8x8xf32> -> vector<1x8x16xf32>
    %607 = tpu.concatenate %606, %606 in 2 : vector<1x8x16xf32>, vector<1x8x16xf32> -> vector<1x8x32xf32>
    %608 = tpu.concatenate %607, %607 in 2 : vector<1x8x32xf32>, vector<1x8x32xf32> -> vector<1x8x64xf32>
    %609 = tpu.concatenate %605, %605 in 2 : vector<1x8x8xf32>, vector<1x8x8xf32> -> vector<1x8x16xf32>
    %610 = tpu.concatenate %609, %609 in 2 : vector<1x8x16xf32>, vector<1x8x16xf32> -> vector<1x8x32xf32>
    %611 = tpu.concatenate %610, %610 in 2 : vector<1x8x32xf32>, vector<1x8x32xf32> -> vector<1x8x64xf32>
    %c58 = arith.constant 58 : index
    %c0_302 = arith.constant 0 : index
    %612 = vector.load %arg2[%c58, %c0_302] : memref<98x64xf32, #tpu.memory_space<vmem>>, vector<1x64xf32>
    %c59 = arith.constant 59 : index
    %c0_303 = arith.constant 0 : index
    %613 = vector.load %arg2[%c59, %c0_303] : memref<98x64xf32, #tpu.memory_space<vmem>>, vector<1x64xf32>
    %614 = vector.shape_cast %612 : vector<1x64xf32> to vector<1x1x64xf32>
    %615 = vector.broadcast %614 : vector<1x1x64xf32> to vector<1x8x64xf32>
    %616 = arith.mulf %608, %615 : vector<1x8x64xf32>
    %617 = arith.addf %601, %616 : vector<1x8x64xf32>
    %618 = vector.shape_cast %613 : vector<1x64xf32> to vector<1x1x64xf32>
    %619 = vector.broadcast %618 : vector<1x1x64xf32> to vector<1x8x64xf32>
    %620 = arith.mulf %611, %619 : vector<1x8x64xf32>
    %621 = arith.addf %617, %620 : vector<1x8x64xf32>
    %c0_304 = arith.constant 0 : index
    %c0_305 = arith.constant 0 : index
    %c2_306 = arith.constant 2 : index
    %c1_307 = arith.constant 1 : index
    %622 = vector.load %arg1[%c0_304, %c0_305, %c2_306, %c1_307] : memref<1x8x11x11xf32, #tpu.memory_space<vmem>>, vector<1x1x8x8xf32>
    %623 = vector.shape_cast %622 : vector<1x1x8x8xf32> to vector<1x8x8xf32>
    %c0_308 = arith.constant 0 : index
    %c4_309 = arith.constant 4 : index
    %c2_310 = arith.constant 2 : index
    %c1_311 = arith.constant 1 : index
    %624 = vector.load %arg1[%c0_308, %c4_309, %c2_310, %c1_311] : memref<1x8x11x11xf32, #tpu.memory_space<vmem>>, vector<1x1x8x8xf32>
    %625 = vector.shape_cast %624 : vector<1x1x8x8xf32> to vector<1x8x8xf32>
    %626 = tpu.concatenate %623, %623 in 2 : vector<1x8x8xf32>, vector<1x8x8xf32> -> vector<1x8x16xf32>
    %627 = tpu.concatenate %626, %626 in 2 : vector<1x8x16xf32>, vector<1x8x16xf32> -> vector<1x8x32xf32>
    %628 = tpu.concatenate %627, %627 in 2 : vector<1x8x32xf32>, vector<1x8x32xf32> -> vector<1x8x64xf32>
    %629 = tpu.concatenate %625, %625 in 2 : vector<1x8x8xf32>, vector<1x8x8xf32> -> vector<1x8x16xf32>
    %630 = tpu.concatenate %629, %629 in 2 : vector<1x8x16xf32>, vector<1x8x16xf32> -> vector<1x8x32xf32>
    %631 = tpu.concatenate %630, %630 in 2 : vector<1x8x32xf32>, vector<1x8x32xf32> -> vector<1x8x64xf32>
    %c60 = arith.constant 60 : index
    %c0_312 = arith.constant 0 : index
    %632 = vector.load %arg2[%c60, %c0_312] : memref<98x64xf32, #tpu.memory_space<vmem>>, vector<1x64xf32>
    %c61 = arith.constant 61 : index
    %c0_313 = arith.constant 0 : index
    %633 = vector.load %arg2[%c61, %c0_313] : memref<98x64xf32, #tpu.memory_space<vmem>>, vector<1x64xf32>
    %634 = vector.shape_cast %632 : vector<1x64xf32> to vector<1x1x64xf32>
    %635 = vector.broadcast %634 : vector<1x1x64xf32> to vector<1x8x64xf32>
    %636 = arith.mulf %628, %635 : vector<1x8x64xf32>
    %637 = arith.addf %621, %636 : vector<1x8x64xf32>
    %638 = vector.shape_cast %633 : vector<1x64xf32> to vector<1x1x64xf32>
    %639 = vector.broadcast %638 : vector<1x1x64xf32> to vector<1x8x64xf32>
    %640 = arith.mulf %631, %639 : vector<1x8x64xf32>
    %641 = arith.addf %637, %640 : vector<1x8x64xf32>
    %c0_314 = arith.constant 0 : index
    %c1_315 = arith.constant 1 : index
    %c2_316 = arith.constant 2 : index
    %c1_317 = arith.constant 1 : index
    %642 = vector.load %arg1[%c0_314, %c1_315, %c2_316, %c1_317] : memref<1x8x11x11xf32, #tpu.memory_space<vmem>>, vector<1x1x8x8xf32>
    %643 = vector.shape_cast %642 : vector<1x1x8x8xf32> to vector<1x8x8xf32>
    %c0_318 = arith.constant 0 : index
    %c5_319 = arith.constant 5 : index
    %c2_320 = arith.constant 2 : index
    %c1_321 = arith.constant 1 : index
    %644 = vector.load %arg1[%c0_318, %c5_319, %c2_320, %c1_321] : memref<1x8x11x11xf32, #tpu.memory_space<vmem>>, vector<1x1x8x8xf32>
    %645 = vector.shape_cast %644 : vector<1x1x8x8xf32> to vector<1x8x8xf32>
    %646 = tpu.concatenate %643, %643 in 2 : vector<1x8x8xf32>, vector<1x8x8xf32> -> vector<1x8x16xf32>
    %647 = tpu.concatenate %646, %646 in 2 : vector<1x8x16xf32>, vector<1x8x16xf32> -> vector<1x8x32xf32>
    %648 = tpu.concatenate %647, %647 in 2 : vector<1x8x32xf32>, vector<1x8x32xf32> -> vector<1x8x64xf32>
    %649 = tpu.concatenate %645, %645 in 2 : vector<1x8x8xf32>, vector<1x8x8xf32> -> vector<1x8x16xf32>
    %650 = tpu.concatenate %649, %649 in 2 : vector<1x8x16xf32>, vector<1x8x16xf32> -> vector<1x8x32xf32>
    %651 = tpu.concatenate %650, %650 in 2 : vector<1x8x32xf32>, vector<1x8x32xf32> -> vector<1x8x64xf32>
    %c62 = arith.constant 62 : index
    %c0_322 = arith.constant 0 : index
    %652 = vector.load %arg2[%c62, %c0_322] : memref<98x64xf32, #tpu.memory_space<vmem>>, vector<1x64xf32>
    %c63 = arith.constant 63 : index
    %c0_323 = arith.constant 0 : index
    %653 = vector.load %arg2[%c63, %c0_323] : memref<98x64xf32, #tpu.memory_space<vmem>>, vector<1x64xf32>
    %654 = vector.shape_cast %652 : vector<1x64xf32> to vector<1x1x64xf32>
    %655 = vector.broadcast %654 : vector<1x1x64xf32> to vector<1x8x64xf32>
    %656 = arith.mulf %648, %655 : vector<1x8x64xf32>
    %657 = arith.addf %641, %656 : vector<1x8x64xf32>
    %658 = vector.shape_cast %653 : vector<1x64xf32> to vector<1x1x64xf32>
    %659 = vector.broadcast %658 : vector<1x1x64xf32> to vector<1x8x64xf32>
    %660 = arith.mulf %651, %659 : vector<1x8x64xf32>
    %661 = arith.addf %657, %660 : vector<1x8x64xf32>
    %c0_324 = arith.constant 0 : index
    %c0_325 = arith.constant 0 : index
    %c2_326 = arith.constant 2 : index
    %c2_327 = arith.constant 2 : index
    %662 = vector.load %arg1[%c0_324, %c0_325, %c2_326, %c2_327] : memref<1x8x11x11xf32, #tpu.memory_space<vmem>>, vector<1x1x8x8xf32>
    %663 = vector.shape_cast %662 : vector<1x1x8x8xf32> to vector<1x8x8xf32>
    %c0_328 = arith.constant 0 : index
    %c4_329 = arith.constant 4 : index
    %c2_330 = arith.constant 2 : index
    %c2_331 = arith.constant 2 : index
    %664 = vector.load %arg1[%c0_328, %c4_329, %c2_330, %c2_331] : memref<1x8x11x11xf32, #tpu.memory_space<vmem>>, vector<1x1x8x8xf32>
    %665 = vector.shape_cast %664 : vector<1x1x8x8xf32> to vector<1x8x8xf32>
    %666 = tpu.concatenate %663, %663 in 2 : vector<1x8x8xf32>, vector<1x8x8xf32> -> vector<1x8x16xf32>
    %667 = tpu.concatenate %666, %666 in 2 : vector<1x8x16xf32>, vector<1x8x16xf32> -> vector<1x8x32xf32>
    %668 = tpu.concatenate %667, %667 in 2 : vector<1x8x32xf32>, vector<1x8x32xf32> -> vector<1x8x64xf32>
    %669 = tpu.concatenate %665, %665 in 2 : vector<1x8x8xf32>, vector<1x8x8xf32> -> vector<1x8x16xf32>
    %670 = tpu.concatenate %669, %669 in 2 : vector<1x8x16xf32>, vector<1x8x16xf32> -> vector<1x8x32xf32>
    %671 = tpu.concatenate %670, %670 in 2 : vector<1x8x32xf32>, vector<1x8x32xf32> -> vector<1x8x64xf32>
    %c64 = arith.constant 64 : index
    %c0_332 = arith.constant 0 : index
    %672 = vector.load %arg2[%c64, %c0_332] : memref<98x64xf32, #tpu.memory_space<vmem>>, vector<1x64xf32>
    %c65 = arith.constant 65 : index
    %c0_333 = arith.constant 0 : index
    %673 = vector.load %arg2[%c65, %c0_333] : memref<98x64xf32, #tpu.memory_space<vmem>>, vector<1x64xf32>
    %674 = vector.shape_cast %672 : vector<1x64xf32> to vector<1x1x64xf32>
    %675 = vector.broadcast %674 : vector<1x1x64xf32> to vector<1x8x64xf32>
    %676 = arith.mulf %668, %675 : vector<1x8x64xf32>
    %677 = arith.addf %661, %676 : vector<1x8x64xf32>
    %678 = vector.shape_cast %673 : vector<1x64xf32> to vector<1x1x64xf32>
    %679 = vector.broadcast %678 : vector<1x1x64xf32> to vector<1x8x64xf32>
    %680 = arith.mulf %671, %679 : vector<1x8x64xf32>
    %681 = arith.addf %677, %680 : vector<1x8x64xf32>
    %c0_334 = arith.constant 0 : index
    %c1_335 = arith.constant 1 : index
    %c2_336 = arith.constant 2 : index
    %c2_337 = arith.constant 2 : index
    %682 = vector.load %arg1[%c0_334, %c1_335, %c2_336, %c2_337] : memref<1x8x11x11xf32, #tpu.memory_space<vmem>>, vector<1x1x8x8xf32>
    %683 = vector.shape_cast %682 : vector<1x1x8x8xf32> to vector<1x8x8xf32>
    %c0_338 = arith.constant 0 : index
    %c5_339 = arith.constant 5 : index
    %c2_340 = arith.constant 2 : index
    %c2_341 = arith.constant 2 : index
    %684 = vector.load %arg1[%c0_338, %c5_339, %c2_340, %c2_341] : memref<1x8x11x11xf32, #tpu.memory_space<vmem>>, vector<1x1x8x8xf32>
    %685 = vector.shape_cast %684 : vector<1x1x8x8xf32> to vector<1x8x8xf32>
    %686 = tpu.concatenate %683, %683 in 2 : vector<1x8x8xf32>, vector<1x8x8xf32> -> vector<1x8x16xf32>
    %687 = tpu.concatenate %686, %686 in 2 : vector<1x8x16xf32>, vector<1x8x16xf32> -> vector<1x8x32xf32>
    %688 = tpu.concatenate %687, %687 in 2 : vector<1x8x32xf32>, vector<1x8x32xf32> -> vector<1x8x64xf32>
    %689 = tpu.concatenate %685, %685 in 2 : vector<1x8x8xf32>, vector<1x8x8xf32> -> vector<1x8x16xf32>
    %690 = tpu.concatenate %689, %689 in 2 : vector<1x8x16xf32>, vector<1x8x16xf32> -> vector<1x8x32xf32>
    %691 = tpu.concatenate %690, %690 in 2 : vector<1x8x32xf32>, vector<1x8x32xf32> -> vector<1x8x64xf32>
    %c66 = arith.constant 66 : index
    %c0_342 = arith.constant 0 : index
    %692 = vector.load %arg2[%c66, %c0_342] : memref<98x64xf32, #tpu.memory_space<vmem>>, vector<1x64xf32>
    %c67 = arith.constant 67 : index
    %c0_343 = arith.constant 0 : index
    %693 = vector.load %arg2[%c67, %c0_343] : memref<98x64xf32, #tpu.memory_space<vmem>>, vector<1x64xf32>
    %694 = vector.shape_cast %692 : vector<1x64xf32> to vector<1x1x64xf32>
    %695 = vector.broadcast %694 : vector<1x1x64xf32> to vector<1x8x64xf32>
    %696 = arith.mulf %688, %695 : vector<1x8x64xf32>
    %697 = arith.addf %681, %696 : vector<1x8x64xf32>
    %698 = vector.shape_cast %693 : vector<1x64xf32> to vector<1x1x64xf32>
    %699 = vector.broadcast %698 : vector<1x1x64xf32> to vector<1x8x64xf32>
    %700 = arith.mulf %691, %699 : vector<1x8x64xf32>
    %701 = arith.addf %697, %700 : vector<1x8x64xf32>
    %c0_344 = arith.constant 0 : index
    %c0_345 = arith.constant 0 : index
    %c2_346 = arith.constant 2 : index
    %c3_347 = arith.constant 3 : index
    %702 = vector.load %arg1[%c0_344, %c0_345, %c2_346, %c3_347] : memref<1x8x11x11xf32, #tpu.memory_space<vmem>>, vector<1x1x8x8xf32>
    %703 = vector.shape_cast %702 : vector<1x1x8x8xf32> to vector<1x8x8xf32>
    %c0_348 = arith.constant 0 : index
    %c4_349 = arith.constant 4 : index
    %c2_350 = arith.constant 2 : index
    %c3_351 = arith.constant 3 : index
    %704 = vector.load %arg1[%c0_348, %c4_349, %c2_350, %c3_351] : memref<1x8x11x11xf32, #tpu.memory_space<vmem>>, vector<1x1x8x8xf32>
    %705 = vector.shape_cast %704 : vector<1x1x8x8xf32> to vector<1x8x8xf32>
    %706 = tpu.concatenate %703, %703 in 2 : vector<1x8x8xf32>, vector<1x8x8xf32> -> vector<1x8x16xf32>
    %707 = tpu.concatenate %706, %706 in 2 : vector<1x8x16xf32>, vector<1x8x16xf32> -> vector<1x8x32xf32>
    %708 = tpu.concatenate %707, %707 in 2 : vector<1x8x32xf32>, vector<1x8x32xf32> -> vector<1x8x64xf32>
    %709 = tpu.concatenate %705, %705 in 2 : vector<1x8x8xf32>, vector<1x8x8xf32> -> vector<1x8x16xf32>
    %710 = tpu.concatenate %709, %709 in 2 : vector<1x8x16xf32>, vector<1x8x16xf32> -> vector<1x8x32xf32>
    %711 = tpu.concatenate %710, %710 in 2 : vector<1x8x32xf32>, vector<1x8x32xf32> -> vector<1x8x64xf32>
    %c68 = arith.constant 68 : index
    %c0_352 = arith.constant 0 : index
    %712 = vector.load %arg2[%c68, %c0_352] : memref<98x64xf32, #tpu.memory_space<vmem>>, vector<1x64xf32>
    %c69 = arith.constant 69 : index
    %c0_353 = arith.constant 0 : index
    %713 = vector.load %arg2[%c69, %c0_353] : memref<98x64xf32, #tpu.memory_space<vmem>>, vector<1x64xf32>
    %714 = vector.shape_cast %712 : vector<1x64xf32> to vector<1x1x64xf32>
    %715 = vector.broadcast %714 : vector<1x1x64xf32> to vector<1x8x64xf32>
    %716 = arith.mulf %708, %715 : vector<1x8x64xf32>
    %717 = arith.addf %701, %716 : vector<1x8x64xf32>
    %718 = vector.shape_cast %713 : vector<1x64xf32> to vector<1x1x64xf32>
    %719 = vector.broadcast %718 : vector<1x1x64xf32> to vector<1x8x64xf32>
    %720 = arith.mulf %711, %719 : vector<1x8x64xf32>
    %721 = arith.addf %717, %720 : vector<1x8x64xf32>
    %c0_354 = arith.constant 0 : index
    %c2_355 = arith.constant 2 : index
    %c2_356 = arith.constant 2 : index
    %c0_357 = arith.constant 0 : index
    %722 = vector.load %arg1[%c0_354, %c2_355, %c2_356, %c0_357] : memref<1x8x11x11xf32, #tpu.memory_space<vmem>>, vector<1x1x8x8xf32>
    %723 = vector.shape_cast %722 : vector<1x1x8x8xf32> to vector<1x8x8xf32>
    %c0_358 = arith.constant 0 : index
    %c6_359 = arith.constant 6 : index
    %c2_360 = arith.constant 2 : index
    %c0_361 = arith.constant 0 : index
    %724 = vector.load %arg1[%c0_358, %c6_359, %c2_360, %c0_361] : memref<1x8x11x11xf32, #tpu.memory_space<vmem>>, vector<1x1x8x8xf32>
    %725 = vector.shape_cast %724 : vector<1x1x8x8xf32> to vector<1x8x8xf32>
    %726 = tpu.concatenate %723, %723 in 2 : vector<1x8x8xf32>, vector<1x8x8xf32> -> vector<1x8x16xf32>
    %727 = tpu.concatenate %726, %726 in 2 : vector<1x8x16xf32>, vector<1x8x16xf32> -> vector<1x8x32xf32>
    %728 = tpu.concatenate %727, %727 in 2 : vector<1x8x32xf32>, vector<1x8x32xf32> -> vector<1x8x64xf32>
    %729 = tpu.concatenate %725, %725 in 2 : vector<1x8x8xf32>, vector<1x8x8xf32> -> vector<1x8x16xf32>
    %730 = tpu.concatenate %729, %729 in 2 : vector<1x8x16xf32>, vector<1x8x16xf32> -> vector<1x8x32xf32>
    %731 = tpu.concatenate %730, %730 in 2 : vector<1x8x32xf32>, vector<1x8x32xf32> -> vector<1x8x64xf32>
    %c70 = arith.constant 70 : index
    %c0_362 = arith.constant 0 : index
    %732 = vector.load %arg2[%c70, %c0_362] : memref<98x64xf32, #tpu.memory_space<vmem>>, vector<1x64xf32>
    %c71 = arith.constant 71 : index
    %c0_363 = arith.constant 0 : index
    %733 = vector.load %arg2[%c71, %c0_363] : memref<98x64xf32, #tpu.memory_space<vmem>>, vector<1x64xf32>
    %734 = vector.shape_cast %732 : vector<1x64xf32> to vector<1x1x64xf32>
    %735 = vector.broadcast %734 : vector<1x1x64xf32> to vector<1x8x64xf32>
    %736 = arith.mulf %728, %735 : vector<1x8x64xf32>
    %737 = arith.addf %721, %736 : vector<1x8x64xf32>
    %738 = vector.shape_cast %733 : vector<1x64xf32> to vector<1x1x64xf32>
    %739 = vector.broadcast %738 : vector<1x1x64xf32> to vector<1x8x64xf32>
    %740 = arith.mulf %731, %739 : vector<1x8x64xf32>
    %741 = arith.addf %737, %740 : vector<1x8x64xf32>
    %c0_364 = arith.constant 0 : index
    %c3_365 = arith.constant 3 : index
    %c2_366 = arith.constant 2 : index
    %c0_367 = arith.constant 0 : index
    %742 = vector.load %arg1[%c0_364, %c3_365, %c2_366, %c0_367] : memref<1x8x11x11xf32, #tpu.memory_space<vmem>>, vector<1x1x8x8xf32>
    %743 = vector.shape_cast %742 : vector<1x1x8x8xf32> to vector<1x8x8xf32>
    %c0_368 = arith.constant 0 : index
    %c7_369 = arith.constant 7 : index
    %c2_370 = arith.constant 2 : index
    %c0_371 = arith.constant 0 : index
    %744 = vector.load %arg1[%c0_368, %c7_369, %c2_370, %c0_371] : memref<1x8x11x11xf32, #tpu.memory_space<vmem>>, vector<1x1x8x8xf32>
    %745 = vector.shape_cast %744 : vector<1x1x8x8xf32> to vector<1x8x8xf32>
    %746 = tpu.concatenate %743, %743 in 2 : vector<1x8x8xf32>, vector<1x8x8xf32> -> vector<1x8x16xf32>
    %747 = tpu.concatenate %746, %746 in 2 : vector<1x8x16xf32>, vector<1x8x16xf32> -> vector<1x8x32xf32>
    %748 = tpu.concatenate %747, %747 in 2 : vector<1x8x32xf32>, vector<1x8x32xf32> -> vector<1x8x64xf32>
    %749 = tpu.concatenate %745, %745 in 2 : vector<1x8x8xf32>, vector<1x8x8xf32> -> vector<1x8x16xf32>
    %750 = tpu.concatenate %749, %749 in 2 : vector<1x8x16xf32>, vector<1x8x16xf32> -> vector<1x8x32xf32>
    %751 = tpu.concatenate %750, %750 in 2 : vector<1x8x32xf32>, vector<1x8x32xf32> -> vector<1x8x64xf32>
    %c72 = arith.constant 72 : index
    %c0_372 = arith.constant 0 : index
    %752 = vector.load %arg2[%c72, %c0_372] : memref<98x64xf32, #tpu.memory_space<vmem>>, vector<1x64xf32>
    %c73 = arith.constant 73 : index
    %c0_373 = arith.constant 0 : index
    %753 = vector.load %arg2[%c73, %c0_373] : memref<98x64xf32, #tpu.memory_space<vmem>>, vector<1x64xf32>
    %754 = vector.shape_cast %752 : vector<1x64xf32> to vector<1x1x64xf32>
    %755 = vector.broadcast %754 : vector<1x1x64xf32> to vector<1x8x64xf32>
    %756 = arith.mulf %748, %755 : vector<1x8x64xf32>
    %757 = arith.addf %741, %756 : vector<1x8x64xf32>
    %758 = vector.shape_cast %753 : vector<1x64xf32> to vector<1x1x64xf32>
    %759 = vector.broadcast %758 : vector<1x1x64xf32> to vector<1x8x64xf32>
    %760 = arith.mulf %751, %759 : vector<1x8x64xf32>
    %761 = arith.addf %757, %760 : vector<1x8x64xf32>
    %c0_374 = arith.constant 0 : index
    %c2_375 = arith.constant 2 : index
    %c2_376 = arith.constant 2 : index
    %c1_377 = arith.constant 1 : index
    %762 = vector.load %arg1[%c0_374, %c2_375, %c2_376, %c1_377] : memref<1x8x11x11xf32, #tpu.memory_space<vmem>>, vector<1x1x8x8xf32>
    %763 = vector.shape_cast %762 : vector<1x1x8x8xf32> to vector<1x8x8xf32>
    %c0_378 = arith.constant 0 : index
    %c6_379 = arith.constant 6 : index
    %c2_380 = arith.constant 2 : index
    %c1_381 = arith.constant 1 : index
    %764 = vector.load %arg1[%c0_378, %c6_379, %c2_380, %c1_381] : memref<1x8x11x11xf32, #tpu.memory_space<vmem>>, vector<1x1x8x8xf32>
    %765 = vector.shape_cast %764 : vector<1x1x8x8xf32> to vector<1x8x8xf32>
    %766 = tpu.concatenate %763, %763 in 2 : vector<1x8x8xf32>, vector<1x8x8xf32> -> vector<1x8x16xf32>
    %767 = tpu.concatenate %766, %766 in 2 : vector<1x8x16xf32>, vector<1x8x16xf32> -> vector<1x8x32xf32>
    %768 = tpu.concatenate %767, %767 in 2 : vector<1x8x32xf32>, vector<1x8x32xf32> -> vector<1x8x64xf32>
    %769 = tpu.concatenate %765, %765 in 2 : vector<1x8x8xf32>, vector<1x8x8xf32> -> vector<1x8x16xf32>
    %770 = tpu.concatenate %769, %769 in 2 : vector<1x8x16xf32>, vector<1x8x16xf32> -> vector<1x8x32xf32>
    %771 = tpu.concatenate %770, %770 in 2 : vector<1x8x32xf32>, vector<1x8x32xf32> -> vector<1x8x64xf32>
    %c74 = arith.constant 74 : index
    %c0_382 = arith.constant 0 : index
    %772 = vector.load %arg2[%c74, %c0_382] : memref<98x64xf32, #tpu.memory_space<vmem>>, vector<1x64xf32>
    %c75 = arith.constant 75 : index
    %c0_383 = arith.constant 0 : index
    %773 = vector.load %arg2[%c75, %c0_383] : memref<98x64xf32, #tpu.memory_space<vmem>>, vector<1x64xf32>
    %774 = vector.shape_cast %772 : vector<1x64xf32> to vector<1x1x64xf32>
    %775 = vector.broadcast %774 : vector<1x1x64xf32> to vector<1x8x64xf32>
    %776 = arith.mulf %768, %775 : vector<1x8x64xf32>
    %777 = arith.addf %761, %776 : vector<1x8x64xf32>
    %778 = vector.shape_cast %773 : vector<1x64xf32> to vector<1x1x64xf32>
    %779 = vector.broadcast %778 : vector<1x1x64xf32> to vector<1x8x64xf32>
    %780 = arith.mulf %771, %779 : vector<1x8x64xf32>
    %781 = arith.addf %777, %780 : vector<1x8x64xf32>
    %c0_384 = arith.constant 0 : index
    %c3_385 = arith.constant 3 : index
    %c2_386 = arith.constant 2 : index
    %c1_387 = arith.constant 1 : index
    %782 = vector.load %arg1[%c0_384, %c3_385, %c2_386, %c1_387] : memref<1x8x11x11xf32, #tpu.memory_space<vmem>>, vector<1x1x8x8xf32>
    %783 = vector.shape_cast %782 : vector<1x1x8x8xf32> to vector<1x8x8xf32>
    %c0_388 = arith.constant 0 : index
    %c7_389 = arith.constant 7 : index
    %c2_390 = arith.constant 2 : index
    %c1_391 = arith.constant 1 : index
    %784 = vector.load %arg1[%c0_388, %c7_389, %c2_390, %c1_391] : memref<1x8x11x11xf32, #tpu.memory_space<vmem>>, vector<1x1x8x8xf32>
    %785 = vector.shape_cast %784 : vector<1x1x8x8xf32> to vector<1x8x8xf32>
    %786 = tpu.concatenate %783, %783 in 2 : vector<1x8x8xf32>, vector<1x8x8xf32> -> vector<1x8x16xf32>
    %787 = tpu.concatenate %786, %786 in 2 : vector<1x8x16xf32>, vector<1x8x16xf32> -> vector<1x8x32xf32>
    %788 = tpu.concatenate %787, %787 in 2 : vector<1x8x32xf32>, vector<1x8x32xf32> -> vector<1x8x64xf32>
    %789 = tpu.concatenate %785, %785 in 2 : vector<1x8x8xf32>, vector<1x8x8xf32> -> vector<1x8x16xf32>
    %790 = tpu.concatenate %789, %789 in 2 : vector<1x8x16xf32>, vector<1x8x16xf32> -> vector<1x8x32xf32>
    %791 = tpu.concatenate %790, %790 in 2 : vector<1x8x32xf32>, vector<1x8x32xf32> -> vector<1x8x64xf32>
    %c76 = arith.constant 76 : index
    %c0_392 = arith.constant 0 : index
    %792 = vector.load %arg2[%c76, %c0_392] : memref<98x64xf32, #tpu.memory_space<vmem>>, vector<1x64xf32>
    %c77 = arith.constant 77 : index
    %c0_393 = arith.constant 0 : index
    %793 = vector.load %arg2[%c77, %c0_393] : memref<98x64xf32, #tpu.memory_space<vmem>>, vector<1x64xf32>
    %794 = vector.shape_cast %792 : vector<1x64xf32> to vector<1x1x64xf32>
    %795 = vector.broadcast %794 : vector<1x1x64xf32> to vector<1x8x64xf32>
    %796 = arith.mulf %788, %795 : vector<1x8x64xf32>
    %797 = arith.addf %781, %796 : vector<1x8x64xf32>
    %798 = vector.shape_cast %793 : vector<1x64xf32> to vector<1x1x64xf32>
    %799 = vector.broadcast %798 : vector<1x1x64xf32> to vector<1x8x64xf32>
    %800 = arith.mulf %791, %799 : vector<1x8x64xf32>
    %801 = arith.addf %797, %800 : vector<1x8x64xf32>
    %c0_394 = arith.constant 0 : index
    %c2_395 = arith.constant 2 : index
    %c2_396 = arith.constant 2 : index
    %c2_397 = arith.constant 2 : index
    %802 = vector.load %arg1[%c0_394, %c2_395, %c2_396, %c2_397] : memref<1x8x11x11xf32, #tpu.memory_space<vmem>>, vector<1x1x8x8xf32>
    %803 = vector.shape_cast %802 : vector<1x1x8x8xf32> to vector<1x8x8xf32>
    %c0_398 = arith.constant 0 : index
    %c6_399 = arith.constant 6 : index
    %c2_400 = arith.constant 2 : index
    %c2_401 = arith.constant 2 : index
    %804 = vector.load %arg1[%c0_398, %c6_399, %c2_400, %c2_401] : memref<1x8x11x11xf32, #tpu.memory_space<vmem>>, vector<1x1x8x8xf32>
    %805 = vector.shape_cast %804 : vector<1x1x8x8xf32> to vector<1x8x8xf32>
    %806 = tpu.concatenate %803, %803 in 2 : vector<1x8x8xf32>, vector<1x8x8xf32> -> vector<1x8x16xf32>
    %807 = tpu.concatenate %806, %806 in 2 : vector<1x8x16xf32>, vector<1x8x16xf32> -> vector<1x8x32xf32>
    %808 = tpu.concatenate %807, %807 in 2 : vector<1x8x32xf32>, vector<1x8x32xf32> -> vector<1x8x64xf32>
    %809 = tpu.concatenate %805, %805 in 2 : vector<1x8x8xf32>, vector<1x8x8xf32> -> vector<1x8x16xf32>
    %810 = tpu.concatenate %809, %809 in 2 : vector<1x8x16xf32>, vector<1x8x16xf32> -> vector<1x8x32xf32>
    %811 = tpu.concatenate %810, %810 in 2 : vector<1x8x32xf32>, vector<1x8x32xf32> -> vector<1x8x64xf32>
    %c78 = arith.constant 78 : index
    %c0_402 = arith.constant 0 : index
    %812 = vector.load %arg2[%c78, %c0_402] : memref<98x64xf32, #tpu.memory_space<vmem>>, vector<1x64xf32>
    %c79 = arith.constant 79 : index
    %c0_403 = arith.constant 0 : index
    %813 = vector.load %arg2[%c79, %c0_403] : memref<98x64xf32, #tpu.memory_space<vmem>>, vector<1x64xf32>
    %814 = vector.shape_cast %812 : vector<1x64xf32> to vector<1x1x64xf32>
    %815 = vector.broadcast %814 : vector<1x1x64xf32> to vector<1x8x64xf32>
    %816 = arith.mulf %808, %815 : vector<1x8x64xf32>
    %817 = arith.addf %801, %816 : vector<1x8x64xf32>
    %818 = vector.shape_cast %813 : vector<1x64xf32> to vector<1x1x64xf32>
    %819 = vector.broadcast %818 : vector<1x1x64xf32> to vector<1x8x64xf32>
    %820 = arith.mulf %811, %819 : vector<1x8x64xf32>
    %821 = arith.addf %817, %820 : vector<1x8x64xf32>
    %c0_404 = arith.constant 0 : index
    %c3_405 = arith.constant 3 : index
    %c2_406 = arith.constant 2 : index
    %c2_407 = arith.constant 2 : index
    %822 = vector.load %arg1[%c0_404, %c3_405, %c2_406, %c2_407] : memref<1x8x11x11xf32, #tpu.memory_space<vmem>>, vector<1x1x8x8xf32>
    %823 = vector.shape_cast %822 : vector<1x1x8x8xf32> to vector<1x8x8xf32>
    %c0_408 = arith.constant 0 : index
    %c7_409 = arith.constant 7 : index
    %c2_410 = arith.constant 2 : index
    %c2_411 = arith.constant 2 : index
    %824 = vector.load %arg1[%c0_408, %c7_409, %c2_410, %c2_411] : memref<1x8x11x11xf32, #tpu.memory_space<vmem>>, vector<1x1x8x8xf32>
    %825 = vector.shape_cast %824 : vector<1x1x8x8xf32> to vector<1x8x8xf32>
    %826 = tpu.concatenate %823, %823 in 2 : vector<1x8x8xf32>, vector<1x8x8xf32> -> vector<1x8x16xf32>
    %827 = tpu.concatenate %826, %826 in 2 : vector<1x8x16xf32>, vector<1x8x16xf32> -> vector<1x8x32xf32>
    %828 = tpu.concatenate %827, %827 in 2 : vector<1x8x32xf32>, vector<1x8x32xf32> -> vector<1x8x64xf32>
    %829 = tpu.concatenate %825, %825 in 2 : vector<1x8x8xf32>, vector<1x8x8xf32> -> vector<1x8x16xf32>
    %830 = tpu.concatenate %829, %829 in 2 : vector<1x8x16xf32>, vector<1x8x16xf32> -> vector<1x8x32xf32>
    %831 = tpu.concatenate %830, %830 in 2 : vector<1x8x32xf32>, vector<1x8x32xf32> -> vector<1x8x64xf32>
    %c80 = arith.constant 80 : index
    %c0_412 = arith.constant 0 : index
    %832 = vector.load %arg2[%c80, %c0_412] : memref<98x64xf32, #tpu.memory_space<vmem>>, vector<1x64xf32>
    %c81 = arith.constant 81 : index
    %c0_413 = arith.constant 0 : index
    %833 = vector.load %arg2[%c81, %c0_413] : memref<98x64xf32, #tpu.memory_space<vmem>>, vector<1x64xf32>
    %834 = vector.shape_cast %832 : vector<1x64xf32> to vector<1x1x64xf32>
    %835 = vector.broadcast %834 : vector<1x1x64xf32> to vector<1x8x64xf32>
    %836 = arith.mulf %828, %835 : vector<1x8x64xf32>
    %837 = arith.addf %821, %836 : vector<1x8x64xf32>
    %838 = vector.shape_cast %833 : vector<1x64xf32> to vector<1x1x64xf32>
    %839 = vector.broadcast %838 : vector<1x1x64xf32> to vector<1x8x64xf32>
    %840 = arith.mulf %831, %839 : vector<1x8x64xf32>
    %841 = arith.addf %837, %840 : vector<1x8x64xf32>
    %c0_414 = arith.constant 0 : index
    %c2_415 = arith.constant 2 : index
    %c2_416 = arith.constant 2 : index
    %c3_417 = arith.constant 3 : index
    %842 = vector.load %arg1[%c0_414, %c2_415, %c2_416, %c3_417] : memref<1x8x11x11xf32, #tpu.memory_space<vmem>>, vector<1x1x8x8xf32>
    %843 = vector.shape_cast %842 : vector<1x1x8x8xf32> to vector<1x8x8xf32>
    %c0_418 = arith.constant 0 : index
    %c6_419 = arith.constant 6 : index
    %c2_420 = arith.constant 2 : index
    %c3_421 = arith.constant 3 : index
    %844 = vector.load %arg1[%c0_418, %c6_419, %c2_420, %c3_421] : memref<1x8x11x11xf32, #tpu.memory_space<vmem>>, vector<1x1x8x8xf32>
    %845 = vector.shape_cast %844 : vector<1x1x8x8xf32> to vector<1x8x8xf32>
    %846 = tpu.concatenate %843, %843 in 2 : vector<1x8x8xf32>, vector<1x8x8xf32> -> vector<1x8x16xf32>
    %847 = tpu.concatenate %846, %846 in 2 : vector<1x8x16xf32>, vector<1x8x16xf32> -> vector<1x8x32xf32>
    %848 = tpu.concatenate %847, %847 in 2 : vector<1x8x32xf32>, vector<1x8x32xf32> -> vector<1x8x64xf32>
    %849 = tpu.concatenate %845, %845 in 2 : vector<1x8x8xf32>, vector<1x8x8xf32> -> vector<1x8x16xf32>
    %850 = tpu.concatenate %849, %849 in 2 : vector<1x8x16xf32>, vector<1x8x16xf32> -> vector<1x8x32xf32>
    %851 = tpu.concatenate %850, %850 in 2 : vector<1x8x32xf32>, vector<1x8x32xf32> -> vector<1x8x64xf32>
    %c82 = arith.constant 82 : index
    %c0_422 = arith.constant 0 : index
    %852 = vector.load %arg2[%c82, %c0_422] : memref<98x64xf32, #tpu.memory_space<vmem>>, vector<1x64xf32>
    %c83 = arith.constant 83 : index
    %c0_423 = arith.constant 0 : index
    %853 = vector.load %arg2[%c83, %c0_423] : memref<98x64xf32, #tpu.memory_space<vmem>>, vector<1x64xf32>
    %854 = vector.shape_cast %852 : vector<1x64xf32> to vector<1x1x64xf32>
    %855 = vector.broadcast %854 : vector<1x1x64xf32> to vector<1x8x64xf32>
    %856 = arith.mulf %848, %855 : vector<1x8x64xf32>
    %857 = arith.addf %841, %856 : vector<1x8x64xf32>
    %858 = vector.shape_cast %853 : vector<1x64xf32> to vector<1x1x64xf32>
    %859 = vector.broadcast %858 : vector<1x1x64xf32> to vector<1x8x64xf32>
    %860 = arith.mulf %851, %859 : vector<1x8x64xf32>
    %861 = arith.addf %857, %860 : vector<1x8x64xf32>
    %c0_424 = arith.constant 0 : index
    %c0_425 = arith.constant 0 : index
    %c3_426 = arith.constant 3 : index
    %c0_427 = arith.constant 0 : index
    %862 = vector.load %arg1[%c0_424, %c0_425, %c3_426, %c0_427] : memref<1x8x11x11xf32, #tpu.memory_space<vmem>>, vector<1x1x8x8xf32>
    %863 = vector.shape_cast %862 : vector<1x1x8x8xf32> to vector<1x8x8xf32>
    %c0_428 = arith.constant 0 : index
    %c4_429 = arith.constant 4 : index
    %c3_430 = arith.constant 3 : index
    %c0_431 = arith.constant 0 : index
    %864 = vector.load %arg1[%c0_428, %c4_429, %c3_430, %c0_431] : memref<1x8x11x11xf32, #tpu.memory_space<vmem>>, vector<1x1x8x8xf32>
    %865 = vector.shape_cast %864 : vector<1x1x8x8xf32> to vector<1x8x8xf32>
    %866 = tpu.concatenate %863, %863 in 2 : vector<1x8x8xf32>, vector<1x8x8xf32> -> vector<1x8x16xf32>
    %867 = tpu.concatenate %866, %866 in 2 : vector<1x8x16xf32>, vector<1x8x16xf32> -> vector<1x8x32xf32>
    %868 = tpu.concatenate %867, %867 in 2 : vector<1x8x32xf32>, vector<1x8x32xf32> -> vector<1x8x64xf32>
    %869 = tpu.concatenate %865, %865 in 2 : vector<1x8x8xf32>, vector<1x8x8xf32> -> vector<1x8x16xf32>
    %870 = tpu.concatenate %869, %869 in 2 : vector<1x8x16xf32>, vector<1x8x16xf32> -> vector<1x8x32xf32>
    %871 = tpu.concatenate %870, %870 in 2 : vector<1x8x32xf32>, vector<1x8x32xf32> -> vector<1x8x64xf32>
    %c84 = arith.constant 84 : index
    %c0_432 = arith.constant 0 : index
    %872 = vector.load %arg2[%c84, %c0_432] : memref<98x64xf32, #tpu.memory_space<vmem>>, vector<1x64xf32>
    %c85 = arith.constant 85 : index
    %c0_433 = arith.constant 0 : index
    %873 = vector.load %arg2[%c85, %c0_433] : memref<98x64xf32, #tpu.memory_space<vmem>>, vector<1x64xf32>
    %874 = vector.shape_cast %872 : vector<1x64xf32> to vector<1x1x64xf32>
    %875 = vector.broadcast %874 : vector<1x1x64xf32> to vector<1x8x64xf32>
    %876 = arith.mulf %868, %875 : vector<1x8x64xf32>
    %877 = arith.addf %861, %876 : vector<1x8x64xf32>
    %878 = vector.shape_cast %873 : vector<1x64xf32> to vector<1x1x64xf32>
    %879 = vector.broadcast %878 : vector<1x1x64xf32> to vector<1x8x64xf32>
    %880 = arith.mulf %871, %879 : vector<1x8x64xf32>
    %881 = arith.addf %877, %880 : vector<1x8x64xf32>
    %c0_434 = arith.constant 0 : index
    %c1_435 = arith.constant 1 : index
    %c3_436 = arith.constant 3 : index
    %c0_437 = arith.constant 0 : index
    %882 = vector.load %arg1[%c0_434, %c1_435, %c3_436, %c0_437] : memref<1x8x11x11xf32, #tpu.memory_space<vmem>>, vector<1x1x8x8xf32>
    %883 = vector.shape_cast %882 : vector<1x1x8x8xf32> to vector<1x8x8xf32>
    %c0_438 = arith.constant 0 : index
    %c5_439 = arith.constant 5 : index
    %c3_440 = arith.constant 3 : index
    %c0_441 = arith.constant 0 : index
    %884 = vector.load %arg1[%c0_438, %c5_439, %c3_440, %c0_441] : memref<1x8x11x11xf32, #tpu.memory_space<vmem>>, vector<1x1x8x8xf32>
    %885 = vector.shape_cast %884 : vector<1x1x8x8xf32> to vector<1x8x8xf32>
    %886 = tpu.concatenate %883, %883 in 2 : vector<1x8x8xf32>, vector<1x8x8xf32> -> vector<1x8x16xf32>
    %887 = tpu.concatenate %886, %886 in 2 : vector<1x8x16xf32>, vector<1x8x16xf32> -> vector<1x8x32xf32>
    %888 = tpu.concatenate %887, %887 in 2 : vector<1x8x32xf32>, vector<1x8x32xf32> -> vector<1x8x64xf32>
    %889 = tpu.concatenate %885, %885 in 2 : vector<1x8x8xf32>, vector<1x8x8xf32> -> vector<1x8x16xf32>
    %890 = tpu.concatenate %889, %889 in 2 : vector<1x8x16xf32>, vector<1x8x16xf32> -> vector<1x8x32xf32>
    %891 = tpu.concatenate %890, %890 in 2 : vector<1x8x32xf32>, vector<1x8x32xf32> -> vector<1x8x64xf32>
    %c86 = arith.constant 86 : index
    %c0_442 = arith.constant 0 : index
    %892 = vector.load %arg2[%c86, %c0_442] : memref<98x64xf32, #tpu.memory_space<vmem>>, vector<1x64xf32>
    %c87 = arith.constant 87 : index
    %c0_443 = arith.constant 0 : index
    %893 = vector.load %arg2[%c87, %c0_443] : memref<98x64xf32, #tpu.memory_space<vmem>>, vector<1x64xf32>
    %894 = vector.shape_cast %892 : vector<1x64xf32> to vector<1x1x64xf32>
    %895 = vector.broadcast %894 : vector<1x1x64xf32> to vector<1x8x64xf32>
    %896 = arith.mulf %888, %895 : vector<1x8x64xf32>
    %897 = arith.addf %881, %896 : vector<1x8x64xf32>
    %898 = vector.shape_cast %893 : vector<1x64xf32> to vector<1x1x64xf32>
    %899 = vector.broadcast %898 : vector<1x1x64xf32> to vector<1x8x64xf32>
    %900 = arith.mulf %891, %899 : vector<1x8x64xf32>
    %901 = arith.addf %897, %900 : vector<1x8x64xf32>
    %c0_444 = arith.constant 0 : index
    %c0_445 = arith.constant 0 : index
    %c3_446 = arith.constant 3 : index
    %c1_447 = arith.constant 1 : index
    %902 = vector.load %arg1[%c0_444, %c0_445, %c3_446, %c1_447] : memref<1x8x11x11xf32, #tpu.memory_space<vmem>>, vector<1x1x8x8xf32>
    %903 = vector.shape_cast %902 : vector<1x1x8x8xf32> to vector<1x8x8xf32>
    %c0_448 = arith.constant 0 : index
    %c4_449 = arith.constant 4 : index
    %c3_450 = arith.constant 3 : index
    %c1_451 = arith.constant 1 : index
    %904 = vector.load %arg1[%c0_448, %c4_449, %c3_450, %c1_451] : memref<1x8x11x11xf32, #tpu.memory_space<vmem>>, vector<1x1x8x8xf32>
    %905 = vector.shape_cast %904 : vector<1x1x8x8xf32> to vector<1x8x8xf32>
    %906 = tpu.concatenate %903, %903 in 2 : vector<1x8x8xf32>, vector<1x8x8xf32> -> vector<1x8x16xf32>
    %907 = tpu.concatenate %906, %906 in 2 : vector<1x8x16xf32>, vector<1x8x16xf32> -> vector<1x8x32xf32>
    %908 = tpu.concatenate %907, %907 in 2 : vector<1x8x32xf32>, vector<1x8x32xf32> -> vector<1x8x64xf32>
    %909 = tpu.concatenate %905, %905 in 2 : vector<1x8x8xf32>, vector<1x8x8xf32> -> vector<1x8x16xf32>
    %910 = tpu.concatenate %909, %909 in 2 : vector<1x8x16xf32>, vector<1x8x16xf32> -> vector<1x8x32xf32>
    %911 = tpu.concatenate %910, %910 in 2 : vector<1x8x32xf32>, vector<1x8x32xf32> -> vector<1x8x64xf32>
    %c88 = arith.constant 88 : index
    %c0_452 = arith.constant 0 : index
    %912 = vector.load %arg2[%c88, %c0_452] : memref<98x64xf32, #tpu.memory_space<vmem>>, vector<1x64xf32>
    %c89 = arith.constant 89 : index
    %c0_453 = arith.constant 0 : index
    %913 = vector.load %arg2[%c89, %c0_453] : memref<98x64xf32, #tpu.memory_space<vmem>>, vector<1x64xf32>
    %914 = vector.shape_cast %912 : vector<1x64xf32> to vector<1x1x64xf32>
    %915 = vector.broadcast %914 : vector<1x1x64xf32> to vector<1x8x64xf32>
    %916 = arith.mulf %908, %915 : vector<1x8x64xf32>
    %917 = arith.addf %901, %916 : vector<1x8x64xf32>
    %918 = vector.shape_cast %913 : vector<1x64xf32> to vector<1x1x64xf32>
    %919 = vector.broadcast %918 : vector<1x1x64xf32> to vector<1x8x64xf32>
    %920 = arith.mulf %911, %919 : vector<1x8x64xf32>
    %921 = arith.addf %917, %920 : vector<1x8x64xf32>
    %c0_454 = arith.constant 0 : index
    %c1_455 = arith.constant 1 : index
    %c3_456 = arith.constant 3 : index
    %c1_457 = arith.constant 1 : index
    %922 = vector.load %arg1[%c0_454, %c1_455, %c3_456, %c1_457] : memref<1x8x11x11xf32, #tpu.memory_space<vmem>>, vector<1x1x8x8xf32>
    %923 = vector.shape_cast %922 : vector<1x1x8x8xf32> to vector<1x8x8xf32>
    %c0_458 = arith.constant 0 : index
    %c5_459 = arith.constant 5 : index
    %c3_460 = arith.constant 3 : index
    %c1_461 = arith.constant 1 : index
    %924 = vector.load %arg1[%c0_458, %c5_459, %c3_460, %c1_461] : memref<1x8x11x11xf32, #tpu.memory_space<vmem>>, vector<1x1x8x8xf32>
    %925 = vector.shape_cast %924 : vector<1x1x8x8xf32> to vector<1x8x8xf32>
    %926 = tpu.concatenate %923, %923 in 2 : vector<1x8x8xf32>, vector<1x8x8xf32> -> vector<1x8x16xf32>
    %927 = tpu.concatenate %926, %926 in 2 : vector<1x8x16xf32>, vector<1x8x16xf32> -> vector<1x8x32xf32>
    %928 = tpu.concatenate %927, %927 in 2 : vector<1x8x32xf32>, vector<1x8x32xf32> -> vector<1x8x64xf32>
    %929 = tpu.concatenate %925, %925 in 2 : vector<1x8x8xf32>, vector<1x8x8xf32> -> vector<1x8x16xf32>
    %930 = tpu.concatenate %929, %929 in 2 : vector<1x8x16xf32>, vector<1x8x16xf32> -> vector<1x8x32xf32>
    %931 = tpu.concatenate %930, %930 in 2 : vector<1x8x32xf32>, vector<1x8x32xf32> -> vector<1x8x64xf32>
    %c90 = arith.constant 90 : index
    %c0_462 = arith.constant 0 : index
    %932 = vector.load %arg2[%c90, %c0_462] : memref<98x64xf32, #tpu.memory_space<vmem>>, vector<1x64xf32>
    %c91 = arith.constant 91 : index
    %c0_463 = arith.constant 0 : index
    %933 = vector.load %arg2[%c91, %c0_463] : memref<98x64xf32, #tpu.memory_space<vmem>>, vector<1x64xf32>
    %934 = vector.shape_cast %932 : vector<1x64xf32> to vector<1x1x64xf32>
    %935 = vector.broadcast %934 : vector<1x1x64xf32> to vector<1x8x64xf32>
    %936 = arith.mulf %928, %935 : vector<1x8x64xf32>
    %937 = arith.addf %921, %936 : vector<1x8x64xf32>
    %938 = vector.shape_cast %933 : vector<1x64xf32> to vector<1x1x64xf32>
    %939 = vector.broadcast %938 : vector<1x1x64xf32> to vector<1x8x64xf32>
    %940 = arith.mulf %931, %939 : vector<1x8x64xf32>
    %941 = arith.addf %937, %940 : vector<1x8x64xf32>
    %c0_464 = arith.constant 0 : index
    %c0_465 = arith.constant 0 : index
    %c3_466 = arith.constant 3 : index
    %c2_467 = arith.constant 2 : index
    %942 = vector.load %arg1[%c0_464, %c0_465, %c3_466, %c2_467] : memref<1x8x11x11xf32, #tpu.memory_space<vmem>>, vector<1x1x8x8xf32>
    %943 = vector.shape_cast %942 : vector<1x1x8x8xf32> to vector<1x8x8xf32>
    %c0_468 = arith.constant 0 : index
    %c4_469 = arith.constant 4 : index
    %c3_470 = arith.constant 3 : index
    %c2_471 = arith.constant 2 : index
    %944 = vector.load %arg1[%c0_468, %c4_469, %c3_470, %c2_471] : memref<1x8x11x11xf32, #tpu.memory_space<vmem>>, vector<1x1x8x8xf32>
    %945 = vector.shape_cast %944 : vector<1x1x8x8xf32> to vector<1x8x8xf32>
    %946 = tpu.concatenate %943, %943 in 2 : vector<1x8x8xf32>, vector<1x8x8xf32> -> vector<1x8x16xf32>
    %947 = tpu.concatenate %946, %946 in 2 : vector<1x8x16xf32>, vector<1x8x16xf32> -> vector<1x8x32xf32>
    %948 = tpu.concatenate %947, %947 in 2 : vector<1x8x32xf32>, vector<1x8x32xf32> -> vector<1x8x64xf32>
    %949 = tpu.concatenate %945, %945 in 2 : vector<1x8x8xf32>, vector<1x8x8xf32> -> vector<1x8x16xf32>
    %950 = tpu.concatenate %949, %949 in 2 : vector<1x8x16xf32>, vector<1x8x16xf32> -> vector<1x8x32xf32>
    %951 = tpu.concatenate %950, %950 in 2 : vector<1x8x32xf32>, vector<1x8x32xf32> -> vector<1x8x64xf32>
    %c92 = arith.constant 92 : index
    %c0_472 = arith.constant 0 : index
    %952 = vector.load %arg2[%c92, %c0_472] : memref<98x64xf32, #tpu.memory_space<vmem>>, vector<1x64xf32>
    %c93 = arith.constant 93 : index
    %c0_473 = arith.constant 0 : index
    %953 = vector.load %arg2[%c93, %c0_473] : memref<98x64xf32, #tpu.memory_space<vmem>>, vector<1x64xf32>
    %954 = vector.shape_cast %952 : vector<1x64xf32> to vector<1x1x64xf32>
    %955 = vector.broadcast %954 : vector<1x1x64xf32> to vector<1x8x64xf32>
    %956 = arith.mulf %948, %955 : vector<1x8x64xf32>
    %957 = arith.addf %941, %956 : vector<1x8x64xf32>
    %958 = vector.shape_cast %953 : vector<1x64xf32> to vector<1x1x64xf32>
    %959 = vector.broadcast %958 : vector<1x1x64xf32> to vector<1x8x64xf32>
    %960 = arith.mulf %951, %959 : vector<1x8x64xf32>
    %961 = arith.addf %957, %960 : vector<1x8x64xf32>
    %c0_474 = arith.constant 0 : index
    %c1_475 = arith.constant 1 : index
    %c3_476 = arith.constant 3 : index
    %c2_477 = arith.constant 2 : index
    %962 = vector.load %arg1[%c0_474, %c1_475, %c3_476, %c2_477] : memref<1x8x11x11xf32, #tpu.memory_space<vmem>>, vector<1x1x8x8xf32>
    %963 = vector.shape_cast %962 : vector<1x1x8x8xf32> to vector<1x8x8xf32>
    %c0_478 = arith.constant 0 : index
    %c5_479 = arith.constant 5 : index
    %c3_480 = arith.constant 3 : index
    %c2_481 = arith.constant 2 : index
    %964 = vector.load %arg1[%c0_478, %c5_479, %c3_480, %c2_481] : memref<1x8x11x11xf32, #tpu.memory_space<vmem>>, vector<1x1x8x8xf32>
    %965 = vector.shape_cast %964 : vector<1x1x8x8xf32> to vector<1x8x8xf32>
    %966 = tpu.concatenate %963, %963 in 2 : vector<1x8x8xf32>, vector<1x8x8xf32> -> vector<1x8x16xf32>
    %967 = tpu.concatenate %966, %966 in 2 : vector<1x8x16xf32>, vector<1x8x16xf32> -> vector<1x8x32xf32>
    %968 = tpu.concatenate %967, %967 in 2 : vector<1x8x32xf32>, vector<1x8x32xf32> -> vector<1x8x64xf32>
    %969 = tpu.concatenate %965, %965 in 2 : vector<1x8x8xf32>, vector<1x8x8xf32> -> vector<1x8x16xf32>
    %970 = tpu.concatenate %969, %969 in 2 : vector<1x8x16xf32>, vector<1x8x16xf32> -> vector<1x8x32xf32>
    %971 = tpu.concatenate %970, %970 in 2 : vector<1x8x32xf32>, vector<1x8x32xf32> -> vector<1x8x64xf32>
    %c94 = arith.constant 94 : index
    %c0_482 = arith.constant 0 : index
    %972 = vector.load %arg2[%c94, %c0_482] : memref<98x64xf32, #tpu.memory_space<vmem>>, vector<1x64xf32>
    %c95 = arith.constant 95 : index
    %c0_483 = arith.constant 0 : index
    %973 = vector.load %arg2[%c95, %c0_483] : memref<98x64xf32, #tpu.memory_space<vmem>>, vector<1x64xf32>
    %974 = vector.shape_cast %972 : vector<1x64xf32> to vector<1x1x64xf32>
    %975 = vector.broadcast %974 : vector<1x1x64xf32> to vector<1x8x64xf32>
    %976 = arith.mulf %968, %975 : vector<1x8x64xf32>
    %977 = arith.addf %961, %976 : vector<1x8x64xf32>
    %978 = vector.shape_cast %973 : vector<1x64xf32> to vector<1x1x64xf32>
    %979 = vector.broadcast %978 : vector<1x1x64xf32> to vector<1x8x64xf32>
    %980 = arith.mulf %971, %979 : vector<1x8x64xf32>
    %981 = arith.addf %977, %980 : vector<1x8x64xf32>
    %c0_484 = arith.constant 0 : index
    %c0_485 = arith.constant 0 : index
    %c3_486 = arith.constant 3 : index
    %c3_487 = arith.constant 3 : index
    %982 = vector.load %arg1[%c0_484, %c0_485, %c3_486, %c3_487] : memref<1x8x11x11xf32, #tpu.memory_space<vmem>>, vector<1x1x8x8xf32>
    %983 = vector.shape_cast %982 : vector<1x1x8x8xf32> to vector<1x8x8xf32>
    %c0_488 = arith.constant 0 : index
    %c4_489 = arith.constant 4 : index
    %c3_490 = arith.constant 3 : index
    %c3_491 = arith.constant 3 : index
    %984 = vector.load %arg1[%c0_488, %c4_489, %c3_490, %c3_491] : memref<1x8x11x11xf32, #tpu.memory_space<vmem>>, vector<1x1x8x8xf32>
    %985 = vector.shape_cast %984 : vector<1x1x8x8xf32> to vector<1x8x8xf32>
    %986 = tpu.concatenate %983, %983 in 2 : vector<1x8x8xf32>, vector<1x8x8xf32> -> vector<1x8x16xf32>
    %987 = tpu.concatenate %986, %986 in 2 : vector<1x8x16xf32>, vector<1x8x16xf32> -> vector<1x8x32xf32>
    %988 = tpu.concatenate %987, %987 in 2 : vector<1x8x32xf32>, vector<1x8x32xf32> -> vector<1x8x64xf32>
    %989 = tpu.concatenate %985, %985 in 2 : vector<1x8x8xf32>, vector<1x8x8xf32> -> vector<1x8x16xf32>
    %990 = tpu.concatenate %989, %989 in 2 : vector<1x8x16xf32>, vector<1x8x16xf32> -> vector<1x8x32xf32>
    %991 = tpu.concatenate %990, %990 in 2 : vector<1x8x32xf32>, vector<1x8x32xf32> -> vector<1x8x64xf32>
    %c96 = arith.constant 96 : index
    %c0_492 = arith.constant 0 : index
    %992 = vector.load %arg2[%c96, %c0_492] : memref<98x64xf32, #tpu.memory_space<vmem>>, vector<1x64xf32>
    %c97 = arith.constant 97 : index
    %c0_493 = arith.constant 0 : index
    %993 = vector.load %arg2[%c97, %c0_493] : memref<98x64xf32, #tpu.memory_space<vmem>>, vector<1x64xf32>
    %994 = vector.shape_cast %992 : vector<1x64xf32> to vector<1x1x64xf32>
    %995 = vector.broadcast %994 : vector<1x1x64xf32> to vector<1x8x64xf32>
    %996 = arith.mulf %988, %995 : vector<1x8x64xf32>
    %997 = arith.addf %981, %996 : vector<1x8x64xf32>
    %998 = vector.shape_cast %993 : vector<1x64xf32> to vector<1x1x64xf32>
    %999 = vector.broadcast %998 : vector<1x1x64xf32> to vector<1x8x64xf32>
    %1000 = arith.mulf %991, %999 : vector<1x8x64xf32>
    %1001 = arith.addf %997, %1000 : vector<1x8x64xf32>
    %cst_494 = arith.constant 0xFF800000 : f32
    %1002 = vector.broadcast %cst_494 : f32 to vector<1x8x1xf32>
    %cst_495 = arith.constant 0xFF800000 : f32
    %1003 = vector.broadcast %cst_495 : f32 to vector<1x1x64xf32>
    %cst_496 = arith.constant 0.000000e+00 : f32
    %1004 = vector.broadcast %cst_496 : f32 to vector<1x8x64xf32>
    %1005 = arith.maximumf %1001, %1004 : vector<1x8x64xf32>
    %1006 = tpu.concatenate %1002, %1005, %1002 in 2 : vector<1x8x1xf32>, vector<1x8x64xf32>, vector<1x8x1xf32> -> vector<1x8x66xf32>
    %1007 = vector.extract_strided_slice %1006 {offsets = [0, 0, 0], sizes = [1, 8, 64], strides = [1, 1, 1]} : vector<1x8x66xf32> to vector<1x8x64xf32>
    %cst_497 = arith.constant 0xFF800000 : f32
    %1008 = vector.shape_cast %18 : vector<1x64xi1> to vector<1x1x64xi1>
    %1009 = vector.broadcast %1008 : vector<1x1x64xi1> to vector<1x8x64xi1>
    %1010 = vector.broadcast %cst_497 : f32 to vector<1x8x64xf32>
    %1011 = arith.select %1009, %1010, %1007 : vector<1x8x64xi1>, vector<1x8x64xf32>
    %1012 = vector.extract_strided_slice %1006 {offsets = [0, 0, 2], sizes = [1, 8, 64], strides = [1, 1, 1]} : vector<1x8x66xf32> to vector<1x8x64xf32>
    %cst_498 = arith.constant 0xFF800000 : f32
    %1013 = vector.shape_cast %20 : vector<1x64xi1> to vector<1x1x64xi1>
    %1014 = vector.broadcast %1013 : vector<1x1x64xi1> to vector<1x8x64xi1>
    %1015 = vector.broadcast %cst_498 : f32 to vector<1x8x64xf32>
    %1016 = arith.select %1014, %1015, %1012 : vector<1x8x64xi1>, vector<1x8x64xf32>
    %1017 = arith.maximumf %1005, %1011 : vector<1x8x64xf32>
    %1018 = arith.maximumf %1017, %1016 : vector<1x8x64xf32>
    %1019 = tpu.concatenate %1003, %1018, %1003 in 1 : vector<1x1x64xf32>, vector<1x8x64xf32>, vector<1x1x64xf32> -> vector<1x10x64xf32>
    %1020 = vector.extract_strided_slice %1019 {offsets = [0, 0, 0], sizes = [1, 8, 64], strides = [1, 1, 1]} : vector<1x10x64xf32> to vector<1x8x64xf32>
    %1021 = vector.extract_strided_slice %1019 {offsets = [0, 1, 0], sizes = [1, 8, 64], strides = [1, 1, 1]} : vector<1x10x64xf32> to vector<1x8x64xf32>
    %1022 = arith.maximumf %1020, %1021 : vector<1x8x64xf32>
    %1023 = vector.extract_strided_slice %1019 {offsets = [0, 2, 0], sizes = [1, 8, 64], strides = [1, 1, 1]} : vector<1x10x64xf32> to vector<1x8x64xf32>
    %1024 = arith.maximumf %1022, %1023 : vector<1x8x64xf32>
    %c0_499 = arith.constant 0 : index
    %c0_500 = arith.constant 0 : index
    %c0_501 = arith.constant 0 : index
    %1025 = vector.load %arg3[%c0_499, %c0_500, %c0_501] : memref<1x8x64xf32, #tpu.memory_space<vmem>>, vector<1x8x64xf32>
    tpu.vector_store %arg3[%c0_499, %c0_500, %c0_501], %1024 {strides = array<i32>} : memref<1x8x64xf32, #tpu.memory_space<vmem>>, vector<1x8x64xf32>,
    return
  }
  func.func @transform_0(%arg0: i32) -> (i32, i32, i32, i32) {
    %c0_i32 = arith.constant 0 : i32
    %c0_i32_0 = arith.constant 0 : i32
    %c0_i32_1 = arith.constant 0 : i32
    %c0_i32_2 = arith.constant 0 : i32
    return %arg0, %c0_i32, %c0_i32_0, %c0_i32_1 : i32, i32, i32, i32
  }
  func.func @transform_1(%arg0: i32) -> (i32, i32) {
    %c0_i32 = arith.constant 0 : i32
    %c0_i32_0 = arith.constant 0 : i32
    %c0_i32_1 = arith.constant 0 : i32
    return %c0_i32, %c0_i32_0 : i32, i32
  }
  func.func @transform_2(%arg0: i32) -> (i32, i32, i32) {
    %c0_i32 = arith.constant 0 : i32
    %c0_i32_0 = arith.constant 0 : i32
    %c0_i32_1 = arith.constant 0 : i32
    return %arg0, %c0_i32, %c0_i32_0 : i32, i32, i32
  }
}

</mosaic_0001>

<llo_original>
// kernel: tpu_custom_call.1
$region0: #{tpu_custom_call.1}
  #allocation0 [shape = 'u32[]', space=smem, size = 0x4, offset = 0x4, fixed_abs, tag = 'smem constant byte address 0x4 - core index']
  #allocation1 [shape = 'u32[72,128]{1,0:T(1,128)}', space=vmem, size = 0x9000, scoped, tag = 'internal scratch']
  %s0 = inlined_call_operand.vmem [shape: f32[2,8,11,11], index: 0, kind: input, shape index: {}]
  %s1 = inlined_call_operand.vmem [shape: f32[98,64], index: 1, kind: input, shape index: {}]
  %s2 = inlined_call_operand.hbm [shape: f32[2,8,64], index: 2, kind: output, shape index: {}]
  %s3 = sld [smem:[#allocation0]]
  $region41: #{tpu_custom_call.1} parent=0
    _
  %s5 = ssub.s32 1, %s3
  %s6 = scalar_select 0, %s5, %s3
  $region1: #{tpu_custom_call.1} parent=0
    #allocation2 [shape = 'u8[8192]{0}', space=vmem, size = 0x2000, scoped, tag = 'output window, operand 0']
    #allocation3 [shape = 's32[2]{0}', space=sflag, size = 0x8, scoped, tag = 'scoped memory for tpu_custom_call.1']
    %7 = vsyncpa [#allocation3], 0
    %s8 = scalar_lea.sflag [#allocation3], 1
    %9 = vsyncpa %s8, 0
    loop: start=0, step=1, limit=4
    $region2: #{tpu_custom_call.1} parent=1 // loop_pre_header
      _
    $region3: #{tpu_custom_call.1} parent=1 // loop_header
      %s11 = sphi 0, %s15
      %p12 = scmp.ge.s32.totalorder %s11, 4
      %s21 = sphi 0, %s23
      %s24 = sphi 0, %s21
      %s25 = sphi 0, %s24
      %s41 = sphi 0, %s25
      %s45 = sphi 0, %s45
      %s47 = sphi 0, %s45
      %s48 = sphi 0, %s47
      %s62 = sphi 0, %s48
      %s68 = sphi 0, %s70
      %s71 = sphi 0, %s68
      %s72 = sphi 0, %s71
      %s88 = sphi 0, %s72
    $region4: #{tpu_custom_call.1} parent=1 // loop_header_branch
      %14 = sbr.rel (%p12) target = $region8
    $region5: #{tpu_custom_call.1} parent=1 // loop_body
      %s16 = ssub.s32 %s11, 1
      %s17 = ssub.s32 %s11, 2
      %s18 = sadd.s32 %s11, 1
      %s19 = ssub.s32 %s11, %s18
      %p20 = scmp.eq.s32.totalorder %s19, 0
      %s22 = sadd.s32 %s21, 1
      %s23 = scalar_select %p20, %s21, %s22
      %p26 = pneg %p20
      %p27 = scmp.eq.s32.totalorder %s11, 1
      %p28 = por %p26, %p27
      %p29 = scmp.ne.s32.totalorder %s21, %s24
      %p30 = scmp.eq.s32.totalorder %s11, 0
      %p31 = por %p29, %p30
      %p32 = scmp.ne.s32.totalorder %s21, %s24
      %p33 = scmp.eq.s32.totalorder %s16, 1
      %p34 = por %p32, %p33
      %p35 = scmp.ne.s32.totalorder %s24, %s25
      %p36 = scmp.eq.s32.totalorder %s16, 0
      %p37 = por %p35, %p36
      %p38 = scmp.ne.s32.totalorder %s24, %s25
      %p39 = scmp.eq.s32.totalorder %s17, 1
      %p40 = por %p38, %p39
      %p42 = scmp.ne.s32.totalorder %s25, %s41
      %p43 = scmp.eq.s32.totalorder %s17, 0
      %p44 = por %p42, %p43
      %s46 = sadd.s32 %s45, 1
      %p49 = scmp.eq.s32.totalorder %s11, 1
      %p50 = scmp.ne.s32.totalorder %s45, %s47
      %p51 = scmp.eq.s32.totalorder %s11, 0
      %p52 = por %p50, %p51
      %p53 = scmp.ne.s32.totalorder %s45, %s47
      %p54 = scmp.eq.s32.totalorder %s16, 1
      %p55 = por %p53, %p54
      %p56 = scmp.ne.s32.totalorder %s47, %s48
      %p57 = scmp.eq.s32.totalorder %s16, 0
      %p58 = por %p56, %p57
      %p59 = scmp.ne.s32.totalorder %s47, %s48
      %p60 = scmp.eq.s32.totalorder %s17, 1
      %p61 = por %p59, %p60
      %p63 = scmp.ne.s32.totalorder %s48, %s62
      %p64 = scmp.eq.s32.totalorder %s17, 0
      %p65 = por %p63, %p64
      %s66 = ssub.s32 %s11, %s18
      %p67 = scmp.eq.s32.totalorder %s66, 0
      %s69 = sadd.s32 %s68, 1
      %s70 = scalar_select %p67, %s68, %s69
      %p73 = pneg %p67
      %p74 = scmp.eq.s32.totalorder %s11, 1
      %p75 = por %p73, %p74
      %p76 = scmp.ne.s32.totalorder %s68, %s71
      %p77 = scmp.eq.s32.totalorder %s11, 0
      %p78 = por %p76, %p77
      %p79 = scmp.ne.s32.totalorder %s68, %s71
      %p80 = scmp.eq.s32.totalorder %s16, 1
      %p81 = por %p79, %p80
      %p82 = scmp.ne.s32.totalorder %s71, %s72
      %p83 = scmp.eq.s32.totalorder %s16, 0
      %p84 = por %p82, %p83
      %p85 = scmp.ne.s32.totalorder %s71, %s72
      %p86 = scmp.eq.s32.totalorder %s17, 1
      %p87 = por %p85, %p86
      %p89 = scmp.ne.s32.totalorder %s72, %s88
      %p90 = scmp.eq.s32.totalorder %s17, 0
      %p91 = por %p89, %p90
      %p92 = scmp.le.s32.totalorder 1, %s11
      %p93 = scmp.lt.s32.totalorder %s11, 3
      %p94 = pnand %p92, %p93
      %p95 = pneg %p94
      // Predicated region
      $region9: #{tpu_custom_call.1} parent=5 // pred_check
        _
      $region10: #{tpu_custom_call.1} parent=5 // pred_check_branch
        %97 = sbr.rel (%p94) target = $region12
      $region11: #{tpu_custom_call.1} parent=5 // pred_region
        %s98 = ssub.s32 %s11, 1
        // Predicated region
        $region13: #{tpu_custom_call.1} parent=11 // pred_check
          %p99 = pneg %p58
        $region14: #{tpu_custom_call.1} parent=11 // pred_check_branch
          %101 = sbr.rel (%p99) target = $region16
        $region15: #{tpu_custom_call.1} parent=11 // pred_region
          _
        $region16: #{tpu_custom_call.1} parent=11 // pred_fallthru
          _
      $region12: #{tpu_custom_call.1} parent=5 // pred_fallthru
        _
      %p102 = scmp.lt.s32.totalorder %s11, 2
      // Predicated region
      $region17: #{tpu_custom_call.1} parent=5 // pred_check
        %p103 = pneg %p102
      $region18: #{tpu_custom_call.1} parent=5 // pred_check_branch
        %105 = sbr.rel (%p103) target = $region20
      $region19: #{tpu_custom_call.1} parent=5 // pred_region
        // Predicated region
        $region21: #{tpu_custom_call.1} parent=19 // pred_check
          %p106 = pneg %p31
        $region22: #{tpu_custom_call.1} parent=19 // pred_check_branch
          %108 = sbr.rel (%p106) target = $region24
        $region23: #{tpu_custom_call.1} parent=19 // pred_region
          %p109 = scmp.lt.s32.totalorder %s11, 1
          %s110 = scalar_select %p109, %s11, 1
          %s111 = smul.addr %s110, 16
          %s112 = smul.addr %s111, 8
          %s113 = scalar_lea.vmem %s0, %s112
        $region24: #{tpu_custom_call.1} parent=19 // pred_fallthru
          _
      $region20: #{tpu_custom_call.1} parent=5 // pred_fallthru
        _
      %p114 = scmp.le.s32.totalorder 1, %s11
      %p115 = scmp.lt.s32.totalorder %s11, 3
      %p116 = pnand %p114, %p115
      %p117 = pneg %p116
      // Predicated region
      $region25: #{tpu_custom_call.1} parent=5 // pred_check
        _
      $region26: #{tpu_custom_call.1} parent=5 // pred_check_branch
        %119 = sbr.rel (%p116) target = $region28
      $region27: #{tpu_custom_call.1} parent=5 // pred_region
        %s120 = ssub.s32 %s11, 1
        %p121 = scmp.lt.s32.totalorder %s16, 1
        %s122 = scalar_select %p121, %s16, 1
        %s123 = smul.addr %s122, 16
        %s124 = smul.addr %s123, 8
        %s125 = scalar_lea.vmem %s0, %s124
        %p126 = pneg %p37
        %p127 = pneg %p34
        %p128 = pneg %p58
        %p129 = pneg %p55
        %p130 = pneg %p84
        %p131 = pneg %p81
        %s132 = sand.u32 %s71, 1
        %s133 = scalar_lea.sflag [#allocation3], %s132
        %s134 = sand.u32 %s71, 1
        %s135 = smul.addr %s134, 8
        %s136 = scalar_lea.vmem [#allocation2], %s135
        %p137 = scmp.lt.s32.totalorder %s16, 1
        %s138 = scalar_select %p137, %s16, 1
        %s139 = smul.addr %s138, 16
        %s140 = smul.addr %s139, 8
        %s141 = scalar_lea.vmem %s0, %s140
        %v142 = vlaneseq
        %v143 = vand.u32 %v142, 127
        %vm144 = vcmp.lt.s32.totalorder %v143, 0
        %v145 = vsub.s32 0, %v143
        %v146 = vsel %vm144, %v145, %v143
        %v147 = vshrl.u32 %v146, 3
        %v148 = vand.u32 %v146, 7
        %v149 = vsub.s32 0, %v148
        %v150 = vsel %vm144, %v149, %v148
        %vm151 = vcmp.ne.s32.totalorder %v150, 0
        %vm152 = vcmp.lt.s32.totalorder %v150, 0
        %vm153 = vmand %vm152, %vm151
        %v154 = vadd.s32 %v150, 8
        %v155 = vsel %vm153, %v154, %v150
        %vm156 = vcmp.eq.s32.totalorder %v155, 0
        %vm157 = vcmp.ge.s32.totalorder %v155, 7
        %v158 = vld [vmem:[%s141] sm:$0xff]
        %s159 = scalar_lea.vmem %s141, 64
        %v160 = vld [vmem:[%s159] sm:$0xff]
        %162 = vrot.lane.b32.xlu0 %v158, 8
        %v163 = vpop.permute.xlu0 %162
        %vm165 = vcmask 64512
        %v166 = vsel %vm165, %v158, %v163
        %168 = vrot.lane.b32.xlu0 %v166, 16
        %v169 = vpop.permute.xlu0 %168
        %vm171 = vcmask 130048
        %v172 = vsel %vm171, %v166, %v169
        %174 = vrot.lane.b32.xlu0 %v172, 32
        %v175 = vpop.permute.xlu0 %174
        %vm177 = vcmask 261120
        %v178 = vsel %vm177, %v172, %v175
        %180 = vrot.lane.b32.xlu0 %v160, 8
        %v181 = vpop.permute.xlu0 %180
        %v183 = vsel %vm165, %v160, %v181
        %185 = vrot.lane.b32.xlu0 %v183, 16
        %v186 = vpop.permute.xlu0 %185
        %v188 = vsel %vm171, %v183, %v186
        %190 = vrot.lane.b32.xlu0 %v188, 32
        %v191 = vpop.permute.xlu0 %190
        %v193 = vsel %vm177, %v188, %v191
        %v194 = vld [vmem:[%s1] sm:$0x1]
        %v195 = vld [vmem:[%s1 + $0x1] sm:$0x1]
        %v196 = vperm.slane %v194, 0
        %v197 = vmul.f32 %v178, %v196
        %v198 = vadd.f32 %v197, 0.0
        %v199 = vperm.slane %v195, 0
        %v200 = vmul.f32 %v193, %v199
        %v201 = vadd.f32 %v198, %v200
        %s202 = scalar_lea.vmem %s141, 16
        %v203 = vld [vmem:[%s202] sm:$0xff]
        %s204 = scalar_lea.vmem %s141, 80
        %v205 = vld [vmem:[%s204] sm:$0xff]
        %207 = vrot.lane.b32.xlu0 %v203, 8
        %v208 = vpop.permute.xlu0 %207
        %v210 = vsel %vm165, %v203, %v208
        %212 = vrot.lane.b32.xlu0 %v210, 16
        %v213 = vpop.permute.xlu0 %212
        %v215 = vsel %vm171, %v210, %v213
        %217 = vrot.lane.b32.xlu0 %v215, 32
        %v218 = vpop.permute.xlu0 %217
        %v220 = vsel %vm177, %v215, %v218
        %222 = vrot.lane.b32.xlu0 %v205, 8
        %v223 = vpop.permute.xlu0 %222
        %v225 = vsel %vm165, %v205, %v223
        %227 = vrot.lane.b32.xlu0 %v225, 16
        %v228 = vpop.permute.xlu0 %227
        %v230 = vsel %vm171, %v225, %v228
        %232 = vrot.lane.b32.xlu0 %v230, 32
        %v233 = vpop.permute.xlu0 %232
        %v235 = vsel %vm177, %v230, %v233
        %v236 = vld [vmem:[%s1 + $0x2] sm:$0x1]
        %v237 = vld [vmem:[%s1 + $0x3] sm:$0x1]
        %v238 = vperm.slane %v236, 0
        %v239 = vmul.f32 %v220, %v238
        %v240 = vadd.f32 %v201, %v239
        %v241 = vperm.slane %v237, 0
        %v242 = vmul.f32 %v235, %v241
        %v243 = vadd.f32 %v240, %v242
        %244 = vrot.lane.b32.xlu0 %v158, 127
        %v245 = vpop.permute.xlu0 %244
        %247 = vrot.lane.b32.xlu0 %v158, 7
        %v248 = vpop.permute.xlu0 %247
        %v250 = vsel %vm165, %v245, %v248
        %252 = vrot.lane.b32.xlu0 %v250, 16
        %v253 = vpop.permute.xlu0 %252
        %v255 = vsel %vm171, %v250, %v253
        %257 = vrot.lane.b32.xlu0 %v255, 32
        %v258 = vpop.permute.xlu0 %257
        %v260 = vsel %vm177, %v255, %v258
        %261 = vrot.lane.b32.xlu0 %v160, 127
        %v262 = vpop.permute.xlu0 %261
        %264 = vrot.lane.b32.xlu0 %v160, 7
        %v265 = vpop.permute.xlu0 %264
        %v267 = vsel %vm165, %v262, %v265
        %269 = vrot.lane.b32.xlu0 %v267, 16
        %v270 = vpop.permute.xlu0 %269
        %v272 = vsel %vm171, %v267, %v270
        %274 = vrot.lane.b32.xlu0 %v272, 32
        %v275 = vpop.permute.xlu0 %274
        %v277 = vsel %vm177, %v272, %v275
        %v278 = vld [vmem:[%s1 + $0x4] sm:$0x1]
        %v279 = vld [vmem:[%s1 + $0x5] sm:$0x1]
        %v280 = vperm.slane %v278, 0
        %v281 = vmul.f32 %v260, %v280
        %v282 = vadd.f32 %v243, %v281
        %v283 = vperm.slane %v279, 0
        %v284 = vmul.f32 %v277, %v283
        %v285 = vadd.f32 %v282, %v284
        %286 = vrot.lane.b32.xlu0 %v203, 127
        %v287 = vpop.permute.xlu0 %286
        %289 = vrot.lane.b32.xlu0 %v203, 7
        %v290 = vpop.permute.xlu0 %289
        %v292 = vsel %vm165, %v287, %v290
        %294 = vrot.lane.b32.xlu0 %v292, 16
        %v295 = vpop.permute.xlu0 %294
        %v297 = vsel %vm171, %v292, %v295
        %299 = vrot.lane.b32.xlu0 %v297, 32
        %v300 = vpop.permute.xlu0 %299
        %v302 = vsel %vm177, %v297, %v300
        %303 = vrot.lane.b32.xlu0 %v205, 127
        %v304 = vpop.permute.xlu0 %303
        %306 = vrot.lane.b32.xlu0 %v205, 7
        %v307 = vpop.permute.xlu0 %306
        %v309 = vsel %vm165, %v304, %v307
        %311 = vrot.lane.b32.xlu0 %v309, 16
        %v312 = vpop.permute.xlu0 %311
        %v314 = vsel %vm171, %v309, %v312
        %316 = vrot.lane.b32.xlu0 %v314, 32
        %v317 = vpop.permute.xlu0 %316
        %v319 = vsel %vm177, %v314, %v317
        %v320 = vld [vmem:[%s1 + $0x6] sm:$0x1]
        %v321 = vld [vmem:[%s1 + $0x7] sm:$0x1]
        %v322 = vperm.slane %v320, 0
        %v323 = vmul.f32 %v302, %v322
        %v324 = vadd.f32 %v285, %v323
        %v325 = vperm.slane %v321, 0
        %v326 = vmul.f32 %v319, %v325
        %v327 = vadd.f32 %v324, %v326
        %328 = vrot.lane.b32.xlu0 %v158, 126
        %v329 = vpop.permute.xlu0 %328
        %331 = vrot.lane.b32.xlu0 %v158, 6
        %v332 = vpop.permute.xlu0 %331
        %v334 = vsel %vm165, %v329, %v332
        %336 = vrot.lane.b32.xlu0 %v334, 16
        %v337 = vpop.permute.xlu0 %336
        %v339 = vsel %vm171, %v334, %v337
        %341 = vrot.lane.b32.xlu0 %v339, 32
        %v342 = vpop.permute.xlu0 %341
        %v344 = vsel %vm177, %v339, %v342
        %345 = vrot.lane.b32.xlu0 %v160, 126
        %v346 = vpop.permute.xlu0 %345
        %348 = vrot.lane.b32.xlu0 %v160, 6
        %v349 = vpop.permute.xlu0 %348
        %v351 = vsel %vm165, %v346, %v349
        %353 = vrot.lane.b32.xlu0 %v351, 16
        %v354 = vpop.permute.xlu0 %353
        %v356 = vsel %vm171, %v351, %v354
        %358 = vrot.lane.b32.xlu0 %v356, 32
        %v359 = vpop.permute.xlu0 %358
        %v361 = vsel %vm177, %v356, %v359
        %v362 = vld [vmem:[%s1 + $0x8] sm:$0x1]
        %v363 = vld [vmem:[%s1 + $0x9] sm:$0x1]
        %v364 = vperm.slane %v362, 0
        %v365 = vmul.f32 %v344, %v364
        %v366 = vadd.f32 %v327, %v365
        %v367 = vperm.slane %v363, 0
        %v368 = vmul.f32 %v361, %v367
        %v369 = vadd.f32 %v366, %v368
        %370 = vrot.lane.b32.xlu0 %v203, 126
        %v371 = vpop.permute.xlu0 %370
        %373 = vrot.lane.b32.xlu0 %v203, 6
        %v374 = vpop.permute.xlu0 %373
        %v376 = vsel %vm165, %v371, %v374
        %378 = vrot.lane.b32.xlu0 %v376, 16
        %v379 = vpop.permute.xlu0 %378
        %v381 = vsel %vm171, %v376, %v379
        %383 = vrot.lane.b32.xlu0 %v381, 32
        %v384 = vpop.permute.xlu0 %383
        %v386 = vsel %vm177, %v381, %v384
        %387 = vrot.lane.b32.xlu0 %v205, 126
        %v388 = vpop.permute.xlu0 %387
        %390 = vrot.lane.b32.xlu0 %v205, 6
        %v391 = vpop.permute.xlu0 %390
        %v393 = vsel %vm165, %v388, %v391
        %395 = vrot.lane.b32.xlu0 %v393, 16
        %v396 = vpop.permute.xlu0 %395
        %v398 = vsel %vm171, %v393, %v396
        %400 = vrot.lane.b32.xlu0 %v398, 32
        %v401 = vpop.permute.xlu0 %400
        %v403 = vsel %vm177, %v398, %v401
        %v404 = vld [vmem:[%s1 + $0xa] sm:$0x1]
        %v405 = vld [vmem:[%s1 + $0xb] sm:$0x1]
        %v406 = vperm.slane %v404, 0
        %v407 = vmul.f32 %v386, %v406
        %v408 = vadd.f32 %v369, %v407
        %v409 = vperm.slane %v405, 0
        %v410 = vmul.f32 %v403, %v409
        %v411 = vadd.f32 %v408, %v410
        %412 = vrot.lane.b32.xlu0 %v158, 125
        %v413 = vpop.permute.xlu0 %412
        %415 = vrot.lane.b32.xlu0 %v158, 5
        %v416 = vpop.permute.xlu0 %415
        %v418 = vsel %vm165, %v413, %v416
        %420 = vrot.lane.b32.xlu0 %v418, 16
        %v421 = vpop.permute.xlu0 %420
        %v423 = vsel %vm171, %v418, %v421
        %425 = vrot.lane.b32.xlu0 %v423, 32
        %v426 = vpop.permute.xlu0 %425
        %v428 = vsel %vm177, %v423, %v426
        %429 = vrot.lane.b32.xlu0 %v160, 125
        %v430 = vpop.permute.xlu0 %429
        %432 = vrot.lane.b32.xlu0 %v160, 5
        %v433 = vpop.permute.xlu0 %432
        %v435 = vsel %vm165, %v430, %v433
        %437 = vrot.lane.b32.xlu0 %v435, 16
        %v438 = vpop.permute.xlu0 %437
        %v440 = vsel %vm171, %v435, %v438
        %442 = vrot.lane.b32.xlu0 %v440, 32
        %v443 = vpop.permute.xlu0 %442
        %v445 = vsel %vm177, %v440, %v443
        %v446 = vld [vmem:[%s1 + $0xc] sm:$0x1]
        %v447 = vld [vmem:[%s1 + $0xd] sm:$0x1]
        %v448 = vperm.slane %v446, 0
        %v449 = vmul.f32 %v428, %v448
        %v450 = vadd.f32 %v411, %v449
        %v451 = vperm.slane %v447, 0
        %v452 = vmul.f32 %v445, %v451
        %v453 = vadd.f32 %v450, %v452
        %s454 = scalar_lea.vmem %s141, 32
        %v455 = vld [vmem:[%s454] sm:$0xff]
        %s456 = scalar_lea.vmem %s141, 96
        %v457 = vld [vmem:[%s456] sm:$0xff]
        %459 = vrot.lane.b32.xlu0 %v455, 8
        %v460 = vpop.permute.xlu0 %459
        %v462 = vsel %vm165, %v455, %v460
        %464 = vrot.lane.b32.xlu0 %v462, 16
        %v465 = vpop.permute.xlu0 %464
        %v467 = vsel %vm171, %v462, %v465
        %469 = vrot.lane.b32.xlu0 %v467, 32
        %v470 = vpop.permute.xlu0 %469
        %v472 = vsel %vm177, %v467, %v470
        %474 = vrot.lane.b32.xlu0 %v457, 8
        %v475 = vpop.permute.xlu0 %474
        %v477 = vsel %vm165, %v457, %v475
        %479 = vrot.lane.b32.xlu0 %v477, 16
        %v480 = vpop.permute.xlu0 %479
        %v482 = vsel %vm171, %v477, %v480
        %484 = vrot.lane.b32.xlu0 %v482, 32
        %v485 = vpop.permute.xlu0 %484
        %v487 = vsel %vm177, %v482, %v485
        %v488 = vld [vmem:[%s1 + $0xe] sm:$0x1]
        %v489 = vld [vmem:[%s1 + $0xf] sm:$0x1]
        %v490 = vperm.slane %v488, 0
        %v491 = vmul.f32 %v472, %v490
        %v492 = vadd.f32 %v453, %v491
        %v493 = vperm.slane %v489, 0
        %v494 = vmul.f32 %v487, %v493
        %v495 = vadd.f32 %v492, %v494
        %s496 = scalar_lea.vmem %s141, 48
        %v497 = vld [vmem:[%s496] sm:$0xff]
        %s498 = scalar_lea.vmem %s141, 112
        %v499 = vld [vmem:[%s498] sm:$0xff]
        %501 = vrot.lane.b32.xlu0 %v497, 8
        %v502 = vpop.permute.xlu0 %501
        %v504 = vsel %vm165, %v497, %v502
        %506 = vrot.lane.b32.xlu0 %v504, 16
        %v507 = vpop.permute.xlu0 %506
        %v509 = vsel %vm171, %v504, %v507
        %511 = vrot.lane.b32.xlu0 %v509, 32
        %v512 = vpop.permute.xlu0 %511
        %v514 = vsel %vm177, %v509, %v512
        %516 = vrot.lane.b32.xlu0 %v499, 8
        %v517 = vpop.permute.xlu0 %516
        %v519 = vsel %vm165, %v499, %v517
        %521 = vrot.lane.b32.xlu0 %v519, 16
        %v522 = vpop.permute.xlu0 %521
        %v524 = vsel %vm171, %v519, %v522
        %526 = vrot.lane.b32.xlu0 %v524, 32
        %v527 = vpop.permute.xlu0 %526
        %v529 = vsel %vm177, %v524, %v527
        %v530 = vld [vmem:[%s1 + $0x10] sm:$0x1]
        %v531 = vld [vmem:[%s1 + $0x11] sm:$0x1]
        %v532 = vperm.slane %v530, 0
        %v533 = vmul.f32 %v514, %v532
        %v534 = vadd.f32 %v495, %v533
        %v535 = vperm.slane %v531, 0
        %v536 = vmul.f32 %v529, %v535
        %v537 = vadd.f32 %v534, %v536
        %538 = vrot.lane.b32.xlu0 %v455, 127
        %v539 = vpop.permute.xlu0 %538
        %541 = vrot.lane.b32.xlu0 %v455, 7
        %v542 = vpop.permute.xlu0 %541
        %v544 = vsel %vm165, %v539, %v542
        %546 = vrot.lane.b32.xlu0 %v544, 16
        %v547 = vpop.permute.xlu0 %546
        %v549 = vsel %vm171, %v544, %v547
        %551 = vrot.lane.b32.xlu0 %v549, 32
        %v552 = vpop.permute.xlu0 %551
        %v554 = vsel %vm177, %v549, %v552
        %555 = vrot.lane.b32.xlu0 %v457, 127
        %v556 = vpop.permute.xlu0 %555
        %558 = vrot.lane.b32.xlu0 %v457, 7
        %v559 = vpop.permute.xlu0 %558
        %v561 = vsel %vm165, %v556, %v559
        %563 = vrot.lane.b32.xlu0 %v561, 16
        %v564 = vpop.permute.xlu0 %563
        %v566 = vsel %vm171, %v561, %v564
        %568 = vrot.lane.b32.xlu0 %v566, 32
        %v569 = vpop.permute.xlu0 %568
        %v571 = vsel %vm177, %v566, %v569
        %v572 = vld [vmem:[%s1 + $0x12] sm:$0x1]
        %v573 = vld [vmem:[%s1 + $0x13] sm:$0x1]
        %v574 = vperm.slane %v572, 0
        %v575 = vmul.f32 %v554, %v574
        %v576 = vadd.f32 %v537, %v575
        %v577 = vperm.slane %v573, 0
        %v578 = vmul.f32 %v571, %v577
        %v579 = vadd.f32 %v576, %v578
        %580 = vrot.lane.b32.xlu0 %v497, 127
        %v581 = vpop.permute.xlu0 %580
        %583 = vrot.lane.b32.xlu0 %v497, 7
        %v584 = vpop.permute.xlu0 %583
        %v586 = vsel %vm165, %v581, %v584
        %588 = vrot.lane.b32.xlu0 %v586, 16
        %v589 = vpop.permute.xlu0 %588
        %v591 = vsel %vm171, %v586, %v589
        %593 = vrot.lane.b32.xlu0 %v591, 32
        %v594 = vpop.permute.xlu0 %593
        %v596 = vsel %vm177, %v591, %v594
        %597 = vrot.lane.b32.xlu0 %v499, 127
        %v598 = vpop.permute.xlu0 %597
        %600 = vrot.lane.b32.xlu0 %v499, 7
        %v601 = vpop.permute.xlu0 %600
        %v603 = vsel %vm165, %v598, %v601
        %605 = vrot.lane.b32.xlu0 %v603, 16
        %v606 = vpop.permute.xlu0 %605
        %v608 = vsel %vm171, %v603, %v606
        %610 = vrot.lane.b32.xlu0 %v608, 32
        %v611 = vpop.permute.xlu0 %610
        %v613 = vsel %vm177, %v608, %v611
        %v614 = vld [vmem:[%s1 + $0x14] sm:$0x1]
        %v615 = vld [vmem:[%s1 + $0x15] sm:$0x1]
        %v616 = vperm.slane %v614, 0
        %v617 = vmul.f32 %v596, %v616
        %v618 = vadd.f32 %v579, %v617
        %v619 = vperm.slane %v615, 0
        %v620 = vmul.f32 %v613, %v619
        %v621 = vadd.f32 %v618, %v620
        %622 = vrot.lane.b32.xlu0 %v455, 126
        %v623 = vpop.permute.xlu0 %622
        %625 = vrot.lane.b32.xlu0 %v455, 6
        %v626 = vpop.permute.xlu0 %625
        %v628 = vsel %vm165, %v623, %v626
        %630 = vrot.lane.b32.xlu0 %v628, 16
        %v631 = vpop.permute.xlu0 %630
        %v633 = vsel %vm171, %v628, %v631
        %635 = vrot.lane.b32.xlu0 %v633, 32
        %v636 = vpop.permute.xlu0 %635
        %v638 = vsel %vm177, %v633, %v636
        %639 = vrot.lane.b32.xlu0 %v457, 126
        %v640 = vpop.permute.xlu0 %639
        %642 = vrot.lane.b32.xlu0 %v457, 6
        %v643 = vpop.permute.xlu0 %642
        %v645 = vsel %vm165, %v640, %v643
        %647 = vrot.lane.b32.xlu0 %v645, 16
        %v648 = vpop.permute.xlu0 %647
        %v650 = vsel %vm171, %v645, %v648
        %652 = vrot.lane.b32.xlu0 %v650, 32
        %v653 = vpop.permute.xlu0 %652
        %v655 = vsel %vm177, %v650, %v653
        %v656 = vld [vmem:[%s1 + $0x16] sm:$0x1]
        %v657 = vld [vmem:[%s1 + $0x17] sm:$0x1]
        %v658 = vperm.slane %v656, 0
        %v659 = vmul.f32 %v638, %v658
        %v660 = vadd.f32 %v621, %v659
        %v661 = vperm.slane %v657, 0
        %v662 = vmul.f32 %v655, %v661
        %v663 = vadd.f32 %v660, %v662
        %664 = vrot.lane.b32.xlu0 %v497, 126
        %v665 = vpop.permute.xlu0 %664
        %667 = vrot.lane.b32.xlu0 %v497, 6
        %v668 = vpop.permute.xlu0 %667
        %v670 = vsel %vm165, %v665, %v668
        %672 = vrot.lane.b32.xlu0 %v670, 16
        %v673 = vpop.permute.xlu0 %672
        %v675 = vsel %vm171, %v670, %v673
        %677 = vrot.lane.b32.xlu0 %v675, 32
        %v678 = vpop.permute.xlu0 %677
        %v680 = vsel %vm177, %v675, %v678
        %681 = vrot.lane.b32.xlu0 %v499, 126
        %v682 = vpop.permute.xlu0 %681
        %684 = vrot.lane.b32.xlu0 %v499, 6
        %v685 = vpop.permute.xlu0 %684
        %v687 = vsel %vm165, %v682, %v685
        %689 = vrot.lane.b32.xlu0 %v687, 16
        %v690 = vpop.permute.xlu0 %689
        %v692 = vsel %vm171, %v687, %v690
        %694 = vrot.lane.b32.xlu0 %v692, 32
        %v695 = vpop.permute.xlu0 %694
        %v697 = vsel %vm177, %v692, %v695
        %v698 = vld [vmem:[%s1 + $0x18] sm:$0x1]
        %v699 = vld [vmem:[%s1 + $0x19] sm:$0x1]
        %v700 = vperm.slane %v698, 0
        %v701 = vmul.f32 %v680, %v700
        %v702 = vadd.f32 %v663, %v701
        %v703 = vperm.slane %v699, 0
        %v704 = vmul.f32 %v697, %v703
        %v705 = vadd.f32 %v702, %v704
        %706 = vrot.lane.b32.xlu0 %v455, 125
        %v707 = vpop.permute.xlu0 %706
        %709 = vrot.lane.b32.xlu0 %v455, 5
        %v710 = vpop.permute.xlu0 %709
        %v712 = vsel %vm165, %v707, %v710
        %714 = vrot.lane.b32.xlu0 %v712, 16
        %v715 = vpop.permute.xlu0 %714
        %v717 = vsel %vm171, %v712, %v715
        %719 = vrot.lane.b32.xlu0 %v717, 32
        %v720 = vpop.permute.xlu0 %719
        %v722 = vsel %vm177, %v717, %v720
        %723 = vrot.lane.b32.xlu0 %v457, 125
        %v724 = vpop.permute.xlu0 %723
        %726 = vrot.lane.b32.xlu0 %v457, 5
        %v727 = vpop.permute.xlu0 %726
        %v729 = vsel %vm165, %v724, %v727
        %731 = vrot.lane.b32.xlu0 %v729, 16
        %v732 = vpop.permute.xlu0 %731
        %v734 = vsel %vm171, %v729, %v732
        %736 = vrot.lane.b32.xlu0 %v734, 32
        %v737 = vpop.permute.xlu0 %736
        %v739 = vsel %vm177, %v734, %v737
        %v740 = vld [vmem:[%s1 + $0x1a] sm:$0x1]
        %v741 = vld [vmem:[%s1 + $0x1b] sm:$0x1]
        %v742 = vperm.slane %v740, 0
        %v743 = vmul.f32 %v722, %v742
        %v744 = vadd.f32 %v705, %v743
        %v745 = vperm.slane %v741, 0
        %v746 = vmul.f32 %v739, %v745
        %v747 = vadd.f32 %v744, %v746
        %v748 = vld [vmem:[%s141 + $0x1] sm:$0xff]
        %v749 = vld [vmem:[%s159 + $0x1] sm:$0xff]
        %751 = vrot.lane.b32.xlu0 %v748, 8
        %v752 = vpop.permute.xlu0 %751
        %v754 = vsel %vm165, %v748, %v752
        %756 = vrot.lane.b32.xlu0 %v754, 16
        %v757 = vpop.permute.xlu0 %756
        %v759 = vsel %vm171, %v754, %v757
        %761 = vrot.lane.b32.xlu0 %v759, 32
        %v762 = vpop.permute.xlu0 %761
        %v764 = vsel %vm177, %v759, %v762
        %766 = vrot.lane.b32.xlu0 %v749, 8
        %v767 = vpop.permute.xlu0 %766
        %v769 = vsel %vm165, %v749, %v767
        %771 = vrot.lane.b32.xlu0 %v769, 16
        %v772 = vpop.permute.xlu0 %771
        %v774 = vsel %vm171, %v769, %v772
        %776 = vrot.lane.b32.xlu0 %v774, 32
        %v777 = vpop.permute.xlu0 %776
        %v779 = vsel %vm177, %v774, %v777
        %v780 = vld [vmem:[%s1 + $0x1c] sm:$0x1]
        %v781 = vld [vmem:[%s1 + $0x1d] sm:$0x1]
        %v782 = vperm.slane %v780, 0
        %v783 = vmul.f32 %v764, %v782
        %v784 = vadd.f32 %v747, %v783
        %v785 = vperm.slane %v781, 0
        %v786 = vmul.f32 %v779, %v785
        %v787 = vadd.f32 %v784, %v786
        %v788 = vld [vmem:[%s202 + $0x1] sm:$0xff]
        %v789 = vld [vmem:[%s204 + $0x1] sm:$0xff]
        %791 = vrot.lane.b32.xlu0 %v788, 8
        %v792 = vpop.permute.xlu0 %791
        %v794 = vsel %vm165, %v788, %v792
        %796 = vrot.lane.b32.xlu0 %v794, 16
        %v797 = vpop.permute.xlu0 %796
        %v799 = vsel %vm171, %v794, %v797
        %801 = vrot.lane.b32.xlu0 %v799, 32
        %v802 = vpop.permute.xlu0 %801
        %v804 = vsel %vm177, %v799, %v802
        %806 = vrot.lane.b32.xlu0 %v789, 8
        %v807 = vpop.permute.xlu0 %806
        %v809 = vsel %vm165, %v789, %v807
        %811 = vrot.lane.b32.xlu0 %v809, 16
        %v812 = vpop.permute.xlu0 %811
        %v814 = vsel %vm171, %v809, %v812
        %816 = vrot.lane.b32.xlu0 %v814, 32
        %v817 = vpop.permute.xlu0 %816
        %v819 = vsel %vm177, %v814, %v817
        %v820 = vld [vmem:[%s1 + $0x1e] sm:$0x1]
        %v821 = vld [vmem:[%s1 + $0x1f] sm:$0x1]
        %v822 = vperm.slane %v820, 0
        %v823 = vmul.f32 %v804, %v822
        %v824 = vadd.f32 %v787, %v823
        %v825 = vperm.slane %v821, 0
        %v826 = vmul.f32 %v819, %v825
        %v827 = vadd.f32 %v824, %v826
        %828 = vrot.lane.b32.xlu0 %v748, 127
        %v829 = vpop.permute.xlu0 %828
        %831 = vrot.lane.b32.xlu0 %v748, 7
        %v832 = vpop.permute.xlu0 %831
        %v834 = vsel %vm165, %v829, %v832
        %836 = vrot.lane.b32.xlu0 %v834, 16
        %v837 = vpop.permute.xlu0 %836
        %v839 = vsel %vm171, %v834, %v837
        %841 = vrot.lane.b32.xlu0 %v839, 32
        %v842 = vpop.permute.xlu0 %841
        %v844 = vsel %vm177, %v839, %v842
        %845 = vrot.lane.b32.xlu0 %v749, 127
        %v846 = vpop.permute.xlu0 %845
        %848 = vrot.lane.b32.xlu0 %v749, 7
        %v849 = vpop.permute.xlu0 %848
        %v851 = vsel %vm165, %v846, %v849
        %853 = vrot.lane.b32.xlu0 %v851, 16
        %v854 = vpop.permute.xlu0 %853
        %v856 = vsel %vm171, %v851, %v854
        %858 = vrot.lane.b32.xlu0 %v856, 32
        %v859 = vpop.permute.xlu0 %858
        %v861 = vsel %vm177, %v856, %v859
        %v862 = vld [vmem:[%s1 + $0x20] sm:$0x1]
        %v863 = vld [vmem:[%s1 + $0x21] sm:$0x1]
        %v864 = vperm.slane %v862, 0
        %v865 = vmul.f32 %v844, %v864
        %v866 = vadd.f32 %v827, %v865
        %v867 = vperm.slane %v863, 0
        %v868 = vmul.f32 %v861, %v867
        %v869 = vadd.f32 %v866, %v868
        %870 = vrot.lane.b32.xlu0 %v788, 127
        %v871 = vpop.permute.xlu0 %870
        %873 = vrot.lane.b32.xlu0 %v788, 7
        %v874 = vpop.permute.xlu0 %873
        %v876 = vsel %vm165, %v871, %v874
        %878 = vrot.lane.b32.xlu0 %v876, 16
        %v879 = vpop.permute.xlu0 %878
        %v881 = vsel %vm171, %v876, %v879
        %883 = vrot.lane.b32.xlu0 %v881, 32
        %v884 = vpop.permute.xlu0 %883
        %v886 = vsel %vm177, %v881, %v884
        %887 = vrot.lane.b32.xlu0 %v789, 127
        %v888 = vpop.permute.xlu0 %887
        %890 = vrot.lane.b32.xlu0 %v789, 7
        %v891 = vpop.permute.xlu0 %890
        %v893 = vsel %vm165, %v888, %v891
        %895 = vrot.lane.b32.xlu0 %v893, 16
        %v896 = vpop.permute.xlu0 %895
        %v898 = vsel %vm171, %v893, %v896
        %900 = vrot.lane.b32.xlu0 %v898, 32
        %v901 = vpop.permute.xlu0 %900
        %v903 = vsel %vm177, %v898, %v901
        %v904 = vld [vmem:[%s1 + $0x22] sm:$0x1]
        %v905 = vld [vmem:[%s1 + $0x23] sm:$0x1]
        %v906 = vperm.slane %v904, 0
        %v907 = vmul.f32 %v886, %v906
        %v908 = vadd.f32 %v869, %v907
        %v909 = vperm.slane %v905, 0
        %v910 = vmul.f32 %v903, %v909
        %v911 = vadd.f32 %v908, %v910
        %912 = vrot.lane.b32.xlu0 %v748, 126
        %v913 = vpop.permute.xlu0 %912
        %915 = vrot.lane.b32.xlu0 %v748, 6
        %v916 = vpop.permute.xlu0 %915
        %v918 = vsel %vm165, %v913, %v916
        %920 = vrot.lane.b32.xlu0 %v918, 16
        %v921 = vpop.permute.xlu0 %920
        %v923 = vsel %vm171, %v918, %v921
        %925 = vrot.lane.b32.xlu0 %v923, 32
        %v926 = vpop.permute.xlu0 %925
        %v928 = vsel %vm177, %v923, %v926
        %929 = vrot.lane.b32.xlu0 %v749, 126
        %v930 = vpop.permute.xlu0 %929
        %932 = vrot.lane.b32.xlu0 %v749, 6
        %v933 = vpop.permute.xlu0 %932
        %v935 = vsel %vm165, %v930, %v933
        %937 = vrot.lane.b32.xlu0 %v935, 16
        %v938 = vpop.permute.xlu0 %937
        %v940 = vsel %vm171, %v935, %v938
        %942 = vrot.lane.b32.xlu0 %v940, 32
        %v943 = vpop.permute.xlu0 %942
        %v945 = vsel %vm177, %v940, %v943
        %v946 = vld [vmem:[%s1 + $0x24] sm:$0x1]
        %v947 = vld [vmem:[%s1 + $0x25] sm:$0x1]
        %v948 = vperm.slane %v946, 0
        %v949 = vmul.f32 %v928, %v948
        %v950 = vadd.f32 %v911, %v949
        %v951 = vperm.slane %v947, 0
        %v952 = vmul.f32 %v945, %v951
        %v953 = vadd.f32 %v950, %v952
        %954 = vrot.lane.b32.xlu0 %v788, 126
        %v955 = vpop.permute.xlu0 %954
        %957 = vrot.lane.b32.xlu0 %v788, 6
        %v958 = vpop.permute.xlu0 %957
        %v960 = vsel %vm165, %v955, %v958
        %962 = vrot.lane.b32.xlu0 %v960, 16
        %v963 = vpop.permute.xlu0 %962
        %v965 = vsel %vm171, %v960, %v963
        %967 = vrot.lane.b32.xlu0 %v965, 32
        %v968 = vpop.permute.xlu0 %967
        %v970 = vsel %vm177, %v965, %v968
        %971 = vrot.lane.b32.xlu0 %v789, 126
        %v972 = vpop.permute.xlu0 %971
        %974 = vrot.lane.b32.xlu0 %v789, 6
        %v975 = vpop.permute.xlu0 %974
        %v977 = vsel %vm165, %v972, %v975
        %979 = vrot.lane.b32.xlu0 %v977, 16
        %v980 = vpop.permute.xlu0 %979
        %v982 = vsel %vm171, %v977, %v980
        %984 = vrot.lane.b32.xlu0 %v982, 32
        %v985 = vpop.permute.xlu0 %984
        %v987 = vsel %vm177, %v982, %v985
        %v988 = vld [vmem:[%s1 + $0x26] sm:$0x1]
        %v989 = vld [vmem:[%s1 + $0x27] sm:$0x1]
        %v990 = vperm.slane %v988, 0
        %v991 = vmul.f32 %v970, %v990
        %v992 = vadd.f32 %v953, %v991
        %v993 = vperm.slane %v989, 0
        %v994 = vmul.f32 %v987, %v993
        %v995 = vadd.f32 %v992, %v994
        %996 = vrot.lane.b32.xlu0 %v748, 125
        %v997 = vpop.permute.xlu0 %996
        %999 = vrot.lane.b32.xlu0 %v748, 5
        %v1000 = vpop.permute.xlu0 %999
        %v1002 = vsel %vm165, %v997, %v1000
        %1004 = vrot.lane.b32.xlu0 %v1002, 16
        %v1005 = vpop.permute.xlu0 %1004
        %v1007 = vsel %vm171, %v1002, %v1005
        %1009 = vrot.lane.b32.xlu0 %v1007, 32
        %v1010 = vpop.permute.xlu0 %1009
        %v1012 = vsel %vm177, %v1007, %v1010
        %1013 = vrot.lane.b32.xlu0 %v749, 125
        %v1014 = vpop.permute.xlu0 %1013
        %1016 = vrot.lane.b32.xlu0 %v749, 5
        %v1017 = vpop.permute.xlu0 %1016
        %v1019 = vsel %vm165, %v1014, %v1017
        %1021 = vrot.lane.b32.xlu0 %v1019, 16
        %v1022 = vpop.permute.xlu0 %1021
        %v1024 = vsel %vm171, %v1019, %v1022
        %1026 = vrot.lane.b32.xlu0 %v1024, 32
        %v1027 = vpop.permute.xlu0 %1026
        %v1029 = vsel %vm177, %v1024, %v1027
        %v1030 = vld [vmem:[%s1 + $0x28] sm:$0x1]
        %v1031 = vld [vmem:[%s1 + $0x29] sm:$0x1]
        %v1032 = vperm.slane %v1030, 0
        %v1033 = vmul.f32 %v1012, %v1032
        %v1034 = vadd.f32 %v995, %v1033
        %v1035 = vperm.slane %v1031, 0
        %v1036 = vmul.f32 %v1029, %v1035
        %v1037 = vadd.f32 %v1034, %v1036
        %v1038 = vld [vmem:[%s454 + $0x1] sm:$0xff]
        %v1039 = vld [vmem:[%s456 + $0x1] sm:$0xff]
        %1041 = vrot.lane.b32.xlu0 %v1038, 8
        %v1042 = vpop.permute.xlu0 %1041
        %v1044 = vsel %vm165, %v1038, %v1042
        %1046 = vrot.lane.b32.xlu0 %v1044, 16
        %v1047 = vpop.permute.xlu0 %1046
        %v1049 = vsel %vm171, %v1044, %v1047
        %1051 = vrot.lane.b32.xlu0 %v1049, 32
        %v1052 = vpop.permute.xlu0 %1051
        %v1054 = vsel %vm177, %v1049, %v1052
        %1056 = vrot.lane.b32.xlu0 %v1039, 8
        %v1057 = vpop.permute.xlu0 %1056
        %v1059 = vsel %vm165, %v1039, %v1057
        %1061 = vrot.lane.b32.xlu0 %v1059, 16
        %v1062 = vpop.permute.xlu0 %1061
        %v1064 = vsel %vm171, %v1059, %v1062
        %1066 = vrot.lane.b32.xlu0 %v1064, 32
        %v1067 = vpop.permute.xlu0 %1066
        %v1069 = vsel %vm177, %v1064, %v1067
        %v1070 = vld [vmem:[%s1 + $0x2a] sm:$0x1]
        %v1071 = vld [vmem:[%s1 + $0x2b] sm:$0x1]
        %v1072 = vperm.slane %v1070, 0
        %v1073 = vmul.f32 %v1054, %v1072
        %v1074 = vadd.f32 %v1037, %v1073
        %v1075 = vperm.slane %v1071, 0
        %v1076 = vmul.f32 %v1069, %v1075
        %v1077 = vadd.f32 %v1074, %v1076
        %v1078 = vld [vmem:[%s496 + $0x1] sm:$0xff]
        %v1079 = vld [vmem:[%s498 + $0x1] sm:$0xff]
        %1081 = vrot.lane.b32.xlu0 %v1078, 8
        %v1082 = vpop.permute.xlu0 %1081
        %v1084 = vsel %vm165, %v1078, %v1082
        %1086 = vrot.lane.b32.xlu0 %v1084, 16
        %v1087 = vpop.permute.xlu0 %1086
        %v1089 = vsel %vm171, %v1084, %v1087
        %1091 = vrot.lane.b32.xlu0 %v1089, 32
        %v1092 = vpop.permute.xlu0 %1091
        %v1094 = vsel %vm177, %v1089, %v1092
        %1096 = vrot.lane.b32.xlu0 %v1079, 8
        %v1097 = vpop.permute.xlu0 %1096
        %v1099 = vsel %vm165, %v1079, %v1097
        %1101 = vrot.lane.b32.xlu0 %v1099, 16
        %v1102 = vpop.permute.xlu0 %1101
        %v1104 = vsel %vm171, %v1099, %v1102
        %1106 = vrot.lane.b32.xlu0 %v1104, 32
        %v1107 = vpop.permute.xlu0 %1106
        %v1109 = vsel %vm177, %v1104, %v1107
        %v1110 = vld [vmem:[%s1 + $0x2c] sm:$0x1]
        %v1111 = vld [vmem:[%s1 + $0x2d] sm:$0x1]
        %v1112 = vperm.slane %v1110, 0
        %v1113 = vmul.f32 %v1094, %v1112
        %v1114 = vadd.f32 %v1077, %v1113
        %v1115 = vperm.slane %v1111, 0
        %v1116 = vmul.f32 %v1109, %v1115
        %v1117 = vadd.f32 %v1114, %v1116
        %1118 = vrot.lane.b32.xlu0 %v1038, 127
        %v1119 = vpop.permute.xlu0 %1118
        %1121 = vrot.lane.b32.xlu0 %v1038, 7
        %v1122 = vpop.permute.xlu0 %1121
        %v1124 = vsel %vm165, %v1119, %v1122
        %1126 = vrot.lane.b32.xlu0 %v1124, 16
        %v1127 = vpop.permute.xlu0 %1126
        %v1129 = vsel %vm171, %v1124, %v1127
        %1131 = vrot.lane.b32.xlu0 %v1129, 32
        %v1132 = vpop.permute.xlu0 %1131
        %v1134 = vsel %vm177, %v1129, %v1132
        %1135 = vrot.lane.b32.xlu0 %v1039, 127
        %v1136 = vpop.permute.xlu0 %1135
        %1138 = vrot.lane.b32.xlu0 %v1039, 7
        %v1139 = vpop.permute.xlu0 %1138
        %v1141 = vsel %vm165, %v1136, %v1139
        %1143 = vrot.lane.b32.xlu0 %v1141, 16
        %v1144 = vpop.permute.xlu0 %1143
        %v1146 = vsel %vm171, %v1141, %v1144
        %1148 = vrot.lane.b32.xlu0 %v1146, 32
        %v1149 = vpop.permute.xlu0 %1148
        %v1151 = vsel %vm177, %v1146, %v1149
        %v1152 = vld [vmem:[%s1 + $0x2e] sm:$0x1]
        %v1153 = vld [vmem:[%s1 + $0x2f] sm:$0x1]
        %v1154 = vperm.slane %v1152, 0
        %v1155 = vmul.f32 %v1134, %v1154
        %v1156 = vadd.f32 %v1117, %v1155
        %v1157 = vperm.slane %v1153, 0
        %v1158 = vmul.f32 %v1151, %v1157
        %v1159 = vadd.f32 %v1156, %v1158
        %1160 = vrot.lane.b32.xlu0 %v1078, 127
        %v1161 = vpop.permute.xlu0 %1160
        %1163 = vrot.lane.b32.xlu0 %v1078, 7
        %v1164 = vpop.permute.xlu0 %1163
        %v1166 = vsel %vm165, %v1161, %v1164
        %1168 = vrot.lane.b32.xlu0 %v1166, 16
        %v1169 = vpop.permute.xlu0 %1168
        %v1171 = vsel %vm171, %v1166, %v1169
        %1173 = vrot.lane.b32.xlu0 %v1171, 32
        %v1174 = vpop.permute.xlu0 %1173
        %v1176 = vsel %vm177, %v1171, %v1174
        %1177 = vrot.lane.b32.xlu0 %v1079, 127
        %v1178 = vpop.permute.xlu0 %1177
        %1180 = vrot.lane.b32.xlu0 %v1079, 7
        %v1181 = vpop.permute.xlu0 %1180
        %v1183 = vsel %vm165, %v1178, %v1181
        %1185 = vrot.lane.b32.xlu0 %v1183, 16
        %v1186 = vpop.permute.xlu0 %1185
        %v1188 = vsel %vm171, %v1183, %v1186
        %1190 = vrot.lane.b32.xlu0 %v1188, 32
        %v1191 = vpop.permute.xlu0 %1190
        %v1193 = vsel %vm177, %v1188, %v1191
        %v1194 = vld [vmem:[%s1 + $0x30] sm:$0x1]
        %v1195 = vld [vmem:[%s1 + $0x31] sm:$0x1]
        %v1196 = vperm.slane %v1194, 0
        %v1197 = vmul.f32 %v1176, %v1196
        %v1198 = vadd.f32 %v1159, %v1197
        %v1199 = vperm.slane %v1195, 0
        %v1200 = vmul.f32 %v1193, %v1199
        %v1201 = vadd.f32 %v1198, %v1200
        %1202 = vrot.lane.b32.xlu0 %v1038, 126
        %v1203 = vpop.permute.xlu0 %1202
        %1205 = vrot.lane.b32.xlu0 %v1038, 6
        %v1206 = vpop.permute.xlu0 %1205
        %v1208 = vsel %vm165, %v1203, %v1206
        %1210 = vrot.lane.b32.xlu0 %v1208, 16
        %v1211 = vpop.permute.xlu0 %1210
        %v1213 = vsel %vm171, %v1208, %v1211
        %1215 = vrot.lane.b32.xlu0 %v1213, 32
        %v1216 = vpop.permute.xlu0 %1215
        %v1218 = vsel %vm177, %v1213, %v1216
        %1219 = vrot.lane.b32.xlu0 %v1039, 126
        %v1220 = vpop.permute.xlu0 %1219
        %1222 = vrot.lane.b32.xlu0 %v1039, 6
        %v1223 = vpop.permute.xlu0 %1222
        %v1225 = vsel %vm165, %v1220, %v1223
        %1227 = vrot.lane.b32.xlu0 %v1225, 16
        %v1228 = vpop.permute.xlu0 %1227
        %v1230 = vsel %vm171, %v1225, %v1228
        %1232 = vrot.lane.b32.xlu0 %v1230, 32
        %v1233 = vpop.permute.xlu0 %1232
        %v1235 = vsel %vm177, %v1230, %v1233
        %v1236 = vld [vmem:[%s1 + $0x32] sm:$0x1]
        %v1237 = vld [vmem:[%s1 + $0x33] sm:$0x1]
        %v1238 = vperm.slane %v1236, 0
        %v1239 = vmul.f32 %v1218, %v1238
        %v1240 = vadd.f32 %v1201, %v1239
        %v1241 = vperm.slane %v1237, 0
        %v1242 = vmul.f32 %v1235, %v1241
        %v1243 = vadd.f32 %v1240, %v1242
        %1244 = vrot.lane.b32.xlu0 %v1078, 126
        %v1245 = vpop.permute.xlu0 %1244
        %1247 = vrot.lane.b32.xlu0 %v1078, 6
        %v1248 = vpop.permute.xlu0 %1247
        %v1250 = vsel %vm165, %v1245, %v1248
        %1252 = vrot.lane.b32.xlu0 %v1250, 16
        %v1253 = vpop.permute.xlu0 %1252
        %v1255 = vsel %vm171, %v1250, %v1253
        %1257 = vrot.lane.b32.xlu0 %v1255, 32
        %v1258 = vpop.permute.xlu0 %1257
        %v1260 = vsel %vm177, %v1255, %v1258
        %1261 = vrot.lane.b32.xlu0 %v1079, 126
        %v1262 = vpop.permute.xlu0 %1261
        %1264 = vrot.lane.b32.xlu0 %v1079, 6
        %v1265 = vpop.permute.xlu0 %1264
        %v1267 = vsel %vm165, %v1262, %v1265
        %1269 = vrot.lane.b32.xlu0 %v1267, 16
        %v1270 = vpop.permute.xlu0 %1269
        %v1272 = vsel %vm171, %v1267, %v1270
        %1274 = vrot.lane.b32.xlu0 %v1272, 32
        %v1275 = vpop.permute.xlu0 %1274
        %v1277 = vsel %vm177, %v1272, %v1275
        %v1278 = vld [vmem:[%s1 + $0x34] sm:$0x1]
        %v1279 = vld [vmem:[%s1 + $0x35] sm:$0x1]
        %v1280 = vperm.slane %v1278, 0
        %v1281 = vmul.f32 %v1260, %v1280
        %v1282 = vadd.f32 %v1243, %v1281
        %v1283 = vperm.slane %v1279, 0
        %v1284 = vmul.f32 %v1277, %v1283
        %v1285 = vadd.f32 %v1282, %v1284
        %1286 = vrot.lane.b32.xlu0 %v1038, 125
        %v1287 = vpop.permute.xlu0 %1286
        %1289 = vrot.lane.b32.xlu0 %v1038, 5
        %v1290 = vpop.permute.xlu0 %1289
        %v1292 = vsel %vm165, %v1287, %v1290
        %1294 = vrot.lane.b32.xlu0 %v1292, 16
        %v1295 = vpop.permute.xlu0 %1294
        %v1297 = vsel %vm171, %v1292, %v1295
        %1299 = vrot.lane.b32.xlu0 %v1297, 32
        %v1300 = vpop.permute.xlu0 %1299
        %v1302 = vsel %vm177, %v1297, %v1300
        %1303 = vrot.lane.b32.xlu0 %v1039, 125
        %v1304 = vpop.permute.xlu0 %1303
        %1306 = vrot.lane.b32.xlu0 %v1039, 5
        %v1307 = vpop.permute.xlu0 %1306
        %v1309 = vsel %vm165, %v1304, %v1307
        %1311 = vrot.lane.b32.xlu0 %v1309, 16
        %v1312 = vpop.permute.xlu0 %1311
        %v1314 = vsel %vm171, %v1309, %v1312
        %1316 = vrot.lane.b32.xlu0 %v1314, 32
        %v1317 = vpop.permute.xlu0 %1316
        %v1319 = vsel %vm177, %v1314, %v1317
        %v1320 = vld [vmem:[%s1 + $0x36] sm:$0x1]
        %v1321 = vld [vmem:[%s1 + $0x37] sm:$0x1]
        %v1322 = vperm.slane %v1320, 0
        %v1323 = vmul.f32 %v1302, %v1322
        %v1324 = vadd.f32 %v1285, %v1323
        %v1325 = vperm.slane %v1321, 0
        %v1326 = vmul.f32 %v1319, %v1325
        %v1327 = vadd.f32 %v1324, %v1326
        %v1328 = vld [vmem:[%s141 + $0x2] sm:$0xff]
        %v1329 = vld [vmem:[%s159 + $0x2] sm:$0xff]
        %1331 = vrot.lane.b32.xlu0 %v1328, 8
        %v1332 = vpop.permute.xlu0 %1331
        %v1334 = vsel %vm165, %v1328, %v1332
        %1336 = vrot.lane.b32.xlu0 %v1334, 16
        %v1337 = vpop.permute.xlu0 %1336
        %v1339 = vsel %vm171, %v1334, %v1337
        %1341 = vrot.lane.b32.xlu0 %v1339, 32
        %v1342 = vpop.permute.xlu0 %1341
        %v1344 = vsel %vm177, %v1339, %v1342
        %1346 = vrot.lane.b32.xlu0 %v1329, 8
        %v1347 = vpop.permute.xlu0 %1346
        %v1349 = vsel %vm165, %v1329, %v1347
        %1351 = vrot.lane.b32.xlu0 %v1349, 16
        %v1352 = vpop.permute.xlu0 %1351
        %v1354 = vsel %vm171, %v1349, %v1352
        %1356 = vrot.lane.b32.xlu0 %v1354, 32
        %v1357 = vpop.permute.xlu0 %1356
        %v1359 = vsel %vm177, %v1354, %v1357
        %v1360 = vld [vmem:[%s1 + $0x38] sm:$0x1]
        %v1361 = vld [vmem:[%s1 + $0x39] sm:$0x1]
        %v1362 = vperm.slane %v1360, 0
        %v1363 = vmul.f32 %v1344, %v1362
        %v1364 = vadd.f32 %v1327, %v1363
        %v1365 = vperm.slane %v1361, 0
        %v1366 = vmul.f32 %v1359, %v1365
        %v1367 = vadd.f32 %v1364, %v1366
        %v1368 = vld [vmem:[%s202 + $0x2] sm:$0xff]
        %v1369 = vld [vmem:[%s204 + $0x2] sm:$0xff]
        %1371 = vrot.lane.b32.xlu0 %v1368, 8
        %v1372 = vpop.permute.xlu0 %1371
        %v1374 = vsel %vm165, %v1368, %v1372
        %1376 = vrot.lane.b32.xlu0 %v1374, 16
        %v1377 = vpop.permute.xlu0 %1376
        %v1379 = vsel %vm171, %v1374, %v1377
        %1381 = vrot.lane.b32.xlu0 %v1379, 32
        %v1382 = vpop.permute.xlu0 %1381
        %v1384 = vsel %vm177, %v1379, %v1382
        %1386 = vrot.lane.b32.xlu0 %v1369, 8
        %v1387 = vpop.permute.xlu0 %1386
        %v1389 = vsel %vm165, %v1369, %v1387
        %1391 = vrot.lane.b32.xlu0 %v1389, 16
        %v1392 = vpop.permute.xlu0 %1391
        %v1394 = vsel %vm171, %v1389, %v1392
        %1396 = vrot.lane.b32.xlu0 %v1394, 32
        %v1397 = vpop.permute.xlu0 %1396
        %v1399 = vsel %vm177, %v1394, %v1397
        %v1400 = vld [vmem:[%s1 + $0x3a] sm:$0x1]
        %v1401 = vld [vmem:[%s1 + $0x3b] sm:$0x1]
        %v1402 = vperm.slane %v1400, 0
        %v1403 = vmul.f32 %v1384, %v1402
        %v1404 = vadd.f32 %v1367, %v1403
        %v1405 = vperm.slane %v1401, 0
        %v1406 = vmul.f32 %v1399, %v1405
        %v1407 = vadd.f32 %v1404, %v1406
        %1408 = vrot.lane.b32.xlu0 %v1328, 127
        %v1409 = vpop.permute.xlu0 %1408
        %1411 = vrot.lane.b32.xlu0 %v1328, 7
        %v1412 = vpop.permute.xlu0 %1411
        %v1414 = vsel %vm165, %v1409, %v1412
        %1416 = vrot.lane.b32.xlu0 %v1414, 16
        %v1417 = vpop.permute.xlu0 %1416
        %v1419 = vsel %vm171, %v1414, %v1417
        %1421 = vrot.lane.b32.xlu0 %v1419, 32
        %v1422 = vpop.permute.xlu0 %1421
        %v1424 = vsel %vm177, %v1419, %v1422
        %1425 = vrot.lane.b32.xlu0 %v1329, 127
        %v1426 = vpop.permute.xlu0 %1425
        %1428 = vrot.lane.b32.xlu0 %v1329, 7
        %v1429 = vpop.permute.xlu0 %1428
        %v1431 = vsel %vm165, %v1426, %v1429
        %1433 = vrot.lane.b32.xlu0 %v1431, 16
        %v1434 = vpop.permute.xlu0 %1433
        %v1436 = vsel %vm171, %v1431, %v1434
        %1438 = vrot.lane.b32.xlu0 %v1436, 32
        %v1439 = vpop.permute.xlu0 %1438
        %v1441 = vsel %vm177, %v1436, %v1439
        %v1442 = vld [vmem:[%s1 + $0x3c] sm:$0x1]
        %v1443 = vld [vmem:[%s1 + $0x3d] sm:$0x1]
        %v1444 = vperm.slane %v1442, 0
        %v1445 = vmul.f32 %v1424, %v1444
        %v1446 = vadd.f32 %v1407, %v1445
        %v1447 = vperm.slane %v1443, 0
        %v1448 = vmul.f32 %v1441, %v1447
        %v1449 = vadd.f32 %v1446, %v1448
        %1450 = vrot.lane.b32.xlu0 %v1368, 127
        %v1451 = vpop.permute.xlu0 %1450
        %1453 = vrot.lane.b32.xlu0 %v1368, 7
        %v1454 = vpop.permute.xlu0 %1453
        %v1456 = vsel %vm165, %v1451, %v1454
        %1458 = vrot.lane.b32.xlu0 %v1456, 16
        %v1459 = vpop.permute.xlu0 %1458
        %v1461 = vsel %vm171, %v1456, %v1459
        %1463 = vrot.lane.b32.xlu0 %v1461, 32
        %v1464 = vpop.permute.xlu0 %1463
        %v1466 = vsel %vm177, %v1461, %v1464
        %1467 = vrot.lane.b32.xlu0 %v1369, 127
        %v1468 = vpop.permute.xlu0 %1467
        %1470 = vrot.lane.b32.xlu0 %v1369, 7
        %v1471 = vpop.permute.xlu0 %1470
        %v1473 = vsel %vm165, %v1468, %v1471
        %1475 = vrot.lane.b32.xlu0 %v1473, 16
        %v1476 = vpop.permute.xlu0 %1475
        %v1478 = vsel %vm171, %v1473, %v1476
        %1480 = vrot.lane.b32.xlu0 %v1478, 32
        %v1481 = vpop.permute.xlu0 %1480
        %v1483 = vsel %vm177, %v1478, %v1481
        %v1484 = vld [vmem:[%s1 + $0x3e] sm:$0x1]
        %v1485 = vld [vmem:[%s1 + $0x3f] sm:$0x1]
        %v1486 = vperm.slane %v1484, 0
        %v1487 = vmul.f32 %v1466, %v1486
        %v1488 = vadd.f32 %v1449, %v1487
        %v1489 = vperm.slane %v1485, 0
        %v1490 = vmul.f32 %v1483, %v1489
        %v1491 = vadd.f32 %v1488, %v1490
        %1492 = vrot.lane.b32.xlu0 %v1328, 126
        %v1493 = vpop.permute.xlu0 %1492
        %1495 = vrot.lane.b32.xlu0 %v1328, 6
        %v1496 = vpop.permute.xlu0 %1495
        %v1498 = vsel %vm165, %v1493, %v1496
        %1500 = vrot.lane.b32.xlu0 %v1498, 16
        %v1501 = vpop.permute.xlu0 %1500
        %v1503 = vsel %vm171, %v1498, %v1501
        %1505 = vrot.lane.b32.xlu0 %v1503, 32
        %v1506 = vpop.permute.xlu0 %1505
        %v1508 = vsel %vm177, %v1503, %v1506
        %1509 = vrot.lane.b32.xlu0 %v1329, 126
        %v1510 = vpop.permute.xlu0 %1509
        %1512 = vrot.lane.b32.xlu0 %v1329, 6
        %v1513 = vpop.permute.xlu0 %1512
        %v1515 = vsel %vm165, %v1510, %v1513
        %1517 = vrot.lane.b32.xlu0 %v1515, 16
        %v1518 = vpop.permute.xlu0 %1517
        %v1520 = vsel %vm171, %v1515, %v1518
        %1522 = vrot.lane.b32.xlu0 %v1520, 32
        %v1523 = vpop.permute.xlu0 %1522
        %v1525 = vsel %vm177, %v1520, %v1523
        %v1526 = vld [vmem:[%s1 + $0x40] sm:$0x1]
        %v1527 = vld [vmem:[%s1 + $0x41] sm:$0x1]
        %v1528 = vperm.slane %v1526, 0
        %v1529 = vmul.f32 %v1508, %v1528
        %v1530 = vadd.f32 %v1491, %v1529
        %v1531 = vperm.slane %v1527, 0
        %v1532 = vmul.f32 %v1525, %v1531
        %v1533 = vadd.f32 %v1530, %v1532
        %1534 = vrot.lane.b32.xlu0 %v1368, 126
        %v1535 = vpop.permute.xlu0 %1534
        %1537 = vrot.lane.b32.xlu0 %v1368, 6
        %v1538 = vpop.permute.xlu0 %1537
        %v1540 = vsel %vm165, %v1535, %v1538
        %1542 = vrot.lane.b32.xlu0 %v1540, 16
        %v1543 = vpop.permute.xlu0 %1542
        %v1545 = vsel %vm171, %v1540, %v1543
        %1547 = vrot.lane.b32.xlu0 %v1545, 32
        %v1548 = vpop.permute.xlu0 %1547
        %v1550 = vsel %vm177, %v1545, %v1548
        %1551 = vrot.lane.b32.xlu0 %v1369, 126
        %v1552 = vpop.permute.xlu0 %1551
        %1554 = vrot.lane.b32.xlu0 %v1369, 6
        %v1555 = vpop.permute.xlu0 %1554
        %v1557 = vsel %vm165, %v1552, %v1555
        %1559 = vrot.lane.b32.xlu0 %v1557, 16
        %v1560 = vpop.permute.xlu0 %1559
        %v1562 = vsel %vm171, %v1557, %v1560
        %1564 = vrot.lane.b32.xlu0 %v1562, 32
        %v1565 = vpop.permute.xlu0 %1564
        %v1567 = vsel %vm177, %v1562, %v1565
        %v1568 = vld [vmem:[%s1 + $0x42] sm:$0x1]
        %v1569 = vld [vmem:[%s1 + $0x43] sm:$0x1]
        %v1570 = vperm.slane %v1568, 0
        %v1571 = vmul.f32 %v1550, %v1570
        %v1572 = vadd.f32 %v1533, %v1571
        %v1573 = vperm.slane %v1569, 0
        %v1574 = vmul.f32 %v1567, %v1573
        %v1575 = vadd.f32 %v1572, %v1574
        %1576 = vrot.lane.b32.xlu0 %v1328, 125
        %v1577 = vpop.permute.xlu0 %1576
        %1579 = vrot.lane.b32.xlu0 %v1328, 5
        %v1580 = vpop.permute.xlu0 %1579
        %v1582 = vsel %vm165, %v1577, %v1580
        %1584 = vrot.lane.b32.xlu0 %v1582, 16
        %v1585 = vpop.permute.xlu0 %1584
        %v1587 = vsel %vm171, %v1582, %v1585
        %1589 = vrot.lane.b32.xlu0 %v1587, 32
        %v1590 = vpop.permute.xlu0 %1589
        %v1592 = vsel %vm177, %v1587, %v1590
        %1593 = vrot.lane.b32.xlu0 %v1329, 125
        %v1594 = vpop.permute.xlu0 %1593
        %1596 = vrot.lane.b32.xlu0 %v1329, 5
        %v1597 = vpop.permute.xlu0 %1596
        %v1599 = vsel %vm165, %v1594, %v1597
        %1601 = vrot.lane.b32.xlu0 %v1599, 16
        %v1602 = vpop.permute.xlu0 %1601
        %v1604 = vsel %vm171, %v1599, %v1602
        %1606 = vrot.lane.b32.xlu0 %v1604, 32
        %v1607 = vpop.permute.xlu0 %1606
        %v1609 = vsel %vm177, %v1604, %v1607
        %v1610 = vld [vmem:[%s1 + $0x44] sm:$0x1]
        %v1611 = vld [vmem:[%s1 + $0x45] sm:$0x1]
        %v1612 = vperm.slane %v1610, 0
        %v1613 = vmul.f32 %v1592, %v1612
        %v1614 = vadd.f32 %v1575, %v1613
        %v1615 = vperm.slane %v1611, 0
        %v1616 = vmul.f32 %v1609, %v1615
        %v1617 = vadd.f32 %v1614, %v1616
        %v1618 = vld [vmem:[%s454 + $0x2] sm:$0xff]
        %v1619 = vld [vmem:[%s456 + $0x2] sm:$0xff]
        %1621 = vrot.lane.b32.xlu0 %v1618, 8
        %v1622 = vpop.permute.xlu0 %1621
        %v1624 = vsel %vm165, %v1618, %v1622
        %1626 = vrot.lane.b32.xlu0 %v1624, 16
        %v1627 = vpop.permute.xlu0 %1626
        %v1629 = vsel %vm171, %v1624, %v1627
        %1631 = vrot.lane.b32.xlu0 %v1629, 32
        %v1632 = vpop.permute.xlu0 %1631
        %v1634 = vsel %vm177, %v1629, %v1632
        %1636 = vrot.lane.b32.xlu0 %v1619, 8
        %v1637 = vpop.permute.xlu0 %1636
        %v1639 = vsel %vm165, %v1619, %v1637
        %1641 = vrot.lane.b32.xlu0 %v1639, 16
        %v1642 = vpop.permute.xlu0 %1641
        %v1644 = vsel %vm171, %v1639, %v1642
        %1646 = vrot.lane.b32.xlu0 %v1644, 32
        %v1647 = vpop.permute.xlu0 %1646
        %v1649 = vsel %vm177, %v1644, %v1647
        %v1650 = vld [vmem:[%s1 + $0x46] sm:$0x1]
        %v1651 = vld [vmem:[%s1 + $0x47] sm:$0x1]
        %v1652 = vperm.slane %v1650, 0
        %v1653 = vmul.f32 %v1634, %v1652
        %v1654 = vadd.f32 %v1617, %v1653
        %v1655 = vperm.slane %v1651, 0
        %v1656 = vmul.f32 %v1649, %v1655
        %v1657 = vadd.f32 %v1654, %v1656
        %v1658 = vld [vmem:[%s496 + $0x2] sm:$0xff]
        %v1659 = vld [vmem:[%s498 + $0x2] sm:$0xff]
        %1661 = vrot.lane.b32.xlu0 %v1658, 8
        %v1662 = vpop.permute.xlu0 %1661
        %v1664 = vsel %vm165, %v1658, %v1662
        %1666 = vrot.lane.b32.xlu0 %v1664, 16
        %v1667 = vpop.permute.xlu0 %1666
        %v1669 = vsel %vm171, %v1664, %v1667
        %1671 = vrot.lane.b32.xlu0 %v1669, 32
        %v1672 = vpop.permute.xlu0 %1671
        %v1674 = vsel %vm177, %v1669, %v1672
        %1676 = vrot.lane.b32.xlu0 %v1659, 8
        %v1677 = vpop.permute.xlu0 %1676
        %v1679 = vsel %vm165, %v1659, %v1677
        %1681 = vrot.lane.b32.xlu0 %v1679, 16
        %v1682 = vpop.permute.xlu0 %1681
        %v1684 = vsel %vm171, %v1679, %v1682
        %1686 = vrot.lane.b32.xlu0 %v1684, 32
        %v1687 = vpop.permute.xlu0 %1686
        %v1689 = vsel %vm177, %v1684, %v1687
        %v1690 = vld [vmem:[%s1 + $0x48] sm:$0x1]
        %v1691 = vld [vmem:[%s1 + $0x49] sm:$0x1]
        %v1692 = vperm.slane %v1690, 0
        %v1693 = vmul.f32 %v1674, %v1692
        %v1694 = vadd.f32 %v1657, %v1693
        %v1695 = vperm.slane %v1691, 0
        %v1696 = vmul.f32 %v1689, %v1695
        %v1697 = vadd.f32 %v1694, %v1696
        %1698 = vrot.lane.b32.xlu0 %v1618, 127
        %v1699 = vpop.permute.xlu0 %1698
        %1701 = vrot.lane.b32.xlu0 %v1618, 7
        %v1702 = vpop.permute.xlu0 %1701
        %v1704 = vsel %vm165, %v1699, %v1702
        %1706 = vrot.lane.b32.xlu0 %v1704, 16
        %v1707 = vpop.permute.xlu0 %1706
        %v1709 = vsel %vm171, %v1704, %v1707
        %1711 = vrot.lane.b32.xlu0 %v1709, 32
        %v1712 = vpop.permute.xlu0 %1711
        %v1714 = vsel %vm177, %v1709, %v1712
        %1715 = vrot.lane.b32.xlu0 %v1619, 127
        %v1716 = vpop.permute.xlu0 %1715
        %1718 = vrot.lane.b32.xlu0 %v1619, 7
        %v1719 = vpop.permute.xlu0 %1718
        %v1721 = vsel %vm165, %v1716, %v1719
        %1723 = vrot.lane.b32.xlu0 %v1721, 16
        %v1724 = vpop.permute.xlu0 %1723
        %v1726 = vsel %vm171, %v1721, %v1724
        %1728 = vrot.lane.b32.xlu0 %v1726, 32
        %v1729 = vpop.permute.xlu0 %1728
        %v1731 = vsel %vm177, %v1726, %v1729
        %v1732 = vld [vmem:[%s1 + $0x4a] sm:$0x1]
        %v1733 = vld [vmem:[%s1 + $0x4b] sm:$0x1]
        %v1734 = vperm.slane %v1732, 0
        %v1735 = vmul.f32 %v1714, %v1734
        %v1736 = vadd.f32 %v1697, %v1735
        %v1737 = vperm.slane %v1733, 0
        %v1738 = vmul.f32 %v1731, %v1737
        %v1739 = vadd.f32 %v1736, %v1738
        %1740 = vrot.lane.b32.xlu0 %v1658, 127
        %v1741 = vpop.permute.xlu0 %1740
        %1743 = vrot.lane.b32.xlu0 %v1658, 7
        %v1744 = vpop.permute.xlu0 %1743
        %v1746 = vsel %vm165, %v1741, %v1744
        %1748 = vrot.lane.b32.xlu0 %v1746, 16
        %v1749 = vpop.permute.xlu0 %1748
        %v1751 = vsel %vm171, %v1746, %v1749
        %1753 = vrot.lane.b32.xlu0 %v1751, 32
        %v1754 = vpop.permute.xlu0 %1753
        %v1756 = vsel %vm177, %v1751, %v1754
        %1757 = vrot.lane.b32.xlu0 %v1659, 127
        %v1758 = vpop.permute.xlu0 %1757
        %1760 = vrot.lane.b32.xlu0 %v1659, 7
        %v1761 = vpop.permute.xlu0 %1760
        %v1763 = vsel %vm165, %v1758, %v1761
        %1765 = vrot.lane.b32.xlu0 %v1763, 16
        %v1766 = vpop.permute.xlu0 %1765
        %v1768 = vsel %vm171, %v1763, %v1766
        %1770 = vrot.lane.b32.xlu0 %v1768, 32
        %v1771 = vpop.permute.xlu0 %1770
        %v1773 = vsel %vm177, %v1768, %v1771
        %v1774 = vld [vmem:[%s1 + $0x4c] sm:$0x1]
        %v1775 = vld [vmem:[%s1 + $0x4d] sm:$0x1]
        %v1776 = vperm.slane %v1774, 0
        %v1777 = vmul.f32 %v1756, %v1776
        %v1778 = vadd.f32 %v1739, %v1777
        %v1779 = vperm.slane %v1775, 0
        %v1780 = vmul.f32 %v1773, %v1779
        %v1781 = vadd.f32 %v1778, %v1780
        %1782 = vrot.lane.b32.xlu0 %v1618, 126
        %v1783 = vpop.permute.xlu0 %1782
        %1785 = vrot.lane.b32.xlu0 %v1618, 6
        %v1786 = vpop.permute.xlu0 %1785
        %v1788 = vsel %vm165, %v1783, %v1786
        %1790 = vrot.lane.b32.xlu0 %v1788, 16
        %v1791 = vpop.permute.xlu0 %1790
        %v1793 = vsel %vm171, %v1788, %v1791
        %1795 = vrot.lane.b32.xlu0 %v1793, 32
        %v1796 = vpop.permute.xlu0 %1795
        %v1798 = vsel %vm177, %v1793, %v1796
        %1799 = vrot.lane.b32.xlu0 %v1619, 126
        %v1800 = vpop.permute.xlu0 %1799
        %1802 = vrot.lane.b32.xlu0 %v1619, 6
        %v1803 = vpop.permute.xlu0 %1802
        %v1805 = vsel %vm165, %v1800, %v1803
        %1807 = vrot.lane.b32.xlu0 %v1805, 16
        %v1808 = vpop.permute.xlu0 %1807
        %v1810 = vsel %vm171, %v1805, %v1808
        %1812 = vrot.lane.b32.xlu0 %v1810, 32
        %v1813 = vpop.permute.xlu0 %1812
        %v1815 = vsel %vm177, %v1810, %v1813
        %v1816 = vld [vmem:[%s1 + $0x4e] sm:$0x1]
        %v1817 = vld [vmem:[%s1 + $0x4f] sm:$0x1]
        %v1818 = vperm.slane %v1816, 0
        %v1819 = vmul.f32 %v1798, %v1818
        %v1820 = vadd.f32 %v1781, %v1819
        %v1821 = vperm.slane %v1817, 0
        %v1822 = vmul.f32 %v1815, %v1821
        %v1823 = vadd.f32 %v1820, %v1822
        %1824 = vrot.lane.b32.xlu0 %v1658, 126
        %v1825 = vpop.permute.xlu0 %1824
        %1827 = vrot.lane.b32.xlu0 %v1658, 6
        %v1828 = vpop.permute.xlu0 %1827
        %v1830 = vsel %vm165, %v1825, %v1828
        %1832 = vrot.lane.b32.xlu0 %v1830, 16
        %v1833 = vpop.permute.xlu0 %1832
        %v1835 = vsel %vm171, %v1830, %v1833
        %1837 = vrot.lane.b32.xlu0 %v1835, 32
        %v1838 = vpop.permute.xlu0 %1837
        %v1840 = vsel %vm177, %v1835, %v1838
        %1841 = vrot.lane.b32.xlu0 %v1659, 126
        %v1842 = vpop.permute.xlu0 %1841
        %1844 = vrot.lane.b32.xlu0 %v1659, 6
        %v1845 = vpop.permute.xlu0 %1844
        %v1847 = vsel %vm165, %v1842, %v1845
        %1849 = vrot.lane.b32.xlu0 %v1847, 16
        %v1850 = vpop.permute.xlu0 %1849
        %v1852 = vsel %vm171, %v1847, %v1850
        %1854 = vrot.lane.b32.xlu0 %v1852, 32
        %v1855 = vpop.permute.xlu0 %1854
        %v1857 = vsel %vm177, %v1852, %v1855
        %v1858 = vld [vmem:[%s1 + $0x50] sm:$0x1]
        %v1859 = vld [vmem:[%s1 + $0x51] sm:$0x1]
        %v1860 = vperm.slane %v1858, 0
        %v1861 = vmul.f32 %v1840, %v1860
        %v1862 = vadd.f32 %v1823, %v1861
        %v1863 = vperm.slane %v1859, 0
        %v1864 = vmul.f32 %v1857, %v1863
        %v1865 = vadd.f32 %v1862, %v1864
        %1866 = vrot.lane.b32.xlu0 %v1618, 125
        %v1867 = vpop.permute.xlu0 %1866
        %1869 = vrot.lane.b32.xlu0 %v1618, 5
        %v1870 = vpop.permute.xlu0 %1869
        %v1872 = vsel %vm165, %v1867, %v1870
        %1874 = vrot.lane.b32.xlu0 %v1872, 16
        %v1875 = vpop.permute.xlu0 %1874
        %v1877 = vsel %vm171, %v1872, %v1875
        %1879 = vrot.lane.b32.xlu0 %v1877, 32
        %v1880 = vpop.permute.xlu0 %1879
        %v1882 = vsel %vm177, %v1877, %v1880
        %1883 = vrot.lane.b32.xlu0 %v1619, 125
        %v1884 = vpop.permute.xlu0 %1883
        %1886 = vrot.lane.b32.xlu0 %v1619, 5
        %v1887 = vpop.permute.xlu0 %1886
        %v1889 = vsel %vm165, %v1884, %v1887
        %1891 = vrot.lane.b32.xlu0 %v1889, 16
        %v1892 = vpop.permute.xlu0 %1891
        %v1894 = vsel %vm171, %v1889, %v1892
        %1896 = vrot.lane.b32.xlu0 %v1894, 32
        %v1897 = vpop.permute.xlu0 %1896
        %v1899 = vsel %vm177, %v1894, %v1897
        %v1900 = vld [vmem:[%s1 + $0x52] sm:$0x1]
        %v1901 = vld [vmem:[%s1 + $0x53] sm:$0x1]
        %v1902 = vperm.slane %v1900, 0
        %v1903 = vmul.f32 %v1882, %v1902
        %v1904 = vadd.f32 %v1865, %v1903
        %v1905 = vperm.slane %v1901, 0
        %v1906 = vmul.f32 %v1899, %v1905
        %v1907 = vadd.f32 %v1904, %v1906
        %v1908 = vld [vmem:[%s141 + $0x3] sm:$0xff]
        %v1909 = vld [vmem:[%s159 + $0x3] sm:$0xff]
        %1911 = vrot.lane.b32.xlu0 %v1908, 8
        %v1912 = vpop.permute.xlu0 %1911
        %v1914 = vsel %vm165, %v1908, %v1912
        %1916 = vrot.lane.b32.xlu0 %v1914, 16
        %v1917 = vpop.permute.xlu0 %1916
        %v1919 = vsel %vm171, %v1914, %v1917
        %1921 = vrot.lane.b32.xlu0 %v1919, 32
        %v1922 = vpop.permute.xlu0 %1921
        %v1924 = vsel %vm177, %v1919, %v1922
        %1926 = vrot.lane.b32.xlu0 %v1909, 8
        %v1927 = vpop.permute.xlu0 %1926
        %v1929 = vsel %vm165, %v1909, %v1927
        %1931 = vrot.lane.b32.xlu0 %v1929, 16
        %v1932 = vpop.permute.xlu0 %1931
        %v1934 = vsel %vm171, %v1929, %v1932
        %1936 = vrot.lane.b32.xlu0 %v1934, 32
        %v1937 = vpop.permute.xlu0 %1936
        %v1939 = vsel %vm177, %v1934, %v1937
        %v1940 = vld [vmem:[%s1 + $0x54] sm:$0x1]
        %v1941 = vld [vmem:[%s1 + $0x55] sm:$0x1]
        %v1942 = vperm.slane %v1940, 0
        %v1943 = vmul.f32 %v1924, %v1942
        %v1944 = vadd.f32 %v1907, %v1943
        %v1945 = vperm.slane %v1941, 0
        %v1946 = vmul.f32 %v1939, %v1945
        %v1947 = vadd.f32 %v1944, %v1946
        %v1948 = vld [vmem:[%s202 + $0x3] sm:$0xff]
        %v1949 = vld [vmem:[%s204 + $0x3] sm:$0xff]
        %1951 = vrot.lane.b32.xlu0 %v1948, 8
        %v1952 = vpop.permute.xlu0 %1951
        %v1954 = vsel %vm165, %v1948, %v1952
        %1956 = vrot.lane.b32.xlu0 %v1954, 16
        %v1957 = vpop.permute.xlu0 %1956
        %v1959 = vsel %vm171, %v1954, %v1957
        %1961 = vrot.lane.b32.xlu0 %v1959, 32
        %v1962 = vpop.permute.xlu0 %1961
        %v1964 = vsel %vm177, %v1959, %v1962
        %1966 = vrot.lane.b32.xlu0 %v1949, 8
        %v1967 = vpop.permute.xlu0 %1966
        %v1969 = vsel %vm165, %v1949, %v1967
        %1971 = vrot.lane.b32.xlu0 %v1969, 16
        %v1972 = vpop.permute.xlu0 %1971
        %v1974 = vsel %vm171, %v1969, %v1972
        %1976 = vrot.lane.b32.xlu0 %v1974, 32
        %v1977 = vpop.permute.xlu0 %1976
        %v1979 = vsel %vm177, %v1974, %v1977
        %v1980 = vld [vmem:[%s1 + $0x56] sm:$0x1]
        %v1981 = vld [vmem:[%s1 + $0x57] sm:$0x1]
        %v1982 = vperm.slane %v1980, 0
        %v1983 = vmul.f32 %v1964, %v1982
        %v1984 = vadd.f32 %v1947, %v1983
        %v1985 = vperm.slane %v1981, 0
        %v1986 = vmul.f32 %v1979, %v1985
        %v1987 = vadd.f32 %v1984, %v1986
        %1988 = vrot.lane.b32.xlu0 %v1908, 127
        %v1989 = vpop.permute.xlu0 %1988
        %1991 = vrot.lane.b32.xlu0 %v1908, 7
        %v1992 = vpop.permute.xlu0 %1991
        %v1994 = vsel %vm165, %v1989, %v1992
        %1996 = vrot.lane.b32.xlu0 %v1994, 16
        %v1997 = vpop.permute.xlu0 %1996
        %v1999 = vsel %vm171, %v1994, %v1997
        %2001 = vrot.lane.b32.xlu0 %v1999, 32
        %v2002 = vpop.permute.xlu0 %2001
        %v2004 = vsel %vm177, %v1999, %v2002
        %2005 = vrot.lane.b32.xlu0 %v1909, 127
        %v2006 = vpop.permute.xlu0 %2005
        %2008 = vrot.lane.b32.xlu0 %v1909, 7
        %v2009 = vpop.permute.xlu0 %2008
        %v2011 = vsel %vm165, %v2006, %v2009
        %2013 = vrot.lane.b32.xlu0 %v2011, 16
        %v2014 = vpop.permute.xlu0 %2013
        %v2016 = vsel %vm171, %v2011, %v2014
        %2018 = vrot.lane.b32.xlu0 %v2016, 32
        %v2019 = vpop.permute.xlu0 %2018
        %v2021 = vsel %vm177, %v2016, %v2019
        %v2022 = vld [vmem:[%s1 + $0x58] sm:$0x1]
        %v2023 = vld [vmem:[%s1 + $0x59] sm:$0x1]
        %v2024 = vperm.slane %v2022, 0
        %v2025 = vmul.f32 %v2004, %v2024
        %v2026 = vadd.f32 %v1987, %v2025
        %v2027 = vperm.slane %v2023, 0
        %v2028 = vmul.f32 %v2021, %v2027
        %v2029 = vadd.f32 %v2026, %v2028
        %2030 = vrot.lane.b32.xlu0 %v1948, 127
        %v2031 = vpop.permute.xlu0 %2030
        %2033 = vrot.lane.b32.xlu0 %v1948, 7
        %v2034 = vpop.permute.xlu0 %2033
        %v2036 = vsel %vm165, %v2031, %v2034
        %2038 = vrot.lane.b32.xlu0 %v2036, 16
        %v2039 = vpop.permute.xlu0 %2038
        %v2041 = vsel %vm171, %v2036, %v2039
        %2043 = vrot.lane.b32.xlu0 %v2041, 32
        %v2044 = vpop.permute.xlu0 %2043
        %v2046 = vsel %vm177, %v2041, %v2044
        %2047 = vrot.lane.b32.xlu0 %v1949, 127
        %v2048 = vpop.permute.xlu0 %2047
        %2050 = vrot.lane.b32.xlu0 %v1949, 7
        %v2051 = vpop.permute.xlu0 %2050
        %v2053 = vsel %vm165, %v2048, %v2051
        %2055 = vrot.lane.b32.xlu0 %v2053, 16
        %v2056 = vpop.permute.xlu0 %2055
        %v2058 = vsel %vm171, %v2053, %v2056
        %2060 = vrot.lane.b32.xlu0 %v2058, 32
        %v2061 = vpop.permute.xlu0 %2060
        %v2063 = vsel %vm177, %v2058, %v2061
        %v2064 = vld [vmem:[%s1 + $0x5a] sm:$0x1]
        %v2065 = vld [vmem:[%s1 + $0x5b] sm:$0x1]
        %v2066 = vperm.slane %v2064, 0
        %v2067 = vmul.f32 %v2046, %v2066
        %v2068 = vadd.f32 %v2029, %v2067
        %v2069 = vperm.slane %v2065, 0
        %v2070 = vmul.f32 %v2063, %v2069
        %v2071 = vadd.f32 %v2068, %v2070
        %2072 = vrot.lane.b32.xlu0 %v1908, 126
        %v2073 = vpop.permute.xlu0 %2072
        %2075 = vrot.lane.b32.xlu0 %v1908, 6
        %v2076 = vpop.permute.xlu0 %2075
        %v2078 = vsel %vm165, %v2073, %v2076
        %2080 = vrot.lane.b32.xlu0 %v2078, 16
        %v2081 = vpop.permute.xlu0 %2080
        %v2083 = vsel %vm171, %v2078, %v2081
        %2085 = vrot.lane.b32.xlu0 %v2083, 32
        %v2086 = vpop.permute.xlu0 %2085
        %v2088 = vsel %vm177, %v2083, %v2086
        %2089 = vrot.lane.b32.xlu0 %v1909, 126
        %v2090 = vpop.permute.xlu0 %2089
        %2092 = vrot.lane.b32.xlu0 %v1909, 6
        %v2093 = vpop.permute.xlu0 %2092
        %v2095 = vsel %vm165, %v2090, %v2093
        %2097 = vrot.lane.b32.xlu0 %v2095, 16
        %v2098 = vpop.permute.xlu0 %2097
        %v2100 = vsel %vm171, %v2095, %v2098
        %2102 = vrot.lane.b32.xlu0 %v2100, 32
        %v2103 = vpop.permute.xlu0 %2102
        %v2105 = vsel %vm177, %v2100, %v2103
        %v2106 = vld [vmem:[%s1 + $0x5c] sm:$0x1]
        %v2107 = vld [vmem:[%s1 + $0x5d] sm:$0x1]
        %v2108 = vperm.slane %v2106, 0
        %v2109 = vmul.f32 %v2088, %v2108
        %v2110 = vadd.f32 %v2071, %v2109
        %v2111 = vperm.slane %v2107, 0
        %v2112 = vmul.f32 %v2105, %v2111
        %v2113 = vadd.f32 %v2110, %v2112
        %2114 = vrot.lane.b32.xlu0 %v1948, 126
        %v2115 = vpop.permute.xlu0 %2114
        %2117 = vrot.lane.b32.xlu0 %v1948, 6
        %v2118 = vpop.permute.xlu0 %2117
        %v2120 = vsel %vm165, %v2115, %v2118
        %2122 = vrot.lane.b32.xlu0 %v2120, 16
        %v2123 = vpop.permute.xlu0 %2122
        %v2125 = vsel %vm171, %v2120, %v2123
        %2127 = vrot.lane.b32.xlu0 %v2125, 32
        %v2128 = vpop.permute.xlu0 %2127
        %v2130 = vsel %vm177, %v2125, %v2128
        %2131 = vrot.lane.b32.xlu0 %v1949, 126
        %v2132 = vpop.permute.xlu0 %2131
        %2134 = vrot.lane.b32.xlu0 %v1949, 6
        %v2135 = vpop.permute.xlu0 %2134
        %v2137 = vsel %vm165, %v2132, %v2135
        %2139 = vrot.lane.b32.xlu0 %v2137, 16
        %v2140 = vpop.permute.xlu0 %2139
        %v2142 = vsel %vm171, %v2137, %v2140
        %2144 = vrot.lane.b32.xlu0 %v2142, 32
        %v2145 = vpop.permute.xlu0 %2144
        %v2147 = vsel %vm177, %v2142, %v2145
        %v2148 = vld [vmem:[%s1 + $0x5e] sm:$0x1]
        %v2149 = vld [vmem:[%s1 + $0x5f] sm:$0x1]
        %v2150 = vperm.slane %v2148, 0
        %v2151 = vmul.f32 %v2130, %v2150
        %v2152 = vadd.f32 %v2113, %v2151
        %v2153 = vperm.slane %v2149, 0
        %v2154 = vmul.f32 %v2147, %v2153
        %v2155 = vadd.f32 %v2152, %v2154
        %2156 = vrot.lane.b32.xlu0 %v1908, 125
        %v2157 = vpop.permute.xlu0 %2156
        %2159 = vrot.lane.b32.xlu0 %v1908, 5
        %v2160 = vpop.permute.xlu0 %2159
        %v2162 = vsel %vm165, %v2157, %v2160
        %2164 = vrot.lane.b32.xlu0 %v2162, 16
        %v2165 = vpop.permute.xlu0 %2164
        %v2167 = vsel %vm171, %v2162, %v2165
        %2169 = vrot.lane.b32.xlu0 %v2167, 32
        %v2170 = vpop.permute.xlu0 %2169
        %v2172 = vsel %vm177, %v2167, %v2170
        %2173 = vrot.lane.b32.xlu0 %v1909, 125
        %v2174 = vpop.permute.xlu0 %2173
        %2176 = vrot.lane.b32.xlu0 %v1909, 5
        %v2177 = vpop.permute.xlu0 %2176
        %v2179 = vsel %vm165, %v2174, %v2177
        %2181 = vrot.lane.b32.xlu0 %v2179, 16
        %v2182 = vpop.permute.xlu0 %2181
        %v2184 = vsel %vm171, %v2179, %v2182
        %2186 = vrot.lane.b32.xlu0 %v2184, 32
        %v2187 = vpop.permute.xlu0 %2186
        %v2189 = vsel %vm177, %v2184, %v2187
        %v2190 = vld [vmem:[%s1 + $0x60] sm:$0x1]
        %v2191 = vld [vmem:[%s1 + $0x61] sm:$0x1]
        %v2192 = vperm.slane %v2190, 0
        %v2193 = vmul.f32 %v2172, %v2192
        %v2194 = vadd.f32 %v2155, %v2193
        %v2195 = vperm.slane %v2191, 0
        %v2196 = vmul.f32 %v2189, %v2195
        %v2197 = vadd.f32 %v2194, %v2196
        %v2198 = vmax.f32 %v2197, 0.0
        %2200 = vrot.lane.b32.xlu0 %v2198, 1
        %v2201 = vpop.permute.xlu0 %2200
        %vm2203 = vcmask 7168
        %v2204 = vsel %vm2203, -inf, %v2201
        %vm2205 = vcmask 531456
        %v2206 = vsel %vm2205, %v2204, -inf
        %v2207 = vsel %vm156, 1, 0
        %vm2208 = vcmp.eq.s32.totalorder %v2207, 1
        %v2209 = vsel %vm2208, -inf, %v2206
        %v2210 = vsel %vm157, 1, 0
        %vm2211 = vcmp.eq.s32.totalorder %v2210, 1
        %2213 = vrot.lane.b32.xlu0 %v2206, 126
        %v2214 = vpop.permute.xlu0 %2213
        %v2216 = vsel %vm2211, -inf, %v2214
        %v2217 = vmax.f32 %v2198, %v2209
        %v2218 = vmax.f32 %v2217, %v2216
        %v2220 = vrot.slane %v2218, 7
        %vm2222 = vcmask 1040384
        %v2223 = vsel %vm2222, -inf, %v2220
        %v2224 = vsel %vm2222, %v2220, -inf
        %vm2227 = vcmask 1046528
        %v2228 = vrot.slane %v2223, 1
        %v2229 = vrot.slane %v2224, 1
        %v2230 = vsel %vm2227, %v2228, %v2229
        %v2232 = vmax.f32 %v2223, %v2230
        %vm2233 = vcmask 1045504
        %v2234 = vrot.slane %v2223, 2
        %v2235 = vrot.slane %v2224, 2
        %v2236 = vsel %vm2233, %v2234, %v2235
        %v2238 = vmax.f32 %v2232, %v2236
        %vm2239 = vcmask 523264
        %2240 = vst.msk [vmem:[%s136] sm:$0xff] %vm2239, %v2238
        %s2241 = sand.u32 %s71, 1
        %s2242 = scalar_lea.sflag [#allocation3], %s2241
        %s2243 = sand.u32 %s71, 1
        %s2244 = smul.addr %s2243, 8
        %s2245 = scalar_lea.vmem [#allocation2], %s2244
        // Predicated region
        $region29: #{tpu_custom_call.1} parent=27 // pred_check
          %p2246 = pneg %p81
        $region30: #{tpu_custom_call.1} parent=27 // pred_check_branch
          %2248 = sbr.rel (%p2246) target = $region32
        $region31: #{tpu_custom_call.1} parent=27 // pred_region
          %2250 = vsyncadd %s2242, 0
          %s2251 = smul.addr %s16, 8
          %s2252 = scalar_lea.hbm %s2, %s2251
          %s2254 = sshll.u32 %s2245, 4
          %s2255 = int_to_ptr.vmem [resolvable:$true] %s2254
          %s2256 = sshll.u32 %s2252, 4
          %s2257 = int_to_ptr.hbm [resolvable:$true] %s2256
          %2259 = dma.vmem_to_hbm [thread:$0]  %s2255, 128, %s2257, %s2242
        $region32: #{tpu_custom_call.1} parent=27 // pred_fallthru
          _
      $region28: #{tpu_custom_call.1} parent=5 // pred_fallthru
        _
      %p2260 = scmp.le.s32.totalorder 2, %s11
      // Predicated region
      $region33: #{tpu_custom_call.1} parent=5 // pred_check
        %p2261 = pneg %p2260
      $region34: #{tpu_custom_call.1} parent=5 // pred_check_branch
        %2263 = sbr.rel (%p2261) target = $region36
      $region35: #{tpu_custom_call.1} parent=5 // pred_region
        %s2264 = ssub.s32 %s11, 2
        // Predicated region
        $region37: #{tpu_custom_call.1} parent=35 // pred_check
          %p2265 = pneg %p87
        $region38: #{tpu_custom_call.1} parent=35 // pred_check_branch
          %2267 = sbr.rel (%p2265) target = $region40
        $region39: #{tpu_custom_call.1} parent=35 // pred_region
          %s2268 = sand.u32 %s72, 1
          %s2269 = scalar_lea.sflag [#allocation3], %s2268
          %s2270 = sand.u32 %s72, 1
          %s2271 = smul.addr %s2270, 8
          %s2272 = scalar_lea.vmem [#allocation2], %s2271
          %2274 = dma.done %s2269, 128
        $region40: #{tpu_custom_call.1} parent=35 // pred_fallthru
          _
      $region36: #{tpu_custom_call.1} parent=5 // pred_fallthru
        _
    $region6: #{tpu_custom_call.1} parent=1 // loop_footer
      %s15 = sadd.s32 1, %s11
    $region7: #{tpu_custom_call.1} parent=1 // loop_footer_branch
      %10 = sbr.rel target = $region3
    $region8: #{tpu_custom_call.1} parent=1 // loop_exit
      _
    %2275 = vsyncpa [#allocation3], 1
    %s2276 = scalar_lea.sflag [#allocation3], 1
    %2277 = vsyncpa %s2276, 1

</llo_original>
